<compile_context>
chip_gen: v7x
topology: tpu7x:2x2x1
jax: 0.10.0
libtpu: 0.0.40
codegen_flags: <defaults>
</compile_context>

<pallas_src>
import functools

import jax
import jax.numpy as jnp
from jax.experimental import pallas as pl
from jax.experimental.pallas import tpu as pltpu

LN_EPS = 1e-5  # PyTorch nn.LayerNorm default eps


# ----------------------------- in-kernel math ------------------------------
def _layernorm(x, g, b):
    mu = jnp.mean(x, axis=-1, keepdims=True)
    var = jnp.mean((x - mu) ** 2, axis=-1, keepdims=True)
    return (x - mu) * jax.lax.rsqrt(var + LN_EPS) * g + b


def _erf(x):
    # Abramowitz & Stegun 7.1.26 rational approximation (max abs err ~1.5e-7).
    # Matches torch.nn.GELU()'s exact erf form far better than tanh-GELU.
    p = 0.3275911
    a1, a2, a3, a4, a5 = (0.254829592, -0.284496736, 1.421413741,
                          -1.453152027, 1.061405429)
    sgn = jnp.where(x >= 0.0, 1.0, -1.0)
    z = jnp.abs(x)
    # approx reciprocal -> EUP slot instead of a multi-op VALU divide.
    t = pl.reciprocal(1.0 + p * z, approx=True)
    poly = ((((a5 * t + a4) * t + a3) * t + a2) * t + a1) * t
    return sgn * (1.0 - poly * jnp.exp(-z * z))


def _gelu_exact(x):
    return 0.5 * x * (1.0 + _erf(x * 0.7071067811865476))


def _mm(a, w):
    # MXU matmul: activations cast to the (bf16) weight dtype, f32 accumulate.
    return jnp.dot(a.astype(w.dtype), w, preferred_element_type=jnp.float32)


# ------------------------------- the kernel --------------------------------
PARAM_ORDER = [
    "pe_ln_g", "pe_ln_b", "pe_w", "pe_b", "pe_ln2_g", "pe_ln2_b",
    "cls", "pos", "norm_g", "norm_b",
    "qkv_w", "qkv_b", "out_w", "out_b",
    "mlp_ln_g", "mlp_ln_b", "w1", "b1", "w2", "b2",
    "head_w", "head_b",
]


def vit_kernel(x_ref,
               pe_ln_g, pe_ln_b, pe_w, pe_b, pe_ln2_g, pe_ln2_b,
               cls_ref, pos_ref, norm_g, norm_b,
               qkv_w, qkv_b, out_w, out_b,
               mlp_ln_g, mlp_ln_b, w1, b1, w2, b2,
               head_w, head_b,
               o_ref,
               *, depth, num_heads, head_dim, tb, s_pad, seq_len):
    embed = num_heads * head_dim
    rows = tb * s_pad
    bh = tb * num_heads
    scale = head_dim ** (-0.5)
    f32 = jnp.float32
    bf16 = jnp.bfloat16

    # Key mask for the padded sequence positions (hoisted, used every layer).
    kidx = jax.lax.broadcasted_iota(jnp.int32, (1, 1, s_pad), 2)
    kmask = jnp.where(kidx < seq_len, 0.0, -1e30).astype(f32)

    # -------- patch embedding on the folded (TB*S_pad, P) row slab --------
    # Row 0 of each sample is the (zero) cls placeholder, rows >= seq_len are
    # sequence padding; both are harmless and/or replaced below.
    xp = x_ref[0].astype(f32).reshape(rows, -1)             # bf16 -> f32
    h = _layernorm(xp, pe_ln_g[...], pe_ln_b[...])
    h = _mm(h, pe_w[...]) + pe_b[...]
    h = _layernorm(h, pe_ln2_g[...], pe_ln2_b[...])         # (rows, D)

    # -------- insert cls token per sample, add positional embedding --------
    h3 = h.reshape(tb, s_pad, embed)
    is_cls = jax.lax.broadcasted_iota(jnp.int32, (1, s_pad, 1), 1) == 0
    cls_row = cls_ref[...].reshape(1, 1, embed)
    x3 = jnp.where(is_cls, cls_row, h3) + pos_ref[...][None]
    x = x3.reshape(rows, embed)                             # (rows, D)

    # Shared-norm params stay (1, D): stride-0 sublane broadcast at the op.
    ng = norm_g[...]
    nb = norm_b[...]

    # ------------------------- transformer layers -------------------------
    for layer in range(depth):
        # ---- MHA block: x = x + attn(norm(x)) ----
        xn = _layernorm(x, ng, nb)
        # Single bf16 cast for the whole qkv slab (no per-head packs).
        qkv = (_mm(xn, qkv_w[layer]) + qkv_b[layer]).astype(bf16)  # (rows,3E)

        def to_heads(t):
            # (rows, E) -> (tb*num_heads, s_pad, head_dim): heads become a
            # leading batch dim for ONE batched dot_general per contraction.
            t4 = t.reshape(tb, s_pad, num_heads, head_dim)
            return t4.transpose(0, 2, 1, 3).reshape(bh, s_pad, head_dim)

        qh = to_heads(qkv[:, 0 * embed:1 * embed])
        kh = to_heads(qkv[:, 1 * embed:2 * embed])
        vh = to_heads(qkv[:, 2 * embed:3 * embed])

        s = jnp.einsum("bqd,bkd->bqk", qh, kh,
                       preferred_element_type=f32) * scale  # (bh,S,S)
        s = s + kmask                                        # mask padded keys
        s = s - jnp.max(s, axis=-1, keepdims=True)
        pw = jnp.exp(s)
        pw = pw * pl.reciprocal(jnp.sum(pw, axis=-1, keepdims=True),
                                approx=True)
        oh = jnp.einsum("bqk,bkd->bqd", pw.astype(bf16), vh,
                        preferred_element_type=f32)          # (bh,S,hd)

        attn = (oh.reshape(tb, num_heads, s_pad, head_dim)
                  .transpose(0, 2, 1, 3).reshape(rows, embed))
        x = x + _mm(attn, out_w[layer]) + out_b[layer]

        # ---- MLP block: x = x + mlp(norm(x)) ----
        xn = _layernorm(x, ng, nb)
        hm = _layernorm(xn, mlp_ln_g[layer], mlp_ln_b[layer])
        hm = _mm(hm, w1[layer]) + b1[layer]
        hm = _gelu_exact(hm)
        hm = _mm(hm, w2[layer]) + b2[layer]
        x = x + hm

    # final shared norm
    x = _layernorm(x, ng, nb)

    # Classification head only on the cls row of each sample: (tb, D) matmul,
    # lane-dense (c_pad = 128) and 8x less writeback than the full slab.
    cls_x = x.reshape(tb, s_pad, embed)[:, 0, :]             # (tb, D)
    o_ref[0] = _mm(cls_x, head_w[...]) + head_b[...]         # (tb, C_pad)


# ------------------------------ host wrapper -------------------------------
def extract_patches(x, ph, pw):
    """NCHW image -> (B, num_patches, patch_dim), flattened (ph, pw, C)."""
    B, C, H, W = x.shape
    nph, npw = H // ph, W // pw
    x = x.reshape(B, C, nph, ph, npw, pw)
    x = x.transpose(0, 2, 4, 3, 5, 1)        # (B, nph, npw, ph, pw, C)
    return x.reshape(B, nph * npw, ph * pw * C)


def vit_forward(x_img, params, *, patch_size, depth, num_heads, num_classes,
                batch_block=32):
    # NOTE(perf/v5e): pass batch_block=16 (rows=128) on v5e's 128^2 MXU;
    # the default 32 gives rows=256 for v6e/v7x's 256^2 MXU.
    ph, pw = patch_size
    x_patches = extract_patches(x_img, ph, pw).astype(jnp.float32)
    B, N, P = x_patches.shape
    dim = params["pe_w"].shape[1]
    mlp_dim = params["w1"].shape[-1]
    assert dim % num_heads == 0
    head_dim = dim // num_heads
    seq = N + 1
    s_pad = ((seq + 7) // 8) * 8             # sublane-tile aligned sequence

    # ---- fold TB samples per grid step; guarantee >= 2 grid steps so the
    # "parallel" batch axis can split across both v7x TensorCores.
    tb = max(1, min(batch_block, pl.cdiv(B, 2)))
    n_blocks = pl.cdiv(B, tb)
    b_pad = n_blocks * tb

    # Padded per-sample slab (bf16: halves the only streaming DMA).  Row 0 is
    # the cls placeholder, rows 1..N are patches, the rest is sequence padding
    # masked out of attention.
    x_pad = jnp.zeros((b_pad, s_pad, P), jnp.bfloat16)
    x_pad = x_pad.at[:B, 1:N + 1, :].set(x_patches.astype(jnp.bfloat16))
    x_blocks = x_pad.reshape(n_blocks, tb, s_pad, P)

    # ---- parameter prep: lane-padded head, padded pos, bf16 MXU weights ----
    c_pad = ((num_classes + 127) // 128) * 128
    p = dict(params)
    p["head_w"] = jnp.zeros((dim, c_pad), jnp.float32).at[
        :, :num_classes].set(params["head_w"])
    p["head_b"] = jnp.zeros((1, c_pad), jnp.float32).at[
        :, :num_classes].set(params["head_b"])
    p["pos"] = jnp.zeros((s_pad, dim), jnp.float32).at[:seq, :].set(
        params["pos"])
    for name in ("pe_w", "qkv_w", "out_w", "w1", "w2", "head_w"):
        p[name] = p[name].astype(jnp.bfloat16)

    def full_spec(a):
        r = a.ndim
        # NOTE(perf/v7x): constant-index weight blocks are never refetched but
        # still double-buffered; single-buffer (pl.Buffered(1) / pl.ANY + DMA)
        # or stream per-layer weights once the model grows past toy scale.
        return pl.BlockSpec(a.shape, lambda b, _r=r: (0,) * _r)

    in_specs = [pl.BlockSpec((1, tb, s_pad, P), lambda b: (b, 0, 0, 0))]
    in_specs += [full_spec(p[name]) for name in PARAM_ORDER]

    kernel = functools.partial(
        vit_kernel, depth=depth, num_heads=num_heads, head_dim=head_dim,
        tb=tb, s_pad=s_pad, seq_len=seq)

    # ---- advisory cost estimate for the XLA scheduler ----
    param_bytes = sum(int(v.size) * v.dtype.itemsize for v in p.values())
    flops = (2 * b_pad * s_pad * (
        P * dim
        + depth * (4 * dim * dim + 2 * dim * mlp_dim + 2 * s_pad * dim))
        + 2 * b_pad * dim * c_pad)
    transcendentals = b_pad * depth * (num_heads * s_pad * s_pad
                                       + s_pad * mlp_dim)
    bytes_accessed = (int(x_blocks.size) * x_blocks.dtype.itemsize
                      + param_bytes + b_pad * c_pad * 4)
    cost = pl.CostEstimate(flops=int(flops),
                           transcendentals=int(transcendentals),
                           bytes_accessed=int(bytes_accessed))

    # ---- VMEM budget sized from the actual block shapes (+ headroom) ----
    rows = tb * s_pad
    xblk_bytes = tb * s_pad * P * x_blocks.dtype.itemsize
    oblk_bytes = tb * c_pad * 4
    act_bytes = (rows * (8 * dim + 2 * mlp_dim) * 4
                 + 3 * tb * num_heads * s_pad * s_pad * 4)
    vmem_need = (2 * (xblk_bytes + oblk_bytes)   # double-buffered I/O blocks
                 + 2 * param_bytes               # double-buffered weights
                 + 2 * act_bytes                 # live activations / temps
                 + (4 << 20))                    # compiler headroom
    vmem_limit = min(max(((vmem_need + (1 << 20) - 1) >> 20) << 20, 8 << 20),
                     64 << 20)

    out = pl.pallas_call(
        kernel,
        out_shape=jax.ShapeDtypeStruct((n_blocks, tb, c_pad), jnp.float32),
        grid=(n_blocks,),
        in_specs=in_specs,
        out_specs=pl.BlockSpec((1, tb, c_pad), lambda b: (b, 0, 0)),
        compiler_params=pltpu.CompilerParams(
            dimension_semantics=("parallel",),
            vmem_limit_bytes=int(vmem_limit)),
        cost_estimate=cost,
    )(x_blocks, *[p[name] for name in PARAM_ORDER])

    # un-pad batch and classes on the host (pure layout work).
    return out.reshape(b_pad, c_pad)[:B, :num_classes]


# --------------------------- parameter creation ----------------------------
def init_params(key, *, patch_dim, dim, depth, mlp_dim, num_classes,
                num_patches):
    ks = jax.random.split(key, 8)

    def nrm(k, shape, s=0.02):
        return (jax.random.normal(k, shape) * s).astype(jnp.float32)

    z = lambda *s: jnp.zeros(s, jnp.float32)
    o = lambda *s: jnp.ones(s, jnp.float32)
    return dict(
        pe_ln_g=o(1, patch_dim), pe_ln_b=z(1, patch_dim),
        pe_w=nrm(ks[0], (patch_dim, dim)), pe_b=z(1, dim),
        pe_ln2_g=o(1, dim), pe_ln2_b=z(1, dim),
        cls=nrm(ks[1], (1, dim), 1.0),
        pos=nrm(ks[2], (num_patches + 1, dim), 1.0),
        norm_g=o(1, dim), norm_b=z(1, dim),
        qkv_w=nrm(ks[3], (depth, dim, 3 * dim)), qkv_b=z(depth, 1, 3 * dim),
        out_w=nrm(ks[4], (depth, dim, dim)), out_b=z(depth, 1, dim),
        mlp_ln_g=o(depth, 1, dim), mlp_ln_b=z(depth, 1, dim),
        w1=nrm(ks[5], (depth, dim, mlp_dim)), b1=z(depth, 1, mlp_dim),
        w2=nrm(ks[6], (depth, mlp_dim, dim)), b2=z(depth, 1, dim),
        head_w=nrm(ks[7], (dim, num_classes)), head_b=z(1, num_classes),
    )


# ------------------------ pure-JAX reference (check) ------------------------
def vit_reference(x_img, params, *, patch_size, depth, num_heads):
    def ln(x, g, b):
        mu = x.mean(-1, keepdims=True)
        var = ((x - mu) ** 2).mean(-1, keepdims=True)
        return (x - mu) * jax.lax.rsqrt(var + LN_EPS) * g + b

    ph, pw = patch_size
    xp = extract_patches(x_img, ph, pw).astype(jnp.float32)
    dim = params["pe_w"].shape[1]
    hd = dim // num_heads
    h = ln(xp, params["pe_ln_g"][0], params["pe_ln_b"][0])
    h = h @ params["pe_w"] + params["pe_b"][0]
    h = ln(h, params["pe_ln2_g"][0], params["pe_ln2_b"][0])
    B, N, _ = h.shape
    cls = jnp.broadcast_to(params["cls"][None], (B, 1, dim))
    x = jnp.concatenate([cls, h], axis=1) + params["pos"][None]
    ng, nb = params["norm_g"][0], params["norm_b"][0]
    for L in range(depth):
        xn = ln(x, ng, nb)
        qkv = xn @ params["qkv_w"][L] + params["qkv_b"][L]
        q, k, v = jnp.split(qkv, 3, axis=-1)
        rs = lambda t: t.reshape(B, N + 1, num_heads, hd).transpose(0, 2, 1, 3)
        q, k, v = rs(q), rs(k), rs(v)
        a = jnp.einsum("bhqd,bhkd->bhqk", q, k) * (hd ** -0.5)
        a = jax.nn.softmax(a, axis=-1)
        av = jnp.einsum("bhqk,bhkd->bhqd", a, v).transpose(0, 2, 1, 3)
        av = av.reshape(B, N + 1, dim) @ params["out_w"][L] + params["out_b"][L]
        x = x + av
        xn = ln(x, ng, nb)
        hm = ln(xn, params["mlp_ln_g"][L], params["mlp_ln_b"][L])
        hm = jax.nn.gelu(hm @ params["w1"][L] + params["b1"][L],
                         approximate=False)
        hm = hm @ params["w2"][L] + params["b2"][L]
        x = x + hm
    x = ln(x, ng, nb)
    return x[:, 0] @ params["head_w"] + params["head_b"][0]


# ----------------------------------- main -----------------------------------
if __name__ == "__main__":
    # Small ViT config: 16x16 images, 8x8 patches, dim=64, 2 layers, 4 heads.
    B, C, H, W = 2, 3, 16, 16
    patch_size = (8, 8)
    dim, depth, num_heads, mlp_dim, num_classes = 64, 2, 4, 128, 10
    num_patches = (H // patch_size[0]) * (W // patch_size[1])
    patch_dim = C * patch_size[0] * patch_size[1]

    key = jax.random.PRNGKey(0)
    kx, kp = jax.random.split(key)
    x = jax.random.normal(kx, (B, C, H, W), dtype=jnp.float32)
    params = init_params(kp, patch_dim=patch_dim, dim=dim, depth=depth,
                         mlp_dim=mlp_dim, num_classes=num_classes,
                         num_patches=num_patches)

    out = vit_forward(x, params, patch_size=patch_size, depth=depth,
                      num_heads=num_heads, num_classes=num_classes)
    out = jax.block_until_ready(out)

    ref = vit_reference(x, params, patch_size=patch_size, depth=depth,
                        num_heads=num_heads)
    assert out.shape == (B, num_classes)
    # bf16 inputs/matmul operands + approx reciprocals => compare at a few-%
    # tolerance against the pure-f32 reference.
    assert jnp.allclose(out, ref, rtol=2e-2, atol=3e-2), float(
        jnp.max(jnp.abs(out - ref)))

    print("KERNEL_OK")
</pallas_src>

<mosaic_0001>
module attributes {stable_mosaic.version = 11 : i64} {
  func.func @vit_kernel(%arg0: i32, %arg1: memref<1x1x8x192xbf16, #tpu.memory_space<vmem>>, %arg2: memref<1x192xf32, #tpu.memory_space<vmem>>, %arg3: memref<1x192xf32, #tpu.memory_space<vmem>>, %arg4: memref<192x64xbf16, #tpu.memory_space<vmem>>, %arg5: memref<1x64xf32, #tpu.memory_space<vmem>>, %arg6: memref<1x64xf32, #tpu.memory_space<vmem>>, %arg7: memref<1x64xf32, #tpu.memory_space<vmem>>, %arg8: memref<1x64xf32, #tpu.memory_space<vmem>>, %arg9: memref<8x64xf32, #tpu.memory_space<vmem>>, %arg10: memref<1x64xf32, #tpu.memory_space<vmem>>, %arg11: memref<1x64xf32, #tpu.memory_space<vmem>>, %arg12: memref<2x64x192xbf16, #tpu.memory_space<vmem>>, %arg13: memref<2x1x192xf32, #tpu.memory_space<vmem>>, %arg14: memref<2x64x64xbf16, #tpu.memory_space<vmem>>, %arg15: memref<2x1x64xf32, #tpu.memory_space<vmem>>, %arg16: memref<2x1x64xf32, #tpu.memory_space<vmem>>, %arg17: memref<2x1x64xf32, #tpu.memory_space<vmem>>, %arg18: memref<2x64x128xbf16, #tpu.memory_space<vmem>>, %arg19: memref<2x1x128xf32, #tpu.memory_space<vmem>>, %arg20: memref<2x128x64xbf16, #tpu.memory_space<vmem>>, %arg21: memref<2x1x64xf32, #tpu.memory_space<vmem>>, %arg22: memref<64x128xbf16, #tpu.memory_space<vmem>>, %arg23: memref<1x128xf32, #tpu.memory_space<vmem>>, %arg24: memref<1x1x128xf32, #tpu.memory_space<vmem>>) attributes {dimension_semantics = [#tpu.dimension_semantics<parallel>], iteration_bounds = array<i64: 2>, scalar_prefetch = 0 : i64, scratch_operands = 0 : i64, tpu.core_type = #tpu.core_type<tc>, window_params = [{transform_indices = @transform_0, window_bounds = array<i64: 1, 1, 8, 192>}, {pipeline_mode = #tpu.pipeline_mode<synchronous>, transform_indices = @transform_1, window_bounds = array<i64: 1, 192>}, {pipeline_mode = #tpu.pipeline_mode<synchronous>, transform_indices = @transform_2, window_bounds = array<i64: 1, 192>}, {pipeline_mode = #tpu.pipeline_mode<synchronous>, transform_indices = @transform_3, window_bounds = array<i64: 192, 64>}, {pipeline_mode = #tpu.pipeline_mode<synchronous>, transform_indices = @transform_4, window_bounds = array<i64: 1, 64>}, {pipeline_mode = #tpu.pipeline_mode<synchronous>, transform_indices = @transform_5, window_bounds = array<i64: 1, 64>}, {pipeline_mode = #tpu.pipeline_mode<synchronous>, transform_indices = @transform_6, window_bounds = array<i64: 1, 64>}, {pipeline_mode = #tpu.pipeline_mode<synchronous>, transform_indices = @transform_7, window_bounds = array<i64: 1, 64>}, {pipeline_mode = #tpu.pipeline_mode<synchronous>, transform_indices = @transform_8, window_bounds = array<i64: 8, 64>}, {pipeline_mode = #tpu.pipeline_mode<synchronous>, transform_indices = @transform_9, window_bounds = array<i64: 1, 64>}, {pipeline_mode = #tpu.pipeline_mode<synchronous>, transform_indices = @transform_10, window_bounds = array<i64: 1, 64>}, {pipeline_mode = #tpu.pipeline_mode<synchronous>, transform_indices = @transform_11, window_bounds = array<i64: 2, 64, 192>}, {pipeline_mode = #tpu.pipeline_mode<synchronous>, transform_indices = @transform_12, window_bounds = array<i64: 2, 1, 192>}, {pipeline_mode = #tpu.pipeline_mode<synchronous>, transform_indices = @transform_13, window_bounds = array<i64: 2, 64, 64>}, {pipeline_mode = #tpu.pipeline_mode<synchronous>, transform_indices = @transform_14, window_bounds = array<i64: 2, 1, 64>}, {pipeline_mode = #tpu.pipeline_mode<synchronous>, transform_indices = @transform_15, window_bounds = array<i64: 2, 1, 64>}, {pipeline_mode = #tpu.pipeline_mode<synchronous>, transform_indices = @transform_16, window_bounds = array<i64: 2, 1, 64>}, {pipeline_mode = #tpu.pipeline_mode<synchronous>, transform_indices = @transform_17, window_bounds = array<i64: 2, 64, 128>}, {pipeline_mode = #tpu.pipeline_mode<synchronous>, transform_indices = @transform_18, window_bounds = array<i64: 2, 1, 128>}, {pipeline_mode = #tpu.pipeline_mode<synchronous>, transform_indices = @transform_19, window_bounds = array<i64: 2, 128, 64>}, {pipeline_mode = #tpu.pipeline_mode<synchronous>, transform_indices = @transform_20, window_bounds = array<i64: 2, 1, 64>}, {pipeline_mode = #tpu.pipeline_mode<synchronous>, transform_indices = @transform_21, window_bounds = array<i64: 64, 128>}, {pipeline_mode = #tpu.pipeline_mode<synchronous>, transform_indices = @transform_22, window_bounds = array<i64: 1, 128>}, {transform_indices = @transform_23, window_bounds = array<i64: 1, 1, 128>}]} {
    %0 = tpu.iota {dimensions = array<i32: 2>} : vector<1x1x8xi32>
    %c5_i32 = arith.constant 5 : i32
    %1 = vector.broadcast %c5_i32 : i32 to vector<1x1x8xi32>
    %2 = arith.cmpi slt, %0, %1 : vector<1x1x8xi32>
    %cst = arith.constant 0.000000e+00 : f32
    %cst_0 = arith.constant -1.000000e+30 : f32
    %3 = vector.broadcast %cst : f32 to vector<1x1x8xf32>
    %4 = vector.broadcast %cst_0 : f32 to vector<1x1x8xf32>
    %5 = arith.select %2, %3, %4 : vector<1x1x8xi1>, vector<1x1x8xf32>
    %c0 = arith.constant 0 : index
    %c0_1 = arith.constant 0 : index
    %c0_2 = arith.constant 0 : index
    %c0_3 = arith.constant 0 : index
    %6 = vector.load %arg1[%c0, %c0_1, %c0_2, %c0_3] : memref<1x1x8x192xbf16, #tpu.memory_space<vmem>>, vector<1x1x8x192xbf16>
    %7 = vector.shape_cast %6 : vector<1x1x8x192xbf16> to vector<1x8x192xbf16>
    %8 = arith.extf %7 : vector<1x8x192xbf16> to vector<1x8x192xf32>
    %9 = vector.shape_cast %8 : vector<1x8x192xf32> to vector<8x192xf32>
    %c0_4 = arith.constant 0 : index
    %c0_5 = arith.constant 0 : index
    %10 = vector.load %arg2[%c0_4, %c0_5] : memref<1x192xf32, #tpu.memory_space<vmem>>, vector<1x192xf32>
    %c0_6 = arith.constant 0 : index
    %c0_7 = arith.constant 0 : index
    %11 = vector.load %arg3[%c0_6, %c0_7] : memref<1x192xf32, #tpu.memory_space<vmem>>, vector<1x192xf32>
    %cst_8 = arith.constant dense<0.000000e+00> : vector<8xf32>
    %12 = vector.multi_reduction <add>, %9, %cst_8 [1] : vector<8x192xf32> to vector<8xf32>
    %13 = vector.shape_cast %12 : vector<8xf32> to vector<8x1xf32>
    %cst_9 = arith.constant 1.920000e+02 : f32
    %14 = vector.broadcast %cst_9 : f32 to vector<8x1xf32>
    %15 = arith.divf %13, %14 : vector<8x1xf32>
    %16 = vector.broadcast %15 : vector<8x1xf32> to vector<8x192xf32>
    %17 = arith.subf %9, %16 : vector<8x192xf32>
    %18 = arith.mulf %17, %17 : vector<8x192xf32>
    %cst_10 = arith.constant dense<0.000000e+00> : vector<8xf32>
    %19 = vector.multi_reduction <add>, %18, %cst_10 [1] : vector<8x192xf32> to vector<8xf32>
    %20 = vector.shape_cast %19 : vector<8xf32> to vector<8x1xf32>
    %cst_11 = arith.constant 1.920000e+02 : f32
    %21 = vector.broadcast %cst_11 : f32 to vector<8x1xf32>
    %22 = arith.divf %20, %21 : vector<8x1xf32>
    %23 = vector.broadcast %15 : vector<8x1xf32> to vector<8x192xf32>
    %24 = arith.subf %9, %23 : vector<8x192xf32>
    %cst_12 = arith.constant 9.99999974E-6 : f32
    %25 = vector.broadcast %cst_12 : f32 to vector<8x1xf32>
    %26 = arith.addf %22, %25 : vector<8x1xf32>
    %27 = math.rsqrt %26 : vector<8x1xf32>
    %28 = vector.broadcast %27 : vector<8x1xf32> to vector<8x192xf32>
    %29 = arith.mulf %24, %28 : vector<8x192xf32>
    %30 = vector.broadcast %10 : vector<1x192xf32> to vector<8x192xf32>
    %31 = arith.mulf %29, %30 : vector<8x192xf32>
    %32 = vector.broadcast %11 : vector<1x192xf32> to vector<8x192xf32>
    %33 = arith.addf %31, %32 : vector<8x192xf32>
    %c0_13 = arith.constant 0 : index
    %c0_14 = arith.constant 0 : index
    %34 = vector.load %arg4[%c0_13, %c0_14] : memref<192x64xbf16, #tpu.memory_space<vmem>>, vector<192x64xbf16>
    %35 = arith.truncf %33 : vector<8x192xf32> to vector<8x192xbf16>
    %cst_15 = arith.constant dense<0.000000e+00> : vector<8x64xf32>
    %36 = tpu.matmul %35, %34, %cst_15 {dimension_numbers = #tpu.dot_dimension_numbers<[1], [0], [0], [1], [0, 0, 1, 1], [], []>} : vector<8x192xbf16>, vector<192x64xbf16>, vector<8x64xf32> -> vector<8x64xf32>
    %c0_16 = arith.constant 0 : index
    %c0_17 = arith.constant 0 : index
    %37 = vector.load %arg5[%c0_16, %c0_17] : memref<1x64xf32, #tpu.memory_space<vmem>>, vector<1x64xf32>
    %38 = vector.broadcast %37 : vector<1x64xf32> to vector<8x64xf32>
    %39 = arith.addf %36, %38 : vector<8x64xf32>
    %c0_18 = arith.constant 0 : index
    %c0_19 = arith.constant 0 : index
    %40 = vector.load %arg6[%c0_18, %c0_19] : memref<1x64xf32, #tpu.memory_space<vmem>>, vector<1x64xf32>
    %c0_20 = arith.constant 0 : index
    %c0_21 = arith.constant 0 : index
    %41 = vector.load %arg7[%c0_20, %c0_21] : memref<1x64xf32, #tpu.memory_space<vmem>>, vector<1x64xf32>
    %cst_22 = arith.constant dense<0.000000e+00> : vector<8xf32>
    %42 = vector.multi_reduction <add>, %39, %cst_22 [1] : vector<8x64xf32> to vector<8xf32>
    %43 = vector.shape_cast %42 : vector<8xf32> to vector<8x1xf32>
    %cst_23 = arith.constant 6.400000e+01 : f32
    %44 = vector.broadcast %cst_23 : f32 to vector<8x1xf32>
    %45 = arith.divf %43, %44 : vector<8x1xf32>
    %46 = vector.broadcast %45 : vector<8x1xf32> to vector<8x64xf32>
    %47 = arith.subf %39, %46 : vector<8x64xf32>
    %48 = arith.mulf %47, %47 : vector<8x64xf32>
    %cst_24 = arith.constant dense<0.000000e+00> : vector<8xf32>
    %49 = vector.multi_reduction <add>, %48, %cst_24 [1] : vector<8x64xf32> to vector<8xf32>
    %50 = vector.shape_cast %49 : vector<8xf32> to vector<8x1xf32>
    %cst_25 = arith.constant 6.400000e+01 : f32
    %51 = vector.broadcast %cst_25 : f32 to vector<8x1xf32>
    %52 = arith.divf %50, %51 : vector<8x1xf32>
    %53 = vector.broadcast %45 : vector<8x1xf32> to vector<8x64xf32>
    %54 = arith.subf %39, %53 : vector<8x64xf32>
    %cst_26 = arith.constant 9.99999974E-6 : f32
    %55 = vector.broadcast %cst_26 : f32 to vector<8x1xf32>
    %56 = arith.addf %52, %55 : vector<8x1xf32>
    %57 = math.rsqrt %56 : vector<8x1xf32>
    %58 = vector.broadcast %57 : vector<8x1xf32> to vector<8x64xf32>
    %59 = arith.mulf %54, %58 : vector<8x64xf32>
    %60 = vector.broadcast %40 : vector<1x64xf32> to vector<8x64xf32>
    %61 = arith.mulf %59, %60 : vector<8x64xf32>
    %62 = vector.broadcast %41 : vector<1x64xf32> to vector<8x64xf32>
    %63 = arith.addf %61, %62 : vector<8x64xf32>
    %64 = vector.shape_cast %63 : vector<8x64xf32> to vector<1x8x64xf32>
    %65 = tpu.iota {dimensions = array<i32: 1>} : vector<1x8x1xi32>
    %c0_i32 = arith.constant 0 : i32
    %66 = vector.broadcast %c0_i32 : i32 to vector<1x8x1xi32>
    %67 = arith.cmpi eq, %65, %66 : vector<1x8x1xi32>
    %c0_27 = arith.constant 0 : index
    %c0_28 = arith.constant 0 : index
    %68 = vector.load %arg8[%c0_27, %c0_28] : memref<1x64xf32, #tpu.memory_space<vmem>>, vector<1x64xf32>
    %69 = vector.shape_cast %68 : vector<1x64xf32> to vector<1x1x64xf32>
    %70 = vector.shape_cast %67 : vector<1x8x1xi1> to vector<1x8x1xi1>
    %71 = vector.broadcast %70 : vector<1x8x1xi1> to vector<1x8x64xi1>
    %72 = vector.shape_cast %69 : vector<1x1x64xf32> to vector<1x1x64xf32>
    %73 = vector.broadcast %72 : vector<1x1x64xf32> to vector<1x8x64xf32>
    %74 = arith.select %71, %73, %64 : vector<1x8x64xi1>, vector<1x8x64xf32>
    %c0_29 = arith.constant 0 : index
    %c0_30 = arith.constant 0 : index
    %75 = vector.load %arg9[%c0_29, %c0_30] : memref<8x64xf32, #tpu.memory_space<vmem>>, vector<8x64xf32>
    %76 = vector.shape_cast %75 : vector<8x64xf32> to vector<1x8x64xf32>
    %77 = arith.addf %74, %76 : vector<1x8x64xf32>
    %78 = vector.shape_cast %77 : vector<1x8x64xf32> to vector<8x64xf32>
    %c0_31 = arith.constant 0 : index
    %c0_32 = arith.constant 0 : index
    %79 = vector.load %arg10[%c0_31, %c0_32] : memref<1x64xf32, #tpu.memory_space<vmem>>, vector<1x64xf32>
    %c0_33 = arith.constant 0 : index
    %c0_34 = arith.constant 0 : index
    %80 = vector.load %arg11[%c0_33, %c0_34] : memref<1x64xf32, #tpu.memory_space<vmem>>, vector<1x64xf32>
    %cst_35 = arith.constant dense<0.000000e+00> : vector<8xf32>
    %81 = vector.multi_reduction <add>, %78, %cst_35 [1] : vector<8x64xf32> to vector<8xf32>
    %82 = vector.shape_cast %81 : vector<8xf32> to vector<8x1xf32>
    %cst_36 = arith.constant 6.400000e+01 : f32
    %83 = vector.broadcast %cst_36 : f32 to vector<8x1xf32>
    %84 = arith.divf %82, %83 : vector<8x1xf32>
    %85 = vector.broadcast %84 : vector<8x1xf32> to vector<8x64xf32>
    %86 = arith.subf %78, %85 : vector<8x64xf32>
    %87 = arith.mulf %86, %86 : vector<8x64xf32>
    %cst_37 = arith.constant dense<0.000000e+00> : vector<8xf32>
    %88 = vector.multi_reduction <add>, %87, %cst_37 [1] : vector<8x64xf32> to vector<8xf32>
    %89 = vector.shape_cast %88 : vector<8xf32> to vector<8x1xf32>
    %cst_38 = arith.constant 6.400000e+01 : f32
    %90 = vector.broadcast %cst_38 : f32 to vector<8x1xf32>
    %91 = arith.divf %89, %90 : vector<8x1xf32>
    %92 = vector.broadcast %84 : vector<8x1xf32> to vector<8x64xf32>
    %93 = arith.subf %78, %92 : vector<8x64xf32>
    %cst_39 = arith.constant 9.99999974E-6 : f32
    %94 = vector.broadcast %cst_39 : f32 to vector<8x1xf32>
    %95 = arith.addf %91, %94 : vector<8x1xf32>
    %96 = math.rsqrt %95 : vector<8x1xf32>
    %97 = vector.broadcast %96 : vector<8x1xf32> to vector<8x64xf32>
    %98 = arith.mulf %93, %97 : vector<8x64xf32>
    %99 = vector.broadcast %79 : vector<1x64xf32> to vector<8x64xf32>
    %100 = arith.mulf %98, %99 : vector<8x64xf32>
    %101 = vector.broadcast %80 : vector<1x64xf32> to vector<8x64xf32>
    %102 = arith.addf %100, %101 : vector<8x64xf32>
    %c0_40 = arith.constant 0 : index
    %c0_41 = arith.constant 0 : index
    %c0_42 = arith.constant 0 : index
    %103 = vector.load %arg12[%c0_40, %c0_41, %c0_42] : memref<2x64x192xbf16, #tpu.memory_space<vmem>>, vector<1x64x192xbf16>
    %104 = vector.shape_cast %103 : vector<1x64x192xbf16> to vector<64x192xbf16>
    %105 = arith.truncf %102 : vector<8x64xf32> to vector<8x64xbf16>
    %cst_43 = arith.constant dense<0.000000e+00> : vector<8x192xf32>
    %106 = tpu.matmul %105, %104, %cst_43 {dimension_numbers = #tpu.dot_dimension_numbers<[1], [0], [0], [1], [0, 0, 1, 1], [], []>} : vector<8x64xbf16>, vector<64x192xbf16>, vector<8x192xf32> -> vector<8x192xf32>
    %c0_44 = arith.constant 0 : index
    %c0_45 = arith.constant 0 : index
    %c0_46 = arith.constant 0 : index
    %107 = vector.load %arg13[%c0_44, %c0_45, %c0_46] : memref<2x1x192xf32, #tpu.memory_space<vmem>>, vector<1x1x192xf32>
    %108 = vector.shape_cast %107 : vector<1x1x192xf32> to vector<1x192xf32>
    %109 = vector.broadcast %108 : vector<1x192xf32> to vector<8x192xf32>
    %110 = arith.addf %106, %109 : vector<8x192xf32>
    %111 = arith.truncf %110 : vector<8x192xf32> to vector<8x192xbf16>
    %112 = vector.extract_strided_slice %111 {offsets = [0, 0], sizes = [8, 64], strides = [1, 1]} : vector<8x192xbf16> to vector<8x64xbf16>
    %113 = vector.shape_cast %112 : vector<8x64xbf16> to vector<1x8x4x16xbf16>
    %114 = tpu.transpose %113, [0, 2, 1, 3] : vector<1x8x4x16xbf16> -> vector<1x4x8x16xbf16>
    %115 = vector.shape_cast %114 : vector<1x4x8x16xbf16> to vector<4x8x16xbf16>
    %116 = vector.extract_strided_slice %111 {offsets = [0, 64], sizes = [8, 64], strides = [1, 1]} : vector<8x192xbf16> to vector<8x64xbf16>
    %117 = vector.shape_cast %116 : vector<8x64xbf16> to vector<1x8x4x16xbf16>
    %118 = tpu.transpose %117, [0, 2, 1, 3] : vector<1x8x4x16xbf16> -> vector<1x4x8x16xbf16>
    %119 = vector.shape_cast %118 : vector<1x4x8x16xbf16> to vector<4x8x16xbf16>
    %120 = vector.extract_strided_slice %111 {offsets = [0, 128], sizes = [8, 64], strides = [1, 1]} : vector<8x192xbf16> to vector<8x64xbf16>
    %121 = vector.shape_cast %120 : vector<8x64xbf16> to vector<1x8x4x16xbf16>
    %122 = tpu.transpose %121, [0, 2, 1, 3] : vector<1x8x4x16xbf16> -> vector<1x4x8x16xbf16>
    %123 = vector.shape_cast %122 : vector<1x4x8x16xbf16> to vector<4x8x16xbf16>
    "tpu.trace_start"() <{level = 10 : i32, message = "bqd,bkd->bqk"}> : () -> ()
    %cst_47 = arith.constant dense<0.000000e+00> : vector<4x8x8xf32>
    %124 = tpu.matmul %115, %119, %cst_47 {dimension_numbers = #tpu.dot_dimension_numbers<[2], [2], [1], [1], [0, 0, 0, 1, 1, 1], [0], [0]>} : vector<4x8x16xbf16>, vector<4x8x16xbf16>, vector<4x8x8xf32> -> vector<4x8x8xf32>
    "tpu.trace_stop"() : () -> ()
    %cst_48 = arith.constant 2.500000e-01 : f32
    %125 = vector.broadcast %cst_48 : f32 to vector<4x8x8xf32>
    %126 = arith.mulf %124, %125 : vector<4x8x8xf32>
    %127 = vector.broadcast %5 : vector<1x1x8xf32> to vector<4x8x8xf32>
    %128 = arith.addf %126, %127 : vector<4x8x8xf32>
    %cst_49 = arith.constant dense<0xFF800000> : vector<4x8xf32>
    %129 = vector.multi_reduction <maximumf>, %128, %cst_49 [2] : vector<4x8x8xf32> to vector<4x8xf32>
    %130 = vector.shape_cast %129 : vector<4x8xf32> to vector<4x8x1xf32>
    %131 = vector.broadcast %130 : vector<4x8x1xf32> to vector<4x8x8xf32>
    %132 = arith.subf %128, %131 : vector<4x8x8xf32>
    %133 = math.exp %132 : vector<4x8x8xf32>
    %cst_50 = arith.constant dense<0.000000e+00> : vector<4x8xf32>
    %134 = vector.multi_reduction <add>, %133, %cst_50 [2] : vector<4x8x8xf32> to vector<4x8xf32>
    %135 = vector.shape_cast %134 : vector<4x8xf32> to vector<4x8x1xf32>
    %136 = tpu.reciprocal %135 {approx = true} : vector<4x8x1xf32> -> vector<4x8x1xf32>
    %137 = vector.broadcast %136 : vector<4x8x1xf32> to vector<4x8x8xf32>
    %138 = arith.mulf %133, %137 : vector<4x8x8xf32>
    %139 = arith.truncf %138 : vector<4x8x8xf32> to vector<4x8x8xbf16>
    "tpu.trace_start"() <{level = 10 : i32, message = "bqk,bkd->bqd"}> : () -> ()
    %cst_51 = arith.constant dense<0.000000e+00> : vector<4x8x16xf32>
    %140 = tpu.matmul %139, %123, %cst_51 {dimension_numbers = #tpu.dot_dimension_numbers<[2], [1], [1], [2], [0, 0, 0, 1, 1, 2], [0], [0]>} : vector<4x8x8xbf16>, vector<4x8x16xbf16>, vector<4x8x16xf32> -> vector<4x8x16xf32>
    "tpu.trace_stop"() : () -> ()
    %141 = vector.shape_cast %140 : vector<4x8x16xf32> to vector<1x4x8x16xf32>
    %142 = tpu.transpose %141, [0, 2, 1, 3] : vector<1x4x8x16xf32> -> vector<1x8x4x16xf32>
    %143 = vector.shape_cast %142 : vector<1x8x4x16xf32> to vector<8x64xf32>
    %c0_52 = arith.constant 0 : index
    %c0_53 = arith.constant 0 : index
    %c0_54 = arith.constant 0 : index
    %144 = vector.load %arg14[%c0_52, %c0_53, %c0_54] : memref<2x64x64xbf16, #tpu.memory_space<vmem>>, vector<1x64x64xbf16>
    %145 = vector.shape_cast %144 : vector<1x64x64xbf16> to vector<64x64xbf16>
    %146 = arith.truncf %143 : vector<8x64xf32> to vector<8x64xbf16>
    %cst_55 = arith.constant dense<0.000000e+00> : vector<8x64xf32>
    %147 = tpu.matmul %146, %145, %cst_55 {dimension_numbers = #tpu.dot_dimension_numbers<[1], [0], [0], [1], [0, 0, 1, 1], [], []>} : vector<8x64xbf16>, vector<64x64xbf16>, vector<8x64xf32> -> vector<8x64xf32>
    %148 = arith.addf %78, %147 : vector<8x64xf32>
    %c0_56 = arith.constant 0 : index
    %c0_57 = arith.constant 0 : index
    %c0_58 = arith.constant 0 : index
    %149 = vector.load %arg15[%c0_56, %c0_57, %c0_58] : memref<2x1x64xf32, #tpu.memory_space<vmem>>, vector<1x1x64xf32>
    %150 = vector.shape_cast %149 : vector<1x1x64xf32> to vector<1x64xf32>
    %151 = vector.broadcast %150 : vector<1x64xf32> to vector<8x64xf32>
    %152 = arith.addf %148, %151 : vector<8x64xf32>
    %cst_59 = arith.constant dense<0.000000e+00> : vector<8xf32>
    %153 = vector.multi_reduction <add>, %152, %cst_59 [1] : vector<8x64xf32> to vector<8xf32>
    %154 = vector.shape_cast %153 : vector<8xf32> to vector<8x1xf32>
    %cst_60 = arith.constant 6.400000e+01 : f32
    %155 = vector.broadcast %cst_60 : f32 to vector<8x1xf32>
    %156 = arith.divf %154, %155 : vector<8x1xf32>
    %157 = vector.broadcast %156 : vector<8x1xf32> to vector<8x64xf32>
    %158 = arith.subf %152, %157 : vector<8x64xf32>
    %159 = arith.mulf %158, %158 : vector<8x64xf32>
    %cst_61 = arith.constant dense<0.000000e+00> : vector<8xf32>
    %160 = vector.multi_reduction <add>, %159, %cst_61 [1] : vector<8x64xf32> to vector<8xf32>
    %161 = vector.shape_cast %160 : vector<8xf32> to vector<8x1xf32>
    %cst_62 = arith.constant 6.400000e+01 : f32
    %162 = vector.broadcast %cst_62 : f32 to vector<8x1xf32>
    %163 = arith.divf %161, %162 : vector<8x1xf32>
    %164 = vector.broadcast %156 : vector<8x1xf32> to vector<8x64xf32>
    %165 = arith.subf %152, %164 : vector<8x64xf32>
    %cst_63 = arith.constant 9.99999974E-6 : f32
    %166 = vector.broadcast %cst_63 : f32 to vector<8x1xf32>
    %167 = arith.addf %163, %166 : vector<8x1xf32>
    %168 = math.rsqrt %167 : vector<8x1xf32>
    %169 = vector.broadcast %168 : vector<8x1xf32> to vector<8x64xf32>
    %170 = arith.mulf %165, %169 : vector<8x64xf32>
    %171 = vector.broadcast %79 : vector<1x64xf32> to vector<8x64xf32>
    %172 = arith.mulf %170, %171 : vector<8x64xf32>
    %173 = vector.broadcast %80 : vector<1x64xf32> to vector<8x64xf32>
    %174 = arith.addf %172, %173 : vector<8x64xf32>
    %c0_64 = arith.constant 0 : index
    %c0_65 = arith.constant 0 : index
    %c0_66 = arith.constant 0 : index
    %175 = vector.load %arg16[%c0_64, %c0_65, %c0_66] : memref<2x1x64xf32, #tpu.memory_space<vmem>>, vector<1x1x64xf32>
    %176 = vector.shape_cast %175 : vector<1x1x64xf32> to vector<1x64xf32>
    %c0_67 = arith.constant 0 : index
    %c0_68 = arith.constant 0 : index
    %c0_69 = arith.constant 0 : index
    %177 = vector.load %arg17[%c0_67, %c0_68, %c0_69] : memref<2x1x64xf32, #tpu.memory_space<vmem>>, vector<1x1x64xf32>
    %178 = vector.shape_cast %177 : vector<1x1x64xf32> to vector<1x64xf32>
    %cst_70 = arith.constant dense<0.000000e+00> : vector<8xf32>
    %179 = vector.multi_reduction <add>, %174, %cst_70 [1] : vector<8x64xf32> to vector<8xf32>
    %180 = vector.shape_cast %179 : vector<8xf32> to vector<8x1xf32>
    %cst_71 = arith.constant 6.400000e+01 : f32
    %181 = vector.broadcast %cst_71 : f32 to vector<8x1xf32>
    %182 = arith.divf %180, %181 : vector<8x1xf32>
    %183 = vector.broadcast %182 : vector<8x1xf32> to vector<8x64xf32>
    %184 = arith.subf %174, %183 : vector<8x64xf32>
    %185 = arith.mulf %184, %184 : vector<8x64xf32>
    %cst_72 = arith.constant dense<0.000000e+00> : vector<8xf32>
    %186 = vector.multi_reduction <add>, %185, %cst_72 [1] : vector<8x64xf32> to vector<8xf32>
    %187 = vector.shape_cast %186 : vector<8xf32> to vector<8x1xf32>
    %cst_73 = arith.constant 6.400000e+01 : f32
    %188 = vector.broadcast %cst_73 : f32 to vector<8x1xf32>
    %189 = arith.divf %187, %188 : vector<8x1xf32>
    %190 = vector.broadcast %182 : vector<8x1xf32> to vector<8x64xf32>
    %191 = arith.subf %174, %190 : vector<8x64xf32>
    %cst_74 = arith.constant 9.99999974E-6 : f32
    %192 = vector.broadcast %cst_74 : f32 to vector<8x1xf32>
    %193 = arith.addf %189, %192 : vector<8x1xf32>
    %194 = math.rsqrt %193 : vector<8x1xf32>
    %195 = vector.broadcast %194 : vector<8x1xf32> to vector<8x64xf32>
    %196 = arith.mulf %191, %195 : vector<8x64xf32>
    %197 = vector.broadcast %176 : vector<1x64xf32> to vector<8x64xf32>
    %198 = arith.mulf %196, %197 : vector<8x64xf32>
    %199 = vector.broadcast %178 : vector<1x64xf32> to vector<8x64xf32>
    %200 = arith.addf %198, %199 : vector<8x64xf32>
    %c0_75 = arith.constant 0 : index
    %c0_76 = arith.constant 0 : index
    %c0_77 = arith.constant 0 : index
    %201 = vector.load %arg18[%c0_75, %c0_76, %c0_77] : memref<2x64x128xbf16, #tpu.memory_space<vmem>>, vector<1x64x128xbf16>
    %202 = vector.shape_cast %201 : vector<1x64x128xbf16> to vector<64x128xbf16>
    %203 = arith.truncf %200 : vector<8x64xf32> to vector<8x64xbf16>
    %cst_78 = arith.constant dense<0.000000e+00> : vector<8x128xf32>
    %204 = tpu.matmul %203, %202, %cst_78 {dimension_numbers = #tpu.dot_dimension_numbers<[1], [0], [0], [1], [0, 0, 1, 1], [], []>} : vector<8x64xbf16>, vector<64x128xbf16>, vector<8x128xf32> -> vector<8x128xf32>
    %c0_79 = arith.constant 0 : index
    %c0_80 = arith.constant 0 : index
    %c0_81 = arith.constant 0 : index
    %205 = vector.load %arg19[%c0_79, %c0_80, %c0_81] : memref<2x1x128xf32, #tpu.memory_space<vmem>>, vector<1x1x128xf32>
    %206 = vector.shape_cast %205 : vector<1x1x128xf32> to vector<1x128xf32>
    %207 = vector.broadcast %206 : vector<1x128xf32> to vector<8x128xf32>
    %208 = arith.addf %204, %207 : vector<8x128xf32>
    %cst_82 = arith.constant 5.000000e-01 : f32
    %209 = vector.broadcast %cst_82 : f32 to vector<8x128xf32>
    %210 = arith.mulf %209, %208 : vector<8x128xf32>
    %cst_83 = arith.constant 0.707106769 : f32
    %211 = vector.broadcast %cst_83 : f32 to vector<8x128xf32>
    %212 = arith.mulf %208, %211 : vector<8x128xf32>
    %cst_84 = arith.constant 0.000000e+00 : f32
    %213 = vector.broadcast %cst_84 : f32 to vector<8x128xf32>
    %214 = arith.cmpf oge, %212, %213 : vector<8x128xf32>
    %cst_85 = arith.constant 1.000000e+00 : f32
    %cst_86 = arith.constant -1.000000e+00 : f32
    %215 = vector.broadcast %cst_85 : f32 to vector<8x128xf32>
    %216 = vector.broadcast %cst_86 : f32 to vector<8x128xf32>
    %217 = arith.select %214, %215, %216 : vector<8x128xi1>, vector<8x128xf32>
    %218 = math.absf %212 : vector<8x128xf32>
    %cst_87 = arith.constant 0.327591091 : f32
    %219 = vector.broadcast %cst_87 : f32 to vector<8x128xf32>
    %220 = arith.mulf %219, %218 : vector<8x128xf32>
    %cst_88 = arith.constant 1.000000e+00 : f32
    %221 = vector.broadcast %cst_88 : f32 to vector<8x128xf32>
    %222 = arith.addf %221, %220 : vector<8x128xf32>
    %223 = tpu.reciprocal %222 {approx = true} : vector<8x128xf32> -> vector<8x128xf32>
    %cst_89 = arith.constant 1.06140542 : f32
    %224 = vector.broadcast %cst_89 : f32 to vector<8x128xf32>
    %225 = arith.mulf %224, %223 : vector<8x128xf32>
    %cst_90 = arith.constant -1.45315206 : f32
    %226 = vector.broadcast %cst_90 : f32 to vector<8x128xf32>
    %227 = arith.addf %225, %226 : vector<8x128xf32>
    %228 = arith.mulf %227, %223 : vector<8x128xf32>
    %cst_91 = arith.constant 1.42141378 : f32
    %229 = vector.broadcast %cst_91 : f32 to vector<8x128xf32>
    %230 = arith.addf %228, %229 : vector<8x128xf32>
    %231 = arith.mulf %230, %223 : vector<8x128xf32>
    %cst_92 = arith.constant -0.284496725 : f32
    %232 = vector.broadcast %cst_92 : f32 to vector<8x128xf32>
    %233 = arith.addf %231, %232 : vector<8x128xf32>
    %234 = arith.mulf %233, %223 : vector<8x128xf32>
    %cst_93 = arith.constant 0.254829586 : f32
    %235 = vector.broadcast %cst_93 : f32 to vector<8x128xf32>
    %236 = arith.addf %234, %235 : vector<8x128xf32>
    %237 = arith.mulf %236, %223 : vector<8x128xf32>
    %cst_94 = arith.constant 0.000000e+00 : f32
    %238 = vector.broadcast %cst_94 : f32 to vector<8x128xf32>
    %239 = arith.subf %238, %218 : vector<8x128xf32>
    %240 = arith.mulf %239, %218 : vector<8x128xf32>
    %241 = math.exp %240 : vector<8x128xf32>
    %242 = arith.mulf %237, %241 : vector<8x128xf32>
    %cst_95 = arith.constant 1.000000e+00 : f32
    %243 = vector.broadcast %cst_95 : f32 to vector<8x128xf32>
    %244 = arith.subf %243, %242 : vector<8x128xf32>
    %245 = arith.mulf %217, %244 : vector<8x128xf32>
    %cst_96 = arith.constant 1.000000e+00 : f32
    %246 = vector.broadcast %cst_96 : f32 to vector<8x128xf32>
    %247 = arith.addf %246, %245 : vector<8x128xf32>
    %248 = arith.mulf %210, %247 : vector<8x128xf32>
    %c0_97 = arith.constant 0 : index
    %c0_98 = arith.constant 0 : index
    %c0_99 = arith.constant 0 : index
    %249 = vector.load %arg20[%c0_97, %c0_98, %c0_99] : memref<2x128x64xbf16, #tpu.memory_space<vmem>>, vector<1x128x64xbf16>
    %250 = vector.shape_cast %249 : vector<1x128x64xbf16> to vector<128x64xbf16>
    %251 = arith.truncf %248 : vector<8x128xf32> to vector<8x128xbf16>
    %cst_100 = arith.constant dense<0.000000e+00> : vector<8x64xf32>
    %252 = tpu.matmul %251, %250, %cst_100 {dimension_numbers = #tpu.dot_dimension_numbers<[1], [0], [0], [1], [0, 0, 1, 1], [], []>} : vector<8x128xbf16>, vector<128x64xbf16>, vector<8x64xf32> -> vector<8x64xf32>
    %c0_101 = arith.constant 0 : index
    %c0_102 = arith.constant 0 : index
    %c0_103 = arith.constant 0 : index
    %253 = vector.load %arg21[%c0_101, %c0_102, %c0_103] : memref<2x1x64xf32, #tpu.memory_space<vmem>>, vector<1x1x64xf32>
    %254 = vector.shape_cast %253 : vector<1x1x64xf32> to vector<1x64xf32>
    %255 = vector.broadcast %254 : vector<1x64xf32> to vector<8x64xf32>
    %256 = arith.addf %252, %255 : vector<8x64xf32>
    %257 = arith.addf %152, %256 : vector<8x64xf32>
    %cst_104 = arith.constant dense<0.000000e+00> : vector<8xf32>
    %258 = vector.multi_reduction <add>, %257, %cst_104 [1] : vector<8x64xf32> to vector<8xf32>
    %259 = vector.shape_cast %258 : vector<8xf32> to vector<8x1xf32>
    %cst_105 = arith.constant 6.400000e+01 : f32
    %260 = vector.broadcast %cst_105 : f32 to vector<8x1xf32>
    %261 = arith.divf %259, %260 : vector<8x1xf32>
    %262 = vector.broadcast %261 : vector<8x1xf32> to vector<8x64xf32>
    %263 = arith.subf %257, %262 : vector<8x64xf32>
    %264 = arith.mulf %263, %263 : vector<8x64xf32>
    %cst_106 = arith.constant dense<0.000000e+00> : vector<8xf32>
    %265 = vector.multi_reduction <add>, %264, %cst_106 [1] : vector<8x64xf32> to vector<8xf32>
    %266 = vector.shape_cast %265 : vector<8xf32> to vector<8x1xf32>
    %cst_107 = arith.constant 6.400000e+01 : f32
    %267 = vector.broadcast %cst_107 : f32 to vector<8x1xf32>
    %268 = arith.divf %266, %267 : vector<8x1xf32>
    %269 = vector.broadcast %261 : vector<8x1xf32> to vector<8x64xf32>
    %270 = arith.subf %257, %269 : vector<8x64xf32>
    %cst_108 = arith.constant 9.99999974E-6 : f32
    %271 = vector.broadcast %cst_108 : f32 to vector<8x1xf32>
    %272 = arith.addf %268, %271 : vector<8x1xf32>
    %273 = math.rsqrt %272 : vector<8x1xf32>
    %274 = vector.broadcast %273 : vector<8x1xf32> to vector<8x64xf32>
    %275 = arith.mulf %270, %274 : vector<8x64xf32>
    %276 = vector.broadcast %79 : vector<1x64xf32> to vector<8x64xf32>
    %277 = arith.mulf %275, %276 : vector<8x64xf32>
    %278 = vector.broadcast %80 : vector<1x64xf32> to vector<8x64xf32>
    %279 = arith.addf %277, %278 : vector<8x64xf32>
    %c1 = arith.constant 1 : index
    %c0_109 = arith.constant 0 : index
    %c0_110 = arith.constant 0 : index
    %280 = vector.load %arg12[%c1, %c0_109, %c0_110] : memref<2x64x192xbf16, #tpu.memory_space<vmem>>, vector<1x64x192xbf16>
    %281 = vector.shape_cast %280 : vector<1x64x192xbf16> to vector<64x192xbf16>
    %282 = arith.truncf %279 : vector<8x64xf32> to vector<8x64xbf16>
    %cst_111 = arith.constant dense<0.000000e+00> : vector<8x192xf32>
    %283 = tpu.matmul %282, %281, %cst_111 {dimension_numbers = #tpu.dot_dimension_numbers<[1], [0], [0], [1], [0, 0, 1, 1], [], []>} : vector<8x64xbf16>, vector<64x192xbf16>, vector<8x192xf32> -> vector<8x192xf32>
    %c1_112 = arith.constant 1 : index
    %c0_113 = arith.constant 0 : index
    %c0_114 = arith.constant 0 : index
    %284 = vector.load %arg13[%c1_112, %c0_113, %c0_114] : memref<2x1x192xf32, #tpu.memory_space<vmem>>, vector<1x1x192xf32>
    %285 = vector.shape_cast %284 : vector<1x1x192xf32> to vector<1x192xf32>
    %286 = vector.broadcast %285 : vector<1x192xf32> to vector<8x192xf32>
    %287 = arith.addf %283, %286 : vector<8x192xf32>
    %288 = arith.truncf %287 : vector<8x192xf32> to vector<8x192xbf16>
    %289 = vector.extract_strided_slice %288 {offsets = [0, 0], sizes = [8, 64], strides = [1, 1]} : vector<8x192xbf16> to vector<8x64xbf16>
    %290 = vector.shape_cast %289 : vector<8x64xbf16> to vector<1x8x4x16xbf16>
    %291 = tpu.transpose %290, [0, 2, 1, 3] : vector<1x8x4x16xbf16> -> vector<1x4x8x16xbf16>
    %292 = vector.shape_cast %291 : vector<1x4x8x16xbf16> to vector<4x8x16xbf16>
    %293 = vector.extract_strided_slice %288 {offsets = [0, 64], sizes = [8, 64], strides = [1, 1]} : vector<8x192xbf16> to vector<8x64xbf16>
    %294 = vector.shape_cast %293 : vector<8x64xbf16> to vector<1x8x4x16xbf16>
    %295 = tpu.transpose %294, [0, 2, 1, 3] : vector<1x8x4x16xbf16> -> vector<1x4x8x16xbf16>
    %296 = vector.shape_cast %295 : vector<1x4x8x16xbf16> to vector<4x8x16xbf16>
    %297 = vector.extract_strided_slice %288 {offsets = [0, 128], sizes = [8, 64], strides = [1, 1]} : vector<8x192xbf16> to vector<8x64xbf16>
    %298 = vector.shape_cast %297 : vector<8x64xbf16> to vector<1x8x4x16xbf16>
    %299 = tpu.transpose %298, [0, 2, 1, 3] : vector<1x8x4x16xbf16> -> vector<1x4x8x16xbf16>
    %300 = vector.shape_cast %299 : vector<1x4x8x16xbf16> to vector<4x8x16xbf16>
    "tpu.trace_start"() <{level = 10 : i32, message = "bqd,bkd->bqk"}> : () -> ()
    %cst_115 = arith.constant dense<0.000000e+00> : vector<4x8x8xf32>
    %301 = tpu.matmul %292, %296, %cst_115 {dimension_numbers = #tpu.dot_dimension_numbers<[2], [2], [1], [1], [0, 0, 0, 1, 1, 1], [0], [0]>} : vector<4x8x16xbf16>, vector<4x8x16xbf16>, vector<4x8x8xf32> -> vector<4x8x8xf32>
    "tpu.trace_stop"() : () -> ()
    %cst_116 = arith.constant 2.500000e-01 : f32
    %302 = vector.broadcast %cst_116 : f32 to vector<4x8x8xf32>
    %303 = arith.mulf %301, %302 : vector<4x8x8xf32>
    %304 = vector.broadcast %5 : vector<1x1x8xf32> to vector<4x8x8xf32>
    %305 = arith.addf %303, %304 : vector<4x8x8xf32>
    %cst_117 = arith.constant dense<0xFF800000> : vector<4x8xf32>
    %306 = vector.multi_reduction <maximumf>, %305, %cst_117 [2] : vector<4x8x8xf32> to vector<4x8xf32>
    %307 = vector.shape_cast %306 : vector<4x8xf32> to vector<4x8x1xf32>
    %308 = vector.broadcast %307 : vector<4x8x1xf32> to vector<4x8x8xf32>
    %309 = arith.subf %305, %308 : vector<4x8x8xf32>
    %310 = math.exp %309 : vector<4x8x8xf32>
    %cst_118 = arith.constant dense<0.000000e+00> : vector<4x8xf32>
    %311 = vector.multi_reduction <add>, %310, %cst_118 [2] : vector<4x8x8xf32> to vector<4x8xf32>
    %312 = vector.shape_cast %311 : vector<4x8xf32> to vector<4x8x1xf32>
    %313 = tpu.reciprocal %312 {approx = true} : vector<4x8x1xf32> -> vector<4x8x1xf32>
    %314 = vector.broadcast %313 : vector<4x8x1xf32> to vector<4x8x8xf32>
    %315 = arith.mulf %310, %314 : vector<4x8x8xf32>
    %316 = arith.truncf %315 : vector<4x8x8xf32> to vector<4x8x8xbf16>
    "tpu.trace_start"() <{level = 10 : i32, message = "bqk,bkd->bqd"}> : () -> ()
    %cst_119 = arith.constant dense<0.000000e+00> : vector<4x8x16xf32>
    %317 = tpu.matmul %316, %300, %cst_119 {dimension_numbers = #tpu.dot_dimension_numbers<[2], [1], [1], [2], [0, 0, 0, 1, 1, 2], [0], [0]>} : vector<4x8x8xbf16>, vector<4x8x16xbf16>, vector<4x8x16xf32> -> vector<4x8x16xf32>
    "tpu.trace_stop"() : () -> ()
    %318 = vector.shape_cast %317 : vector<4x8x16xf32> to vector<1x4x8x16xf32>
    %319 = tpu.transpose %318, [0, 2, 1, 3] : vector<1x4x8x16xf32> -> vector<1x8x4x16xf32>
    %320 = vector.shape_cast %319 : vector<1x8x4x16xf32> to vector<8x64xf32>
    %c1_120 = arith.constant 1 : index
    %c0_121 = arith.constant 0 : index
    %c0_122 = arith.constant 0 : index
    %321 = vector.load %arg14[%c1_120, %c0_121, %c0_122] : memref<2x64x64xbf16, #tpu.memory_space<vmem>>, vector<1x64x64xbf16>
    %322 = vector.shape_cast %321 : vector<1x64x64xbf16> to vector<64x64xbf16>
    %323 = arith.truncf %320 : vector<8x64xf32> to vector<8x64xbf16>
    %cst_123 = arith.constant dense<0.000000e+00> : vector<8x64xf32>
    %324 = tpu.matmul %323, %322, %cst_123 {dimension_numbers = #tpu.dot_dimension_numbers<[1], [0], [0], [1], [0, 0, 1, 1], [], []>} : vector<8x64xbf16>, vector<64x64xbf16>, vector<8x64xf32> -> vector<8x64xf32>
    %325 = arith.addf %257, %324 : vector<8x64xf32>
    %c1_124 = arith.constant 1 : index
    %c0_125 = arith.constant 0 : index
    %c0_126 = arith.constant 0 : index
    %326 = vector.load %arg15[%c1_124, %c0_125, %c0_126] : memref<2x1x64xf32, #tpu.memory_space<vmem>>, vector<1x1x64xf32>
    %327 = vector.shape_cast %326 : vector<1x1x64xf32> to vector<1x64xf32>
    %328 = vector.broadcast %327 : vector<1x64xf32> to vector<8x64xf32>
    %329 = arith.addf %325, %328 : vector<8x64xf32>
    %cst_127 = arith.constant dense<0.000000e+00> : vector<8xf32>
    %330 = vector.multi_reduction <add>, %329, %cst_127 [1] : vector<8x64xf32> to vector<8xf32>
    %331 = vector.shape_cast %330 : vector<8xf32> to vector<8x1xf32>
    %cst_128 = arith.constant 6.400000e+01 : f32
    %332 = vector.broadcast %cst_128 : f32 to vector<8x1xf32>
    %333 = arith.divf %331, %332 : vector<8x1xf32>
    %334 = vector.broadcast %333 : vector<8x1xf32> to vector<8x64xf32>
    %335 = arith.subf %329, %334 : vector<8x64xf32>
    %336 = arith.mulf %335, %335 : vector<8x64xf32>
    %cst_129 = arith.constant dense<0.000000e+00> : vector<8xf32>
    %337 = vector.multi_reduction <add>, %336, %cst_129 [1] : vector<8x64xf32> to vector<8xf32>
    %338 = vector.shape_cast %337 : vector<8xf32> to vector<8x1xf32>
    %cst_130 = arith.constant 6.400000e+01 : f32
    %339 = vector.broadcast %cst_130 : f32 to vector<8x1xf32>
    %340 = arith.divf %338, %339 : vector<8x1xf32>
    %341 = vector.broadcast %333 : vector<8x1xf32> to vector<8x64xf32>
    %342 = arith.subf %329, %341 : vector<8x64xf32>
    %cst_131 = arith.constant 9.99999974E-6 : f32
    %343 = vector.broadcast %cst_131 : f32 to vector<8x1xf32>
    %344 = arith.addf %340, %343 : vector<8x1xf32>
    %345 = math.rsqrt %344 : vector<8x1xf32>
    %346 = vector.broadcast %345 : vector<8x1xf32> to vector<8x64xf32>
    %347 = arith.mulf %342, %346 : vector<8x64xf32>
    %348 = vector.broadcast %79 : vector<1x64xf32> to vector<8x64xf32>
    %349 = arith.mulf %347, %348 : vector<8x64xf32>
    %350 = vector.broadcast %80 : vector<1x64xf32> to vector<8x64xf32>
    %351 = arith.addf %349, %350 : vector<8x64xf32>
    %c1_132 = arith.constant 1 : index
    %c0_133 = arith.constant 0 : index
    %c0_134 = arith.constant 0 : index
    %352 = vector.load %arg16[%c1_132, %c0_133, %c0_134] : memref<2x1x64xf32, #tpu.memory_space<vmem>>, vector<1x1x64xf32>
    %353 = vector.shape_cast %352 : vector<1x1x64xf32> to vector<1x64xf32>
    %c1_135 = arith.constant 1 : index
    %c0_136 = arith.constant 0 : index
    %c0_137 = arith.constant 0 : index
    %354 = vector.load %arg17[%c1_135, %c0_136, %c0_137] : memref<2x1x64xf32, #tpu.memory_space<vmem>>, vector<1x1x64xf32>
    %355 = vector.shape_cast %354 : vector<1x1x64xf32> to vector<1x64xf32>
    %cst_138 = arith.constant dense<0.000000e+00> : vector<8xf32>
    %356 = vector.multi_reduction <add>, %351, %cst_138 [1] : vector<8x64xf32> to vector<8xf32>
    %357 = vector.shape_cast %356 : vector<8xf32> to vector<8x1xf32>
    %cst_139 = arith.constant 6.400000e+01 : f32
    %358 = vector.broadcast %cst_139 : f32 to vector<8x1xf32>
    %359 = arith.divf %357, %358 : vector<8x1xf32>
    %360 = vector.broadcast %359 : vector<8x1xf32> to vector<8x64xf32>
    %361 = arith.subf %351, %360 : vector<8x64xf32>
    %362 = arith.mulf %361, %361 : vector<8x64xf32>
    %cst_140 = arith.constant dense<0.000000e+00> : vector<8xf32>
    %363 = vector.multi_reduction <add>, %362, %cst_140 [1] : vector<8x64xf32> to vector<8xf32>
    %364 = vector.shape_cast %363 : vector<8xf32> to vector<8x1xf32>
    %cst_141 = arith.constant 6.400000e+01 : f32
    %365 = vector.broadcast %cst_141 : f32 to vector<8x1xf32>
    %366 = arith.divf %364, %365 : vector<8x1xf32>
    %367 = vector.broadcast %359 : vector<8x1xf32> to vector<8x64xf32>
    %368 = arith.subf %351, %367 : vector<8x64xf32>
    %cst_142 = arith.constant 9.99999974E-6 : f32
    %369 = vector.broadcast %cst_142 : f32 to vector<8x1xf32>
    %370 = arith.addf %366, %369 : vector<8x1xf32>
    %371 = math.rsqrt %370 : vector<8x1xf32>
    %372 = vector.broadcast %371 : vector<8x1xf32> to vector<8x64xf32>
    %373 = arith.mulf %368, %372 : vector<8x64xf32>
    %374 = vector.broadcast %353 : vector<1x64xf32> to vector<8x64xf32>
    %375 = arith.mulf %373, %374 : vector<8x64xf32>
    %376 = vector.broadcast %355 : vector<1x64xf32> to vector<8x64xf32>
    %377 = arith.addf %375, %376 : vector<8x64xf32>
    %c1_143 = arith.constant 1 : index
    %c0_144 = arith.constant 0 : index
    %c0_145 = arith.constant 0 : index
    %378 = vector.load %arg18[%c1_143, %c0_144, %c0_145] : memref<2x64x128xbf16, #tpu.memory_space<vmem>>, vector<1x64x128xbf16>
    %379 = vector.shape_cast %378 : vector<1x64x128xbf16> to vector<64x128xbf16>
    %380 = arith.truncf %377 : vector<8x64xf32> to vector<8x64xbf16>
    %cst_146 = arith.constant dense<0.000000e+00> : vector<8x128xf32>
    %381 = tpu.matmul %380, %379, %cst_146 {dimension_numbers = #tpu.dot_dimension_numbers<[1], [0], [0], [1], [0, 0, 1, 1], [], []>} : vector<8x64xbf16>, vector<64x128xbf16>, vector<8x128xf32> -> vector<8x128xf32>
    %c1_147 = arith.constant 1 : index
    %c0_148 = arith.constant 0 : index
    %c0_149 = arith.constant 0 : index
    %382 = vector.load %arg19[%c1_147, %c0_148, %c0_149] : memref<2x1x128xf32, #tpu.memory_space<vmem>>, vector<1x1x128xf32>
    %383 = vector.shape_cast %382 : vector<1x1x128xf32> to vector<1x128xf32>
    %384 = vector.broadcast %383 : vector<1x128xf32> to vector<8x128xf32>
    %385 = arith.addf %381, %384 : vector<8x128xf32>
    %cst_150 = arith.constant 5.000000e-01 : f32
    %386 = vector.broadcast %cst_150 : f32 to vector<8x128xf32>
    %387 = arith.mulf %386, %385 : vector<8x128xf32>
    %cst_151 = arith.constant 0.707106769 : f32
    %388 = vector.broadcast %cst_151 : f32 to vector<8x128xf32>
    %389 = arith.mulf %385, %388 : vector<8x128xf32>
    %cst_152 = arith.constant 0.000000e+00 : f32
    %390 = vector.broadcast %cst_152 : f32 to vector<8x128xf32>
    %391 = arith.cmpf oge, %389, %390 : vector<8x128xf32>
    %cst_153 = arith.constant 1.000000e+00 : f32
    %cst_154 = arith.constant -1.000000e+00 : f32
    %392 = vector.broadcast %cst_153 : f32 to vector<8x128xf32>
    %393 = vector.broadcast %cst_154 : f32 to vector<8x128xf32>
    %394 = arith.select %391, %392, %393 : vector<8x128xi1>, vector<8x128xf32>
    %395 = math.absf %389 : vector<8x128xf32>
    %cst_155 = arith.constant 0.327591091 : f32
    %396 = vector.broadcast %cst_155 : f32 to vector<8x128xf32>
    %397 = arith.mulf %396, %395 : vector<8x128xf32>
    %cst_156 = arith.constant 1.000000e+00 : f32
    %398 = vector.broadcast %cst_156 : f32 to vector<8x128xf32>
    %399 = arith.addf %398, %397 : vector<8x128xf32>
    %400 = tpu.reciprocal %399 {approx = true} : vector<8x128xf32> -> vector<8x128xf32>
    %cst_157 = arith.constant 1.06140542 : f32
    %401 = vector.broadcast %cst_157 : f32 to vector<8x128xf32>
    %402 = arith.mulf %401, %400 : vector<8x128xf32>
    %cst_158 = arith.constant -1.45315206 : f32
    %403 = vector.broadcast %cst_158 : f32 to vector<8x128xf32>
    %404 = arith.addf %402, %403 : vector<8x128xf32>
    %405 = arith.mulf %404, %400 : vector<8x128xf32>
    %cst_159 = arith.constant 1.42141378 : f32
    %406 = vector.broadcast %cst_159 : f32 to vector<8x128xf32>
    %407 = arith.addf %405, %406 : vector<8x128xf32>
    %408 = arith.mulf %407, %400 : vector<8x128xf32>
    %cst_160 = arith.constant -0.284496725 : f32
    %409 = vector.broadcast %cst_160 : f32 to vector<8x128xf32>
    %410 = arith.addf %408, %409 : vector<8x128xf32>
    %411 = arith.mulf %410, %400 : vector<8x128xf32>
    %cst_161 = arith.constant 0.254829586 : f32
    %412 = vector.broadcast %cst_161 : f32 to vector<8x128xf32>
    %413 = arith.addf %411, %412 : vector<8x128xf32>
    %414 = arith.mulf %413, %400 : vector<8x128xf32>
    %cst_162 = arith.constant 0.000000e+00 : f32
    %415 = vector.broadcast %cst_162 : f32 to vector<8x128xf32>
    %416 = arith.subf %415, %395 : vector<8x128xf32>
    %417 = arith.mulf %416, %395 : vector<8x128xf32>
    %418 = math.exp %417 : vector<8x128xf32>
    %419 = arith.mulf %414, %418 : vector<8x128xf32>
    %cst_163 = arith.constant 1.000000e+00 : f32
    %420 = vector.broadcast %cst_163 : f32 to vector<8x128xf32>
    %421 = arith.subf %420, %419 : vector<8x128xf32>
    %422 = arith.mulf %394, %421 : vector<8x128xf32>
    %cst_164 = arith.constant 1.000000e+00 : f32
    %423 = vector.broadcast %cst_164 : f32 to vector<8x128xf32>
    %424 = arith.addf %423, %422 : vector<8x128xf32>
    %425 = arith.mulf %387, %424 : vector<8x128xf32>
    %c1_165 = arith.constant 1 : index
    %c0_166 = arith.constant 0 : index
    %c0_167 = arith.constant 0 : index
    %426 = vector.load %arg20[%c1_165, %c0_166, %c0_167] : memref<2x128x64xbf16, #tpu.memory_space<vmem>>, vector<1x128x64xbf16>
    %427 = vector.shape_cast %426 : vector<1x128x64xbf16> to vector<128x64xbf16>
    %428 = arith.truncf %425 : vector<8x128xf32> to vector<8x128xbf16>
    %cst_168 = arith.constant dense<0.000000e+00> : vector<8x64xf32>
    %429 = tpu.matmul %428, %427, %cst_168 {dimension_numbers = #tpu.dot_dimension_numbers<[1], [0], [0], [1], [0, 0, 1, 1], [], []>} : vector<8x128xbf16>, vector<128x64xbf16>, vector<8x64xf32> -> vector<8x64xf32>
    %c1_169 = arith.constant 1 : index
    %c0_170 = arith.constant 0 : index
    %c0_171 = arith.constant 0 : index
    %430 = vector.load %arg21[%c1_169, %c0_170, %c0_171] : memref<2x1x64xf32, #tpu.memory_space<vmem>>, vector<1x1x64xf32>
    %431 = vector.shape_cast %430 : vector<1x1x64xf32> to vector<1x64xf32>
    %432 = vector.broadcast %431 : vector<1x64xf32> to vector<8x64xf32>
    %433 = arith.addf %429, %432 : vector<8x64xf32>
    %434 = arith.addf %329, %433 : vector<8x64xf32>
    %cst_172 = arith.constant dense<0.000000e+00> : vector<8xf32>
    %435 = vector.multi_reduction <add>, %434, %cst_172 [1] : vector<8x64xf32> to vector<8xf32>
    %436 = vector.shape_cast %435 : vector<8xf32> to vector<8x1xf32>
    %cst_173 = arith.constant 6.400000e+01 : f32
    %437 = vector.broadcast %cst_173 : f32 to vector<8x1xf32>
    %438 = arith.divf %436, %437 : vector<8x1xf32>
    %439 = vector.broadcast %438 : vector<8x1xf32> to vector<8x64xf32>
    %440 = arith.subf %434, %439 : vector<8x64xf32>
    %441 = arith.mulf %440, %440 : vector<8x64xf32>
    %cst_174 = arith.constant dense<0.000000e+00> : vector<8xf32>
    %442 = vector.multi_reduction <add>, %441, %cst_174 [1] : vector<8x64xf32> to vector<8xf32>
    %443 = vector.shape_cast %442 : vector<8xf32> to vector<8x1xf32>
    %cst_175 = arith.constant 6.400000e+01 : f32
    %444 = vector.broadcast %cst_175 : f32 to vector<8x1xf32>
    %445 = arith.divf %443, %444 : vector<8x1xf32>
    %446 = vector.broadcast %438 : vector<8x1xf32> to vector<8x64xf32>
    %447 = arith.subf %434, %446 : vector<8x64xf32>
    %cst_176 = arith.constant 9.99999974E-6 : f32
    %448 = vector.broadcast %cst_176 : f32 to vector<8x1xf32>
    %449 = arith.addf %445, %448 : vector<8x1xf32>
    %450 = math.rsqrt %449 : vector<8x1xf32>
    %451 = vector.broadcast %450 : vector<8x1xf32> to vector<8x64xf32>
    %452 = arith.mulf %447, %451 : vector<8x64xf32>
    %453 = vector.broadcast %79 : vector<1x64xf32> to vector<8x64xf32>
    %454 = arith.mulf %452, %453 : vector<8x64xf32>
    %455 = vector.broadcast %80 : vector<1x64xf32> to vector<8x64xf32>
    %456 = arith.addf %454, %455 : vector<8x64xf32>
    %457 = vector.shape_cast %456 : vector<8x64xf32> to vector<1x8x64xf32>
    %458 = vector.extract_strided_slice %457 {offsets = [0, 0, 0], sizes = [1, 1, 64], strides = [1, 1, 1]} : vector<1x8x64xf32> to vector<1x1x64xf32>
    %459 = vector.shape_cast %458 : vector<1x1x64xf32> to vector<1x64xf32>
    %c0_177 = arith.constant 0 : index
    %c0_178 = arith.constant 0 : index
    %460 = vector.load %arg22[%c0_177, %c0_178] : memref<64x128xbf16, #tpu.memory_space<vmem>>, vector<64x128xbf16>
    %461 = arith.truncf %459 : vector<1x64xf32> to vector<1x64xbf16>
    %cst_179 = arith.constant dense<0.000000e+00> : vector<1x128xf32>
    %462 = tpu.matmul %461, %460, %cst_179 {dimension_numbers = #tpu.dot_dimension_numbers<[1], [0], [0], [1], [0, 0, 1, 1], [], []>} : vector<1x64xbf16>, vector<64x128xbf16>, vector<1x128xf32> -> vector<1x128xf32>
    %c0_180 = arith.constant 0 : index
    %c0_181 = arith.constant 0 : index
    %463 = vector.load %arg23[%c0_180, %c0_181] : memref<1x128xf32, #tpu.memory_space<vmem>>, vector<1x128xf32>
    %464 = arith.addf %462, %463 : vector<1x128xf32>
    %c0_182 = arith.constant 0 : index
    %c0_183 = arith.constant 0 : index
    %c0_184 = arith.constant 0 : index
    %465 = vector.load %arg24[%c0_182, %c0_183, %c0_184] : memref<1x1x128xf32, #tpu.memory_space<vmem>>, vector<1x1x128xf32>
    %466 = vector.shape_cast %465 : vector<1x1x128xf32> to vector<1x128xf32>
    %467 = vector.shape_cast %464 : vector<1x128xf32> to vector<1x1x128xf32>
    tpu.vector_store %arg24[%c0_182, %c0_183, %c0_184], %467 {strides = array<i32>} : memref<1x1x128xf32, #tpu.memory_space<vmem>>, vector<1x1x128xf32>,
    return
  }
  func.func @transform_0(%arg0: i32) -> (i32, i32, i32, i32) {
    %c0_i32 = arith.constant 0 : i32
    %c0_i32_0 = arith.constant 0 : i32
    %c0_i32_1 = arith.constant 0 : i32
    %c0_i32_2 = arith.constant 0 : i32
    return %arg0, %c0_i32, %c0_i32_0, %c0_i32_1 : i32, i32, i32, i32
  }
  func.func @transform_1(%arg0: i32) -> (i32, i32) {
    %c0_i32 = arith.constant 0 : i32
    %c0_i32_0 = arith.constant 0 : i32
    %c0_i32_1 = arith.constant 0 : i32
    return %c0_i32, %c0_i32_0 : i32, i32
  }
  func.func @transform_2(%arg0: i32) -> (i32, i32) {
    %c0_i32 = arith.constant 0 : i32
    %c0_i32_0 = arith.constant 0 : i32
    %c0_i32_1 = arith.constant 0 : i32
    return %c0_i32, %c0_i32_0 : i32, i32
  }
  func.func @transform_3(%arg0: i32) -> (i32, i32) {
    %c0_i32 = arith.constant 0 : i32
    %c0_i32_0 = arith.constant 0 : i32
    %c0_i32_1 = arith.constant 0 : i32
    return %c0_i32, %c0_i32_0 : i32, i32
  }
  func.func @transform_4(%arg0: i32) -> (i32, i32) {
    %c0_i32 = arith.constant 0 : i32
    %c0_i32_0 = arith.constant 0 : i32
    %c0_i32_1 = arith.constant 0 : i32
    return %c0_i32, %c0_i32_0 : i32, i32
  }
  func.func @transform_5(%arg0: i32) -> (i32, i32) {
    %c0_i32 = arith.constant 0 : i32
    %c0_i32_0 = arith.constant 0 : i32
    %c0_i32_1 = arith.constant 0 : i32
    return %c0_i32, %c0_i32_0 : i32, i32
  }
  func.func @transform_6(%arg0: i32) -> (i32, i32) {
    %c0_i32 = arith.constant 0 : i32
    %c0_i32_0 = arith.constant 0 : i32
    %c0_i32_1 = arith.constant 0 : i32
    return %c0_i32, %c0_i32_0 : i32, i32
  }
  func.func @transform_7(%arg0: i32) -> (i32, i32) {
    %c0_i32 = arith.constant 0 : i32
    %c0_i32_0 = arith.constant 0 : i32
    %c0_i32_1 = arith.constant 0 : i32
    return %c0_i32, %c0_i32_0 : i32, i32
  }
  func.func @transform_8(%arg0: i32) -> (i32, i32) {
    %c0_i32 = arith.constant 0 : i32
    %c0_i32_0 = arith.constant 0 : i32
    %c0_i32_1 = arith.constant 0 : i32
    return %c0_i32, %c0_i32_0 : i32, i32
  }
  func.func @transform_9(%arg0: i32) -> (i32, i32) {
    %c0_i32 = arith.constant 0 : i32
    %c0_i32_0 = arith.constant 0 : i32
    %c0_i32_1 = arith.constant 0 : i32
    return %c0_i32, %c0_i32_0 : i32, i32
  }
  func.func @transform_10(%arg0: i32) -> (i32, i32) {
    %c0_i32 = arith.constant 0 : i32
    %c0_i32_0 = arith.constant 0 : i32
    %c0_i32_1 = arith.constant 0 : i32
    return %c0_i32, %c0_i32_0 : i32, i32
  }
  func.func @transform_11(%arg0: i32) -> (i32, i32, i32) {
    %c0_i32 = arith.constant 0 : i32
    %c0_i32_0 = arith.constant 0 : i32
    %c0_i32_1 = arith.constant 0 : i32
    %c0_i32_2 = arith.constant 0 : i32
    return %c0_i32, %c0_i32_0, %c0_i32_1 : i32, i32, i32
  }
  func.func @transform_12(%arg0: i32) -> (i32, i32, i32) {
    %c0_i32 = arith.constant 0 : i32
    %c0_i32_0 = arith.constant 0 : i32
    %c0_i32_1 = arith.constant 0 : i32
    %c0_i32_2 = arith.constant 0 : i32
    return %c0_i32, %c0_i32_0, %c0_i32_1 : i32, i32, i32
  }
  func.func @transform_13(%arg0: i32) -> (i32, i32, i32) {
    %c0_i32 = arith.constant 0 : i32
    %c0_i32_0 = arith.constant 0 : i32
    %c0_i32_1 = arith.constant 0 : i32
    %c0_i32_2 = arith.constant 0 : i32
    return %c0_i32, %c0_i32_0, %c0_i32_1 : i32, i32, i32
  }
  func.func @transform_14(%arg0: i32) -> (i32, i32, i32) {
    %c0_i32 = arith.constant 0 : i32
    %c0_i32_0 = arith.constant 0 : i32
    %c0_i32_1 = arith.constant 0 : i32
    %c0_i32_2 = arith.constant 0 : i32
    return %c0_i32, %c0_i32_0, %c0_i32_1 : i32, i32, i32
  }
  func.func @transform_15(%arg0: i32) -> (i32, i32, i32) {
    %c0_i32 = arith.constant 0 : i32
    %c0_i32_0 = arith.constant 0 : i32
    %c0_i32_1 = arith.constant 0 : i32
    %c0_i32_2 = arith.constant 0 : i32
    return %c0_i32, %c0_i32_0, %c0_i32_1 : i32, i32, i32
  }
  func.func @transform_16(%arg0: i32) -> (i32, i32, i32) {
    %c0_i32 = arith.constant 0 : i32
    %c0_i32_0 = arith.constant 0 : i32
    %c0_i32_1 = arith.constant 0 : i32
    %c0_i32_2 = arith.constant 0 : i32
    return %c0_i32, %c0_i32_0, %c0_i32_1 : i32, i32, i32
  }
  func.func @transform_17(%arg0: i32) -> (i32, i32, i32) {
    %c0_i32 = arith.constant 0 : i32
    %c0_i32_0 = arith.constant 0 : i32
    %c0_i32_1 = arith.constant 0 : i32
    %c0_i32_2 = arith.constant 0 : i32
    return %c0_i32, %c0_i32_0, %c0_i32_1 : i32, i32, i32
  }
  func.func @transform_18(%arg0: i32) -> (i32, i32, i32) {
    %c0_i32 = arith.constant 0 : i32
    %c0_i32_0 = arith.constant 0 : i32
    %c0_i32_1 = arith.constant 0 : i32
    %c0_i32_2 = arith.constant 0 : i32
    return %c0_i32, %c0_i32_0, %c0_i32_1 : i32, i32, i32
  }
  func.func @transform_19(%arg0: i32) -> (i32, i32, i32) {
    %c0_i32 = arith.constant 0 : i32
    %c0_i32_0 = arith.constant 0 : i32
    %c0_i32_1 = arith.constant 0 : i32
    %c0_i32_2 = arith.constant 0 : i32
    return %c0_i32, %c0_i32_0, %c0_i32_1 : i32, i32, i32
  }
  func.func @transform_20(%arg0: i32) -> (i32, i32, i32) {
    %c0_i32 = arith.constant 0 : i32
    %c0_i32_0 = arith.constant 0 : i32
    %c0_i32_1 = arith.constant 0 : i32
    %c0_i32_2 = arith.constant 0 : i32
    return %c0_i32, %c0_i32_0, %c0_i32_1 : i32, i32, i32
  }
  func.func @transform_21(%arg0: i32) -> (i32, i32) {
    %c0_i32 = arith.constant 0 : i32
    %c0_i32_0 = arith.constant 0 : i32
    %c0_i32_1 = arith.constant 0 : i32
    return %c0_i32, %c0_i32_0 : i32, i32
  }
  func.func @transform_22(%arg0: i32) -> (i32, i32) {
    %c0_i32 = arith.constant 0 : i32
    %c0_i32_0 = arith.constant 0 : i32
    %c0_i32_1 = arith.constant 0 : i32
    return %c0_i32, %c0_i32_0 : i32, i32
  }
  func.func @transform_23(%arg0: i32) -> (i32, i32, i32) {
    %c0_i32 = arith.constant 0 : i32
    %c0_i32_0 = arith.constant 0 : i32
    %c0_i32_1 = arith.constant 0 : i32
    return %arg0, %c0_i32, %c0_i32_0 : i32, i32, i32
  }
}

</mosaic_0001>

<llo_original>
// kernel: tpu_custom_call.1
$region0: #{tpu_custom_call.1}
  #allocation0 [shape = 'u32[]', space=smem, size = 0x4, offset = 0x4, fixed_abs, tag = 'smem constant byte address 0x4 - core index']
  #allocation1 [shape = 'u32[144,128]{1,0:T(1,128)}', space=vmem, size = 0x12000, scoped, tag = 'internal scratch']
  %s0 = inlined_call_operand.hbm [shape: bf16[2,1,8,192], index: 0, kind: input, shape index: {}]
  %s1 = inlined_call_operand.vmem [shape: f32[1,192], index: 1, kind: input, shape index: {}]
  %s2 = inlined_call_operand.hbm [shape: f32[1,192], index: 2, kind: input, shape index: {}]
  %s3 = inlined_call_operand.vmem [shape: bf16[192,64], index: 3, kind: input, shape index: {}]
  %s4 = inlined_call_operand.hbm [shape: f32[1,64], index: 4, kind: input, shape index: {}]
  %s5 = inlined_call_operand.hbm [shape: f32[1,64], index: 5, kind: input, shape index: {}]
  %s6 = inlined_call_operand.hbm [shape: f32[1,64], index: 6, kind: input, shape index: {}]
  %s7 = inlined_call_operand.vmem [shape: f32[1,64], index: 7, kind: input, shape index: {}]
  %s8 = inlined_call_operand.vmem [shape: f32[8,64], index: 8, kind: input, shape index: {}]
  %s9 = inlined_call_operand.vmem [shape: f32[1,64], index: 9, kind: input, shape index: {}]
  %s10 = inlined_call_operand.vmem [shape: f32[1,64], index: 10, kind: input, shape index: {}]
  %s11 = inlined_call_operand.vmem [shape: bf16[2,64,192], index: 11, kind: input, shape index: {}]
  %s12 = inlined_call_operand.vmem [shape: f32[2,1,192], index: 12, kind: input, shape index: {}]
  %s13 = inlined_call_operand.vmem [shape: bf16[2,64,64], index: 13, kind: input, shape index: {}]
  %s14 = inlined_call_operand.vmem [shape: f32[2,1,64], index: 14, kind: input, shape index: {}]
  %s15 = inlined_call_operand.vmem [shape: f32[2,1,64], index: 15, kind: input, shape index: {}]
  %s16 = inlined_call_operand.vmem [shape: f32[2,1,64], index: 16, kind: input, shape index: {}]
  %s17 = inlined_call_operand.vmem [shape: bf16[2,64,128], index: 17, kind: input, shape index: {}]
  %s18 = inlined_call_operand.vmem [shape: f32[2,1,128], index: 18, kind: input, shape index: {}]
  %s19 = inlined_call_operand.vmem [shape: bf16[2,128,64], index: 19, kind: input, shape index: {}]
  %s20 = inlined_call_operand.vmem [shape: f32[2,1,64], index: 20, kind: input, shape index: {}]
  %s21 = inlined_call_operand.vmem [shape: bf16[64,128], index: 21, kind: input, shape index: {}]
  %s22 = inlined_call_operand.vmem [shape: f32[1,128], index: 22, kind: input, shape index: {}]
  %s23 = inlined_call_operand.hbm [shape: f32[2,1,128], index: 23, kind: output, shape index: {}]
  %s24 = sld [smem:[#allocation0]]
  $region145: #{tpu_custom_call.1} parent=0
    _
  %s26 = ssub.s32 1, %s24
  %s27 = scalar_select 0, %s26, %s24
  $region1: #{tpu_custom_call.1} parent=0
    #allocation2 [shape = 'u8[8192]{0}', space=vmem, size = 0x2000, scoped, tag = 'input window, operand 0']
    #allocation3 [shape = 's32[2]{0}', space=sflag, size = 0x8, scoped, tag = 'scoped memory for tpu_custom_call.1']
    #allocation4 [shape = 's32[2]{0}', space=sflag, size = 0x8, scoped, tag = 'scoped memory for tpu_custom_call.1']
    #allocation5 [shape = 'u8[1024]{0}', space=vmem, size = 0x400, scoped, tag = 'input window, operand 2, single buffered']
    #allocation6 [shape = 's32[1]{0}', space=sflag, size = 0x4, scoped, tag = 'scoped memory for tpu_custom_call.1']
    #allocation7 [shape = 'u8[512]{0}', space=vmem, size = 0x400, scoped, tag = 'input window, operand 4, single buffered']
    #allocation8 [shape = 'u8[512]{0}', space=vmem, size = 0x400, scoped, tag = 'input window, operand 5, single buffered']
    #allocation9 [shape = 's32[1]{0}', space=sflag, size = 0x4, scoped, tag = 'scoped memory for tpu_custom_call.1']
    #allocation10 [shape = 'u8[512]{0}', space=vmem, size = 0x400, scoped, tag = 'input window, operand 6, single buffered']
    #allocation11 [shape = 'u8[1024]{0}', space=vmem, size = 0x400, scoped, tag = 'output window, operand 0']
    %28 = vsyncpa [#allocation3], 0
    %s29 = scalar_lea.sflag [#allocation3], 1
    %30 = vsyncpa %s29, 0
    %31 = vsyncpa [#allocation6], 0
    %32 = vsyncpa [#allocation9], 0
    %33 = vsyncpa [#allocation4], 0
    %s34 = scalar_lea.sflag [#allocation4], 1
    %35 = vsyncpa %s34, 0
    loop: start=0, step=1, limit=4
    $region2: #{tpu_custom_call.1} parent=1 // loop_pre_header
      _
    $region3: #{tpu_custom_call.1} parent=1 // loop_header
      %s37 = sphi 0, %s41
      %p38 = scmp.ge.s32.totalorder %s37, 4
      %s47 = sphi 0, %s49
      %s50 = sphi 0, %s47
      %s51 = sphi 0, %s50
      %s67 = sphi 0, %s51
      %s71 = sphi 0, %s71
      %s73 = sphi 0, %s71
      %s74 = sphi 0, %s73
      %s88 = sphi 0, %s74
      %s92 = sphi 0, %s92
      %s94 = sphi 0, %s92
      %s95 = sphi 0, %s94
      %s109 = sphi 0, %s95
      %s113 = sphi 0, %s113
      %s115 = sphi 0, %s113
      %s116 = sphi 0, %s115
      %s130 = sphi 0, %s116
      %s134 = sphi 0, %s134
      %s136 = sphi 0, %s134
      %s137 = sphi 0, %s136
      %s151 = sphi 0, %s137
      %s155 = sphi 0, %s155
      %s157 = sphi 0, %s155
      %s158 = sphi 0, %s157
      %s172 = sphi 0, %s158
      %s176 = sphi 0, %s176
      %s178 = sphi 0, %s176
      %s179 = sphi 0, %s178
      %s193 = sphi 0, %s179
      %s197 = sphi 0, %s197
      %s199 = sphi 0, %s197
      %s200 = sphi 0, %s199
      %s214 = sphi 0, %s200
      %s218 = sphi 0, %s218
      %s220 = sphi 0, %s218
      %s221 = sphi 0, %s220
      %s235 = sphi 0, %s221
      %s239 = sphi 0, %s239
      %s241 = sphi 0, %s239
      %s242 = sphi 0, %s241
      %s256 = sphi 0, %s242
      %s260 = sphi 0, %s260
      %s262 = sphi 0, %s260
      %s263 = sphi 0, %s262
      %s277 = sphi 0, %s263
      %s281 = sphi 0, %s281
      %s283 = sphi 0, %s281
      %s284 = sphi 0, %s283
      %s298 = sphi 0, %s284
      %s302 = sphi 0, %s302
      %s304 = sphi 0, %s302
      %s305 = sphi 0, %s304
      %s319 = sphi 0, %s305
      %s323 = sphi 0, %s323
      %s325 = sphi 0, %s323
      %s326 = sphi 0, %s325
      %s340 = sphi 0, %s326
      %s344 = sphi 0, %s344
      %s346 = sphi 0, %s344
      %s347 = sphi 0, %s346
      %s361 = sphi 0, %s347
      %s365 = sphi 0, %s365
      %s367 = sphi 0, %s365
      %s368 = sphi 0, %s367
      %s382 = sphi 0, %s368
      %s386 = sphi 0, %s386
      %s388 = sphi 0, %s386
      %s389 = sphi 0, %s388
      %s403 = sphi 0, %s389
      %s407 = sphi 0, %s407
      %s409 = sphi 0, %s407
      %s410 = sphi 0, %s409
      %s424 = sphi 0, %s410
      %s428 = sphi 0, %s428
      %s430 = sphi 0, %s428
      %s431 = sphi 0, %s430
      %s445 = sphi 0, %s431
      %s449 = sphi 0, %s449
      %s451 = sphi 0, %s449
      %s452 = sphi 0, %s451
      %s466 = sphi 0, %s452
      %s470 = sphi 0, %s470
      %s472 = sphi 0, %s470
      %s473 = sphi 0, %s472
      %s487 = sphi 0, %s473
      %s491 = sphi 0, %s491
      %s493 = sphi 0, %s491
      %s494 = sphi 0, %s493
      %s508 = sphi 0, %s494
      %s512 = sphi 0, %s512
      %s514 = sphi 0, %s512
      %s515 = sphi 0, %s514
      %s529 = sphi 0, %s515
      %s535 = sphi 0, %s537
      %s538 = sphi 0, %s535
      %s539 = sphi 0, %s538
      %s555 = sphi 0, %s539
    $region4: #{tpu_custom_call.1} parent=1 // loop_header_branch
      %40 = sbr.rel (%p38) target = $region8
    $region5: #{tpu_custom_call.1} parent=1 // loop_body
      %s42 = ssub.s32 %s37, 1
      %s43 = ssub.s32 %s37, 2
      %s44 = sadd.s32 %s37, 1
      %s45 = ssub.s32 %s37, %s44
      %p46 = scmp.eq.s32.totalorder %s45, 0
      %s48 = sadd.s32 %s47, 1
      %s49 = scalar_select %p46, %s47, %s48
      %p52 = pneg %p46
      %p53 = scmp.eq.s32.totalorder %s37, 1
      %p54 = por %p52, %p53
      %p55 = scmp.ne.s32.totalorder %s47, %s50
      %p56 = scmp.eq.s32.totalorder %s37, 0
      %p57 = por %p55, %p56
      %p58 = scmp.ne.s32.totalorder %s47, %s50
      %p59 = scmp.eq.s32.totalorder %s42, 1
      %p60 = por %p58, %p59
      %p61 = scmp.ne.s32.totalorder %s50, %s51
      %p62 = scmp.eq.s32.totalorder %s42, 0
      %p63 = por %p61, %p62
      %p64 = scmp.ne.s32.totalorder %s50, %s51
      %p65 = scmp.eq.s32.totalorder %s43, 1
      %p66 = por %p64, %p65
      %p68 = scmp.ne.s32.totalorder %s51, %s67
      %p69 = scmp.eq.s32.totalorder %s43, 0
      %p70 = por %p68, %p69
      %s72 = sadd.s32 %s71, 1
      %p75 = scmp.eq.s32.totalorder %s37, 1
      %p76 = scmp.ne.s32.totalorder %s71, %s73
      %p77 = scmp.eq.s32.totalorder %s37, 0
      %p78 = por %p76, %p77
      %p79 = scmp.ne.s32.totalorder %s71, %s73
      %p80 = scmp.eq.s32.totalorder %s42, 1
      %p81 = por %p79, %p80
      %p82 = scmp.ne.s32.totalorder %s73, %s74
      %p83 = scmp.eq.s32.totalorder %s42, 0
      %p84 = por %p82, %p83
      %p85 = scmp.ne.s32.totalorder %s73, %s74
      %p86 = scmp.eq.s32.totalorder %s43, 1
      %p87 = por %p85, %p86
      %p89 = scmp.ne.s32.totalorder %s74, %s88
      %p90 = scmp.eq.s32.totalorder %s43, 0
      %p91 = por %p89, %p90
      %s93 = sadd.s32 %s92, 1
      %p96 = scmp.eq.s32.totalorder %s37, 1
      %p97 = scmp.ne.s32.totalorder %s92, %s94
      %p98 = scmp.eq.s32.totalorder %s37, 0
      %p99 = por %p97, %p98
      %p100 = scmp.ne.s32.totalorder %s92, %s94
      %p101 = scmp.eq.s32.totalorder %s42, 1
      %p102 = por %p100, %p101
      %p103 = scmp.ne.s32.totalorder %s94, %s95
      %p104 = scmp.eq.s32.totalorder %s42, 0
      %p105 = por %p103, %p104
      %p106 = scmp.ne.s32.totalorder %s94, %s95
      %p107 = scmp.eq.s32.totalorder %s43, 1
      %p108 = por %p106, %p107
      %p110 = scmp.ne.s32.totalorder %s95, %s109
      %p111 = scmp.eq.s32.totalorder %s43, 0
      %p112 = por %p110, %p111
      %s114 = sadd.s32 %s113, 1
      %p117 = scmp.eq.s32.totalorder %s37, 1
      %p118 = scmp.ne.s32.totalorder %s113, %s115
      %p119 = scmp.eq.s32.totalorder %s37, 0
      %p120 = por %p118, %p119
      %p121 = scmp.ne.s32.totalorder %s113, %s115
      %p122 = scmp.eq.s32.totalorder %s42, 1
      %p123 = por %p121, %p122
      %p124 = scmp.ne.s32.totalorder %s115, %s116
      %p125 = scmp.eq.s32.totalorder %s42, 0
      %p126 = por %p124, %p125
      %p127 = scmp.ne.s32.totalorder %s115, %s116
      %p128 = scmp.eq.s32.totalorder %s43, 1
      %p129 = por %p127, %p128
      %p131 = scmp.ne.s32.totalorder %s116, %s130
      %p132 = scmp.eq.s32.totalorder %s43, 0
      %p133 = por %p131, %p132
      %s135 = sadd.s32 %s134, 1
      %p138 = scmp.eq.s32.totalorder %s37, 1
      %p139 = scmp.ne.s32.totalorder %s134, %s136
      %p140 = scmp.eq.s32.totalorder %s37, 0
      %p141 = por %p139, %p140
      %p142 = scmp.ne.s32.totalorder %s134, %s136
      %p143 = scmp.eq.s32.totalorder %s42, 1
      %p144 = por %p142, %p143
      %p145 = scmp.ne.s32.totalorder %s136, %s137
      %p146 = scmp.eq.s32.totalorder %s42, 0
      %p147 = por %p145, %p146
      %p148 = scmp.ne.s32.totalorder %s136, %s137
      %p149 = scmp.eq.s32.totalorder %s43, 1
      %p150 = por %p148, %p149
      %p152 = scmp.ne.s32.totalorder %s137, %s151
      %p153 = scmp.eq.s32.totalorder %s43, 0
      %p154 = por %p152, %p153
      %s156 = sadd.s32 %s155, 1
      %p159 = scmp.eq.s32.totalorder %s37, 1
      %p160 = scmp.ne.s32.totalorder %s155, %s157
      %p161 = scmp.eq.s32.totalorder %s37, 0
      %p162 = por %p160, %p161
      %p163 = scmp.ne.s32.totalorder %s155, %s157
      %p164 = scmp.eq.s32.totalorder %s42, 1
      %p165 = por %p163, %p164
      %p166 = scmp.ne.s32.totalorder %s157, %s158
      %p167 = scmp.eq.s32.totalorder %s42, 0
      %p168 = por %p166, %p167
      %p169 = scmp.ne.s32.totalorder %s157, %s158
      %p170 = scmp.eq.s32.totalorder %s43, 1
      %p171 = por %p169, %p170
      %p173 = scmp.ne.s32.totalorder %s158, %s172
      %p174 = scmp.eq.s32.totalorder %s43, 0
      %p175 = por %p173, %p174
      %s177 = sadd.s32 %s176, 1
      %p180 = scmp.eq.s32.totalorder %s37, 1
      %p181 = scmp.ne.s32.totalorder %s176, %s178
      %p182 = scmp.eq.s32.totalorder %s37, 0
      %p183 = por %p181, %p182
      %p184 = scmp.ne.s32.totalorder %s176, %s178
      %p185 = scmp.eq.s32.totalorder %s42, 1
      %p186 = por %p184, %p185
      %p187 = scmp.ne.s32.totalorder %s178, %s179
      %p188 = scmp.eq.s32.totalorder %s42, 0
      %p189 = por %p187, %p188
      %p190 = scmp.ne.s32.totalorder %s178, %s179
      %p191 = scmp.eq.s32.totalorder %s43, 1
      %p192 = por %p190, %p191
      %p194 = scmp.ne.s32.totalorder %s179, %s193
      %p195 = scmp.eq.s32.totalorder %s43, 0
      %p196 = por %p194, %p195
      %s198 = sadd.s32 %s197, 1
      %p201 = scmp.eq.s32.totalorder %s37, 1
      %p202 = scmp.ne.s32.totalorder %s197, %s199
      %p203 = scmp.eq.s32.totalorder %s37, 0
      %p204 = por %p202, %p203
      %p205 = scmp.ne.s32.totalorder %s197, %s199
      %p206 = scmp.eq.s32.totalorder %s42, 1
      %p207 = por %p205, %p206
      %p208 = scmp.ne.s32.totalorder %s199, %s200
      %p209 = scmp.eq.s32.totalorder %s42, 0
      %p210 = por %p208, %p209
      %p211 = scmp.ne.s32.totalorder %s199, %s200
      %p212 = scmp.eq.s32.totalorder %s43, 1
      %p213 = por %p211, %p212
      %p215 = scmp.ne.s32.totalorder %s200, %s214
      %p216 = scmp.eq.s32.totalorder %s43, 0
      %p217 = por %p215, %p216
      %s219 = sadd.s32 %s218, 1
      %p222 = scmp.eq.s32.totalorder %s37, 1
      %p223 = scmp.ne.s32.totalorder %s218, %s220
      %p224 = scmp.eq.s32.totalorder %s37, 0
      %p225 = por %p223, %p224
      %p226 = scmp.ne.s32.totalorder %s218, %s220
      %p227 = scmp.eq.s32.totalorder %s42, 1
      %p228 = por %p226, %p227
      %p229 = scmp.ne.s32.totalorder %s220, %s221
      %p230 = scmp.eq.s32.totalorder %s42, 0
      %p231 = por %p229, %p230
      %p232 = scmp.ne.s32.totalorder %s220, %s221
      %p233 = scmp.eq.s32.totalorder %s43, 1
      %p234 = por %p232, %p233
      %p236 = scmp.ne.s32.totalorder %s221, %s235
      %p237 = scmp.eq.s32.totalorder %s43, 0
      %p238 = por %p236, %p237
      %s240 = sadd.s32 %s239, 1
      %p243 = scmp.eq.s32.totalorder %s37, 1
      %p244 = scmp.ne.s32.totalorder %s239, %s241
      %p245 = scmp.eq.s32.totalorder %s37, 0
      %p246 = por %p244, %p245
      %p247 = scmp.ne.s32.totalorder %s239, %s241
      %p248 = scmp.eq.s32.totalorder %s42, 1
      %p249 = por %p247, %p248
      %p250 = scmp.ne.s32.totalorder %s241, %s242
      %p251 = scmp.eq.s32.totalorder %s42, 0
      %p252 = por %p250, %p251
      %p253 = scmp.ne.s32.totalorder %s241, %s242
      %p254 = scmp.eq.s32.totalorder %s43, 1
      %p255 = por %p253, %p254
      %p257 = scmp.ne.s32.totalorder %s242, %s256
      %p258 = scmp.eq.s32.totalorder %s43, 0
      %p259 = por %p257, %p258
      %s261 = sadd.s32 %s260, 1
      %p264 = scmp.eq.s32.totalorder %s37, 1
      %p265 = scmp.ne.s32.totalorder %s260, %s262
      %p266 = scmp.eq.s32.totalorder %s37, 0
      %p267 = por %p265, %p266
      %p268 = scmp.ne.s32.totalorder %s260, %s262
      %p269 = scmp.eq.s32.totalorder %s42, 1
      %p270 = por %p268, %p269
      %p271 = scmp.ne.s32.totalorder %s262, %s263
      %p272 = scmp.eq.s32.totalorder %s42, 0
      %p273 = por %p271, %p272
      %p274 = scmp.ne.s32.totalorder %s262, %s263
      %p275 = scmp.eq.s32.totalorder %s43, 1
      %p276 = por %p274, %p275
      %p278 = scmp.ne.s32.totalorder %s263, %s277
      %p279 = scmp.eq.s32.totalorder %s43, 0
      %p280 = por %p278, %p279
      %s282 = sadd.s32 %s281, 1
      %p285 = scmp.eq.s32.totalorder %s37, 1
      %p286 = scmp.ne.s32.totalorder %s281, %s283
      %p287 = scmp.eq.s32.totalorder %s37, 0
      %p288 = por %p286, %p287
      %p289 = scmp.ne.s32.totalorder %s281, %s283
      %p290 = scmp.eq.s32.totalorder %s42, 1
      %p291 = por %p289, %p290
      %p292 = scmp.ne.s32.totalorder %s283, %s284
      %p293 = scmp.eq.s32.totalorder %s42, 0
      %p294 = por %p292, %p293
      %p295 = scmp.ne.s32.totalorder %s283, %s284
      %p296 = scmp.eq.s32.totalorder %s43, 1
      %p297 = por %p295, %p296
      %p299 = scmp.ne.s32.totalorder %s284, %s298
      %p300 = scmp.eq.s32.totalorder %s43, 0
      %p301 = por %p299, %p300
      %s303 = sadd.s32 %s302, 1
      %p306 = scmp.eq.s32.totalorder %s37, 1
      %p307 = scmp.ne.s32.totalorder %s302, %s304
      %p308 = scmp.eq.s32.totalorder %s37, 0
      %p309 = por %p307, %p308
      %p310 = scmp.ne.s32.totalorder %s302, %s304
      %p311 = scmp.eq.s32.totalorder %s42, 1
      %p312 = por %p310, %p311
      %p313 = scmp.ne.s32.totalorder %s304, %s305
      %p314 = scmp.eq.s32.totalorder %s42, 0
      %p315 = por %p313, %p314
      %p316 = scmp.ne.s32.totalorder %s304, %s305
      %p317 = scmp.eq.s32.totalorder %s43, 1
      %p318 = por %p316, %p317
      %p320 = scmp.ne.s32.totalorder %s305, %s319
      %p321 = scmp.eq.s32.totalorder %s43, 0
      %p322 = por %p320, %p321
      %s324 = sadd.s32 %s323, 1
      %p327 = scmp.eq.s32.totalorder %s37, 1
      %p328 = scmp.ne.s32.totalorder %s323, %s325
      %p329 = scmp.eq.s32.totalorder %s37, 0
      %p330 = por %p328, %p329
      %p331 = scmp.ne.s32.totalorder %s323, %s325
      %p332 = scmp.eq.s32.totalorder %s42, 1
      %p333 = por %p331, %p332
      %p334 = scmp.ne.s32.totalorder %s325, %s326
      %p335 = scmp.eq.s32.totalorder %s42, 0
      %p336 = por %p334, %p335
      %p337 = scmp.ne.s32.totalorder %s325, %s326
      %p338 = scmp.eq.s32.totalorder %s43, 1
      %p339 = por %p337, %p338
      %p341 = scmp.ne.s32.totalorder %s326, %s340
      %p342 = scmp.eq.s32.totalorder %s43, 0
      %p343 = por %p341, %p342
      %s345 = sadd.s32 %s344, 1
      %p348 = scmp.eq.s32.totalorder %s37, 1
      %p349 = scmp.ne.s32.totalorder %s344, %s346
      %p350 = scmp.eq.s32.totalorder %s37, 0
      %p351 = por %p349, %p350
      %p352 = scmp.ne.s32.totalorder %s344, %s346
      %p353 = scmp.eq.s32.totalorder %s42, 1
      %p354 = por %p352, %p353
      %p355 = scmp.ne.s32.totalorder %s346, %s347
      %p356 = scmp.eq.s32.totalorder %s42, 0
      %p357 = por %p355, %p356
      %p358 = scmp.ne.s32.totalorder %s346, %s347
      %p359 = scmp.eq.s32.totalorder %s43, 1
      %p360 = por %p358, %p359
      %p362 = scmp.ne.s32.totalorder %s347, %s361
      %p363 = scmp.eq.s32.totalorder %s43, 0
      %p364 = por %p362, %p363
      %s366 = sadd.s32 %s365, 1
      %p369 = scmp.eq.s32.totalorder %s37, 1
      %p370 = scmp.ne.s32.totalorder %s365, %s367
      %p371 = scmp.eq.s32.totalorder %s37, 0
      %p372 = por %p370, %p371
      %p373 = scmp.ne.s32.totalorder %s365, %s367
      %p374 = scmp.eq.s32.totalorder %s42, 1
      %p375 = por %p373, %p374
      %p376 = scmp.ne.s32.totalorder %s367, %s368
      %p377 = scmp.eq.s32.totalorder %s42, 0
      %p378 = por %p376, %p377
      %p379 = scmp.ne.s32.totalorder %s367, %s368
      %p380 = scmp.eq.s32.totalorder %s43, 1
      %p381 = por %p379, %p380
      %p383 = scmp.ne.s32.totalorder %s368, %s382
      %p384 = scmp.eq.s32.totalorder %s43, 0
      %p385 = por %p383, %p384
      %s387 = sadd.s32 %s386, 1
      %p390 = scmp.eq.s32.totalorder %s37, 1
      %p391 = scmp.ne.s32.totalorder %s386, %s388
      %p392 = scmp.eq.s32.totalorder %s37, 0
      %p393 = por %p391, %p392
      %p394 = scmp.ne.s32.totalorder %s386, %s388
      %p395 = scmp.eq.s32.totalorder %s42, 1
      %p396 = por %p394, %p395
      %p397 = scmp.ne.s32.totalorder %s388, %s389
      %p398 = scmp.eq.s32.totalorder %s42, 0
      %p399 = por %p397, %p398
      %p400 = scmp.ne.s32.totalorder %s388, %s389
      %p401 = scmp.eq.s32.totalorder %s43, 1
      %p402 = por %p400, %p401
      %p404 = scmp.ne.s32.totalorder %s389, %s403
      %p405 = scmp.eq.s32.totalorder %s43, 0
      %p406 = por %p404, %p405
      %s408 = sadd.s32 %s407, 1
      %p411 = scmp.eq.s32.totalorder %s37, 1
      %p412 = scmp.ne.s32.totalorder %s407, %s409
      %p413 = scmp.eq.s32.totalorder %s37, 0
      %p414 = por %p412, %p413
      %p415 = scmp.ne.s32.totalorder %s407, %s409
      %p416 = scmp.eq.s32.totalorder %s42, 1
      %p417 = por %p415, %p416
      %p418 = scmp.ne.s32.totalorder %s409, %s410
      %p419 = scmp.eq.s32.totalorder %s42, 0
      %p420 = por %p418, %p419
      %p421 = scmp.ne.s32.totalorder %s409, %s410
      %p422 = scmp.eq.s32.totalorder %s43, 1
      %p423 = por %p421, %p422
      %p425 = scmp.ne.s32.totalorder %s410, %s424
      %p426 = scmp.eq.s32.totalorder %s43, 0
      %p427 = por %p425, %p426
      %s429 = sadd.s32 %s428, 1
      %p432 = scmp.eq.s32.totalorder %s37, 1
      %p433 = scmp.ne.s32.totalorder %s428, %s430
      %p434 = scmp.eq.s32.totalorder %s37, 0
      %p435 = por %p433, %p434
      %p436 = scmp.ne.s32.totalorder %s428, %s430
      %p437 = scmp.eq.s32.totalorder %s42, 1
      %p438 = por %p436, %p437
      %p439 = scmp.ne.s32.totalorder %s430, %s431
      %p440 = scmp.eq.s32.totalorder %s42, 0
      %p441 = por %p439, %p440
      %p442 = scmp.ne.s32.totalorder %s430, %s431
      %p443 = scmp.eq.s32.totalorder %s43, 1
      %p444 = por %p442, %p443
      %p446 = scmp.ne.s32.totalorder %s431, %s445
      %p447 = scmp.eq.s32.totalorder %s43, 0
      %p448 = por %p446, %p447
      %s450 = sadd.s32 %s449, 1
      %p453 = scmp.eq.s32.totalorder %s37, 1
      %p454 = scmp.ne.s32.totalorder %s449, %s451
      %p455 = scmp.eq.s32.totalorder %s37, 0
      %p456 = por %p454, %p455
      %p457 = scmp.ne.s32.totalorder %s449, %s451
      %p458 = scmp.eq.s32.totalorder %s42, 1
      %p459 = por %p457, %p458
      %p460 = scmp.ne.s32.totalorder %s451, %s452
      %p461 = scmp.eq.s32.totalorder %s42, 0
      %p462 = por %p460, %p461
      %p463 = scmp.ne.s32.totalorder %s451, %s452
      %p464 = scmp.eq.s32.totalorder %s43, 1
      %p465 = por %p463, %p464
      %p467 = scmp.ne.s32.totalorder %s452, %s466
      %p468 = scmp.eq.s32.totalorder %s43, 0
      %p469 = por %p467, %p468
      %s471 = sadd.s32 %s470, 1
      %p474 = scmp.eq.s32.totalorder %s37, 1
      %p475 = scmp.ne.s32.totalorder %s470, %s472
      %p476 = scmp.eq.s32.totalorder %s37, 0
      %p477 = por %p475, %p476
      %p478 = scmp.ne.s32.totalorder %s470, %s472
      %p479 = scmp.eq.s32.totalorder %s42, 1
      %p480 = por %p478, %p479
      %p481 = scmp.ne.s32.totalorder %s472, %s473
      %p482 = scmp.eq.s32.totalorder %s42, 0
      %p483 = por %p481, %p482
      %p484 = scmp.ne.s32.totalorder %s472, %s473
      %p485 = scmp.eq.s32.totalorder %s43, 1
      %p486 = por %p484, %p485
      %p488 = scmp.ne.s32.totalorder %s473, %s487
      %p489 = scmp.eq.s32.totalorder %s43, 0
      %p490 = por %p488, %p489
      %s492 = sadd.s32 %s491, 1
      %p495 = scmp.eq.s32.totalorder %s37, 1
      %p496 = scmp.ne.s32.totalorder %s491, %s493
      %p497 = scmp.eq.s32.totalorder %s37, 0
      %p498 = por %p496, %p497
      %p499 = scmp.ne.s32.totalorder %s491, %s493
      %p500 = scmp.eq.s32.totalorder %s42, 1
      %p501 = por %p499, %p500
      %p502 = scmp.ne.s32.totalorder %s493, %s494
      %p503 = scmp.eq.s32.totalorder %s42, 0
      %p504 = por %p502, %p503
      %p505 = scmp.ne.s32.totalorder %s493, %s494
      %p506 = scmp.eq.s32.totalorder %s43, 1
      %p507 = por %p505, %p506
      %p509 = scmp.ne.s32.totalorder %s494, %s508
      %p510 = scmp.eq.s32.totalorder %s43, 0
      %p511 = por %p509, %p510
      %s513 = sadd.s32 %s512, 1
      %p516 = scmp.eq.s32.totalorder %s37, 1
      %p517 = scmp.ne.s32.totalorder %s512, %s514
      %p518 = scmp.eq.s32.totalorder %s37, 0
      %p519 = por %p517, %p518
      %p520 = scmp.ne.s32.totalorder %s512, %s514
      %p521 = scmp.eq.s32.totalorder %s42, 1
      %p522 = por %p520, %p521
      %p523 = scmp.ne.s32.totalorder %s514, %s515
      %p524 = scmp.eq.s32.totalorder %s42, 0
      %p525 = por %p523, %p524
      %p526 = scmp.ne.s32.totalorder %s514, %s515
      %p527 = scmp.eq.s32.totalorder %s43, 1
      %p528 = por %p526, %p527
      %p530 = scmp.ne.s32.totalorder %s515, %s529
      %p531 = scmp.eq.s32.totalorder %s43, 0
      %p532 = por %p530, %p531
      %s533 = ssub.s32 %s37, %s44
      %p534 = scmp.eq.s32.totalorder %s533, 0
      %s536 = sadd.s32 %s535, 1
      %s537 = scalar_select %p534, %s535, %s536
      %p540 = pneg %p534
      %p541 = scmp.eq.s32.totalorder %s37, 1
      %p542 = por %p540, %p541
      %p543 = scmp.ne.s32.totalorder %s535, %s538
      %p544 = scmp.eq.s32.totalorder %s37, 0
      %p545 = por %p543, %p544
      %p546 = scmp.ne.s32.totalorder %s535, %s538
      %p547 = scmp.eq.s32.totalorder %s42, 1
      %p548 = por %p546, %p547
      %p549 = scmp.ne.s32.totalorder %s538, %s539
      %p550 = scmp.eq.s32.totalorder %s42, 0
      %p551 = por %p549, %p550
      %p552 = scmp.ne.s32.totalorder %s538, %s539
      %p553 = scmp.eq.s32.totalorder %s43, 1
      %p554 = por %p552, %p553
      %p556 = scmp.ne.s32.totalorder %s539, %s555
      %p557 = scmp.eq.s32.totalorder %s43, 0
      %p558 = por %p556, %p557
      %p559 = scmp.le.s32.totalorder 1, %s37
      %p560 = scmp.lt.s32.totalorder %s37, 3
      %p561 = pnand %p559, %p560
      %p562 = pneg %p561
      // Predicated region
      $region9: #{tpu_custom_call.1} parent=5 // pred_check
        _
      $region10: #{tpu_custom_call.1} parent=5 // pred_check_branch
        %564 = sbr.rel (%p561) target = $region12
      $region11: #{tpu_custom_call.1} parent=5 // pred_region
        %s565 = ssub.s32 %s37, 1
        // Predicated region
        $region13: #{tpu_custom_call.1} parent=11 // pred_check
          %p566 = pneg %p84
        $region14: #{tpu_custom_call.1} parent=11 // pred_check_branch
          %568 = sbr.rel (%p566) target = $region16
        $region15: #{tpu_custom_call.1} parent=11 // pred_region
          _
        $region16: #{tpu_custom_call.1} parent=11 // pred_fallthru
          _
        // Predicated region
        $region17: #{tpu_custom_call.1} parent=11 // pred_check
          %p569 = pneg %p105
        $region18: #{tpu_custom_call.1} parent=11 // pred_check_branch
          %571 = sbr.rel (%p569) target = $region20
        $region19: #{tpu_custom_call.1} parent=11 // pred_region
          %s573 = ssub.s32 32, 32
          %574 = vsyncadd [#allocation6], %s573
          %s576 = sshll.u32 [#allocation5], 4
          %s577 = int_to_ptr.vmem [resolvable:$true] %s576
          %579 = dma.hbm_to_vmem [thread:$0]  %s2, 32, %s577, [#allocation6]
        $region20: #{tpu_custom_call.1} parent=11 // pred_fallthru
          _
        // Predicated region
        $region21: #{tpu_custom_call.1} parent=11 // pred_check
          %p580 = pneg %p126
        $region22: #{tpu_custom_call.1} parent=11 // pred_check_branch
          %582 = sbr.rel (%p580) target = $region24
        $region23: #{tpu_custom_call.1} parent=11 // pred_region
          _
        $region24: #{tpu_custom_call.1} parent=11 // pred_fallthru
          _
        // Predicated region
        $region25: #{tpu_custom_call.1} parent=11 // pred_check
          %p583 = pneg %p147
        $region26: #{tpu_custom_call.1} parent=11 // pred_check_branch
          %585 = sbr.rel (%p583) target = $region28
        $region27: #{tpu_custom_call.1} parent=11 // pred_region
          %s587 = ssub.s32 16, 16
          %588 = vsyncadd [#allocation6], %s587
          %s590 = sshll.u32 [#allocation7], 4
          %s591 = int_to_ptr.vmem [resolvable:$true] %s590
          %593 = dma.hbm_to_vmem [thread:$0]  %s4, 16, %s591, [#allocation6]
        $region28: #{tpu_custom_call.1} parent=11 // pred_fallthru
          _
        // Predicated region
        $region29: #{tpu_custom_call.1} parent=11 // pred_check
          %p594 = pneg %p168
        $region30: #{tpu_custom_call.1} parent=11 // pred_check_branch
          %596 = sbr.rel (%p594) target = $region32
        $region31: #{tpu_custom_call.1} parent=11 // pred_region
          %s598 = ssub.s32 16, 16
          %599 = vsyncadd [#allocation9], %s598
          %s601 = sshll.u32 [#allocation8], 4
          %s602 = int_to_ptr.vmem [resolvable:$true] %s601
          %604 = dma.hbm_to_vmem [thread:$0]  %s5, 16, %s602, [#allocation9]
        $region32: #{tpu_custom_call.1} parent=11 // pred_fallthru
          _
        // Predicated region
        $region33: #{tpu_custom_call.1} parent=11 // pred_check
          %p605 = pneg %p189
        $region34: #{tpu_custom_call.1} parent=11 // pred_check_branch
          %607 = sbr.rel (%p605) target = $region36
        $region35: #{tpu_custom_call.1} parent=11 // pred_region
          %s609 = ssub.s32 16, 16
          %610 = vsyncadd [#allocation9], %s609
          %s612 = sshll.u32 [#allocation10], 4
          %s613 = int_to_ptr.vmem [resolvable:$true] %s612
          %615 = dma.hbm_to_vmem [thread:$0]  %s6, 16, %s613, [#allocation9]
        $region36: #{tpu_custom_call.1} parent=11 // pred_fallthru
          _
        // Predicated region
        $region37: #{tpu_custom_call.1} parent=11 // pred_check
          %p616 = pneg %p210
        $region38: #{tpu_custom_call.1} parent=11 // pred_check_branch
          %618 = sbr.rel (%p616) target = $region40
        $region39: #{tpu_custom_call.1} parent=11 // pred_region
          _
        $region40: #{tpu_custom_call.1} parent=11 // pred_fallthru
          _
        // Predicated region
        $region41: #{tpu_custom_call.1} parent=11 // pred_check
          %p619 = pneg %p231
        $region42: #{tpu_custom_call.1} parent=11 // pred_check_branch
          %621 = sbr.rel (%p619) target = $region44
        $region43: #{tpu_custom_call.1} parent=11 // pred_region
          _
        $region44: #{tpu_custom_call.1} parent=11 // pred_fallthru
          _
        // Predicated region
        $region45: #{tpu_custom_call.1} parent=11 // pred_check
          %p622 = pneg %p252
        $region46: #{tpu_custom_call.1} parent=11 // pred_check_branch
          %624 = sbr.rel (%p622) target = $region48
        $region47: #{tpu_custom_call.1} parent=11 // pred_region
          _
        $region48: #{tpu_custom_call.1} parent=11 // pred_fallthru
          _
        // Predicated region
        $region49: #{tpu_custom_call.1} parent=11 // pred_check
          %p625 = pneg %p273
        $region50: #{tpu_custom_call.1} parent=11 // pred_check_branch
          %627 = sbr.rel (%p625) target = $region52
        $region51: #{tpu_custom_call.1} parent=11 // pred_region
          _
        $region52: #{tpu_custom_call.1} parent=11 // pred_fallthru
          _
        // Predicated region
        $region53: #{tpu_custom_call.1} parent=11 // pred_check
          %p628 = pneg %p294
        $region54: #{tpu_custom_call.1} parent=11 // pred_check_branch
          %630 = sbr.rel (%p628) target = $region56
        $region55: #{tpu_custom_call.1} parent=11 // pred_region
          _
        $region56: #{tpu_custom_call.1} parent=11 // pred_fallthru
          _
        // Predicated region
        $region57: #{tpu_custom_call.1} parent=11 // pred_check
          %p631 = pneg %p315
        $region58: #{tpu_custom_call.1} parent=11 // pred_check_branch
          %633 = sbr.rel (%p631) target = $region60
        $region59: #{tpu_custom_call.1} parent=11 // pred_region
          _
        $region60: #{tpu_custom_call.1} parent=11 // pred_fallthru
          _
        // Predicated region
        $region61: #{tpu_custom_call.1} parent=11 // pred_check
          %p634 = pneg %p336
        $region62: #{tpu_custom_call.1} parent=11 // pred_check_branch
          %636 = sbr.rel (%p634) target = $region64
        $region63: #{tpu_custom_call.1} parent=11 // pred_region
          _
        $region64: #{tpu_custom_call.1} parent=11 // pred_fallthru
          _
        // Predicated region
        $region65: #{tpu_custom_call.1} parent=11 // pred_check
          %p637 = pneg %p357
        $region66: #{tpu_custom_call.1} parent=11 // pred_check_branch
          %639 = sbr.rel (%p637) target = $region68
        $region67: #{tpu_custom_call.1} parent=11 // pred_region
          _
        $region68: #{tpu_custom_call.1} parent=11 // pred_fallthru
          _
        // Predicated region
        $region69: #{tpu_custom_call.1} parent=11 // pred_check
          %p640 = pneg %p378
        $region70: #{tpu_custom_call.1} parent=11 // pred_check_branch
          %642 = sbr.rel (%p640) target = $region72
        $region71: #{tpu_custom_call.1} parent=11 // pred_region
          _
        $region72: #{tpu_custom_call.1} parent=11 // pred_fallthru
          _
        // Predicated region
        $region73: #{tpu_custom_call.1} parent=11 // pred_check
          %p643 = pneg %p399
        $region74: #{tpu_custom_call.1} parent=11 // pred_check_branch
          %645 = sbr.rel (%p643) target = $region76
        $region75: #{tpu_custom_call.1} parent=11 // pred_region
          _
        $region76: #{tpu_custom_call.1} parent=11 // pred_fallthru
          _
        // Predicated region
        $region77: #{tpu_custom_call.1} parent=11 // pred_check
          %p646 = pneg %p420
        $region78: #{tpu_custom_call.1} parent=11 // pred_check_branch
          %648 = sbr.rel (%p646) target = $region80
        $region79: #{tpu_custom_call.1} parent=11 // pred_region
          _
        $region80: #{tpu_custom_call.1} parent=11 // pred_fallthru
          _
        // Predicated region
        $region81: #{tpu_custom_call.1} parent=11 // pred_check
          %p649 = pneg %p441
        $region82: #{tpu_custom_call.1} parent=11 // pred_check_branch
          %651 = sbr.rel (%p649) target = $region84
        $region83: #{tpu_custom_call.1} parent=11 // pred_region
          _
        $region84: #{tpu_custom_call.1} parent=11 // pred_fallthru
          _
        // Predicated region
        $region85: #{tpu_custom_call.1} parent=11 // pred_check
          %p652 = pneg %p462
        $region86: #{tpu_custom_call.1} parent=11 // pred_check_branch
          %654 = sbr.rel (%p652) target = $region88
        $region87: #{tpu_custom_call.1} parent=11 // pred_region
          _
        $region88: #{tpu_custom_call.1} parent=11 // pred_fallthru
          _
        // Predicated region
        $region89: #{tpu_custom_call.1} parent=11 // pred_check
          %p655 = pneg %p483
        $region90: #{tpu_custom_call.1} parent=11 // pred_check_branch
          %657 = sbr.rel (%p655) target = $region92
        $region91: #{tpu_custom_call.1} parent=11 // pred_region
          _
        $region92: #{tpu_custom_call.1} parent=11 // pred_fallthru
          _
        // Predicated region
        $region93: #{tpu_custom_call.1} parent=11 // pred_check
          %p658 = pneg %p504
        $region94: #{tpu_custom_call.1} parent=11 // pred_check_branch
          %660 = sbr.rel (%p658) target = $region96
        $region95: #{tpu_custom_call.1} parent=11 // pred_region
          _
        $region96: #{tpu_custom_call.1} parent=11 // pred_fallthru
          _
        // Predicated region
        $region97: #{tpu_custom_call.1} parent=11 // pred_check
          %p661 = pneg %p525
        $region98: #{tpu_custom_call.1} parent=11 // pred_check_branch
          %663 = sbr.rel (%p661) target = $region100
        $region99: #{tpu_custom_call.1} parent=11 // pred_region
          _
        $region100: #{tpu_custom_call.1} parent=11 // pred_fallthru
          _
      $region12: #{tpu_custom_call.1} parent=5 // pred_fallthru
        _
      %p664 = scmp.lt.s32.totalorder %s37, 2
      // Predicated region
      $region101: #{tpu_custom_call.1} parent=5 // pred_check
        %p665 = pneg %p664
      $region102: #{tpu_custom_call.1} parent=5 // pred_check_branch
        %667 = sbr.rel (%p665) target = $region104
      $region103: #{tpu_custom_call.1} parent=5 // pred_region
        // Predicated region
        $region105: #{tpu_custom_call.1} parent=103 // pred_check
          %p668 = pneg %p57
        $region106: #{tpu_custom_call.1} parent=103 // pred_check_branch
          %670 = sbr.rel (%p668) target = $region108
        $region107: #{tpu_custom_call.1} parent=103 // pred_region
          %s671 = sand.u32 %s47, 1
          %s672 = scalar_lea.sflag [#allocation3], %s671
          %s673 = sand.u32 %s47, 1
          %s674 = smul.addr %s673, 8
          %s675 = scalar_lea.vmem [#allocation2], %s674
          %s677 = ssub.s32 128, 128
          %678 = vsyncadd %s672, %s677
          %s679 = smul.addr %s37, 2
          %s680 = smul.addr %s679, 64
          %s681 = scalar_lea.hbm %s0, %s680
          %s683 = sshll.u32 %s675, 4
          %s684 = int_to_ptr.vmem [resolvable:$true] %s683
          %686 = dma.hbm_to_vmem [thread:$0]  %s681, 128, %s684, %s672
        $region108: #{tpu_custom_call.1} parent=103 // pred_fallthru
          _
      $region104: #{tpu_custom_call.1} parent=5 // pred_fallthru
        _
      %p687 = scmp.le.s32.totalorder 1, %s37
      %p688 = scmp.lt.s32.totalorder %s37, 3
      %p689 = pnand %p687, %p688
      %p690 = pneg %p689
      // Predicated region
      $region109: #{tpu_custom_call.1} parent=5 // pred_check
        _
      $region110: #{tpu_custom_call.1} parent=5 // pred_check_branch
        %692 = sbr.rel (%p689) target = $region112
      $region111: #{tpu_custom_call.1} parent=5 // pred_region
        %s693 = ssub.s32 %s37, 1
        %s694 = sand.u32 %s50, 1
        %s695 = scalar_lea.sflag [#allocation3], %s694
        %s696 = sand.u32 %s50, 1
        %s697 = smul.addr %s696, 8
        %s698 = scalar_lea.vmem [#allocation2], %s697
        // Predicated region
        $region113: #{tpu_custom_call.1} parent=111 // pred_check
          %p699 = pneg %p63
        $region114: #{tpu_custom_call.1} parent=111 // pred_check_branch
          %701 = sbr.rel (%p699) target = $region116
        $region115: #{tpu_custom_call.1} parent=111 // pred_region
          %702 = dma.done %s695, 128
        $region116: #{tpu_custom_call.1} parent=111 // pred_fallthru
          _
        // Predicated region
        $region117: #{tpu_custom_call.1} parent=111 // pred_check
          %p703 = pneg %p105
        $region118: #{tpu_custom_call.1} parent=111 // pred_check_branch
          %705 = sbr.rel (%p703) target = $region120
        $region119: #{tpu_custom_call.1} parent=111 // pred_region
          %706 = dma.done [#allocation6], 32
        $region120: #{tpu_custom_call.1} parent=111 // pred_fallthru
          _
        // Predicated region
        $region121: #{tpu_custom_call.1} parent=111 // pred_check
          %p707 = pneg %p147
        $region122: #{tpu_custom_call.1} parent=111 // pred_check_branch
          %709 = sbr.rel (%p707) target = $region124
        $region123: #{tpu_custom_call.1} parent=111 // pred_region
          %710 = dma.done [#allocation6], 16
        $region124: #{tpu_custom_call.1} parent=111 // pred_fallthru
          _
        // Predicated region
        $region125: #{tpu_custom_call.1} parent=111 // pred_check
          %p711 = pneg %p168
        $region126: #{tpu_custom_call.1} parent=111 // pred_check_branch
          %713 = sbr.rel (%p711) target = $region128
        $region127: #{tpu_custom_call.1} parent=111 // pred_region
          %714 = dma.done [#allocation9], 16
        $region128: #{tpu_custom_call.1} parent=111 // pred_fallthru
          _
        // Predicated region
        $region129: #{tpu_custom_call.1} parent=111 // pred_check
          %p715 = pneg %p189
        $region130: #{tpu_custom_call.1} parent=111 // pred_check_branch
          %717 = sbr.rel (%p715) target = $region132
        $region131: #{tpu_custom_call.1} parent=111 // pred_region
          %718 = dma.done [#allocation9], 16
        $region132: #{tpu_custom_call.1} parent=111 // pred_fallthru
          _
        %s719 = sand.u32 %s50, 1
        %s720 = scalar_lea.sflag [#allocation3], %s719
        %s721 = sand.u32 %s50, 1
        %s722 = smul.addr %s721, 8
        %s723 = scalar_lea.vmem [#allocation2], %s722
        %p724 = pneg %p63
        %p725 = pneg %p60
        %p726 = pneg %p84
        %p727 = pneg %p81
        %p728 = pneg %p105
        %p729 = pneg %p102
        %p730 = pneg %p126
        %p731 = pneg %p123
        %p732 = pneg %p147
        %p733 = pneg %p144
        %p734 = pneg %p168
        %p735 = pneg %p165
        %p736 = pneg %p189
        %p737 = pneg %p186
        %p738 = pneg %p210
        %p739 = pneg %p207
        %p740 = pneg %p231
        %p741 = pneg %p228
        %p742 = pneg %p252
        %p743 = pneg %p249
        %p744 = pneg %p273
        %p745 = pneg %p270
        %p746 = pneg %p294
        %p747 = pneg %p291
        %p748 = pneg %p315
        %p749 = pneg %p312
        %p750 = pneg %p336
        %p751 = pneg %p333
        %p752 = pneg %p357
        %p753 = pneg %p354
        %p754 = pneg %p378
        %p755 = pneg %p375
        %p756 = pneg %p399
        %p757 = pneg %p396
        %p758 = pneg %p420
        %p759 = pneg %p417
        %p760 = pneg %p441
        %p761 = pneg %p438
        %p762 = pneg %p462
        %p763 = pneg %p459
        %p764 = pneg %p483
        %p765 = pneg %p480
        %p766 = pneg %p504
        %p767 = pneg %p501
        %p768 = pneg %p525
        %p769 = pneg %p522
        %p770 = pneg %p551
        %p771 = pneg %p548
        %s772 = sand.u32 %s538, 1
        %s773 = scalar_lea.sflag [#allocation4], %s772
        %s774 = sand.u32 %s538, 1
        %s775 = scalar_lea.vmem [#allocation11], %s774
        %v777 = vlaneseq
        %v778 = vand.u32 %v777, 127
        %vm779 = vcmp.lt.s32.totalorder %v778, 5
        %v780 = vsel %vm779, 0.0, -1e+30
        %v781 = vld [vmem:[%s698] sm:$0xff]
        %v782 = vunpack.c.l.bf16 %v781
        %v783 = vunpack.c.h.bf16 %v781
        %v784 = vld [vmem:[%s1] sm:$0x3]
        %v785 = vld [vmem:[#allocation5] sm:$0x3]
        %vm786 = vcmask 523264
        %v787 = vsel %vm786, %v783, 0.0
        %v788 = vadd.f32 %v782, %v787
        %789 = vadd.xlane.f32.xlu0 %v788
        %v790 = vpop.xlane.xlu0 %789
        %v791 = vrcp.pop 192.0
        %v792 = vmul.f32 %v790, %v791
        %v793 = vsub.f32 %v782, %v792
        %v794 = vsub.f32 %v783, %v792
        %v795 = vmul.f32 %v793, %v793
        %v796 = vmul.f32 %v794, %v794
        %v797 = vsel %vm786, %v796, 0.0
        %v798 = vadd.f32 %v795, %v797
        %799 = vadd.xlane.f32.xlu0 %v798
        %v800 = vpop.xlane.xlu0 %799
        %v801 = vmul.f32 %v800, %v791
        %v802 = vadd.f32 %v801, 1e-05
        %v803 = vrsqrt.pop %v802
        %v804 = vmul.f32 %v793, %v803
        %v805 = vmul.f32 %v794, %v803
        %v807 = vlaneseq
        %v808 = vshrl.u32 %v807, 7
        %v809 = vsub.s32 0, %v808
        %v810 = vrot.slane %v784, %v809
        %v811 = vlaneseq
        %v812 = vshrl.u32 %v811, 7
        %v813 = vsub.s32 1, %v812
        %v814 = vrot.slane %v784, %v813
        %v817 = vmul.f32 %v804, %v810
        %v818 = vmul.f32 %v805, %v814
        %v820 = vlaneseq
        %v821 = vshrl.u32 %v820, 7
        %v822 = vsub.s32 0, %v821
        %v823 = vrot.slane %v785, %v822
        %v824 = vlaneseq
        %v825 = vshrl.u32 %v824, 7
        %v826 = vsub.s32 1, %v825
        %v827 = vrot.slane %v785, %v826
        %v830 = vadd.f32 %v817, %v823
        %v831 = vadd.f32 %v818, %v827
        %v832 = vld [vmem:[%s3] sm:$0xf]
        %v833 = vld [vmem:[%s3 + $0x4] sm:$0xf]
        %v834 = vld [vmem:[%s3 + $0x8] sm:$0xf]
        %v835 = vld [vmem:[%s3 + $0xc] sm:$0xf]
        %v836 = vld [vmem:[%s3 + $0x10] sm:$0xf]
        %v837 = vld [vmem:[%s3 + $0x14] sm:$0xf]
        %v838 = vld [vmem:[%s3 + $0x18] sm:$0xf]
        %v839 = vld [vmem:[%s3 + $0x1c] sm:$0xf]
        %v840 = vld [vmem:[%s3 + $0x20] sm:$0xf]
        %v841 = vld [vmem:[%s3 + $0x24] sm:$0xf]
        %v842 = vld [vmem:[%s3 + $0x28] sm:$0xf]
        %v843 = vld [vmem:[%s3 + $0x2c] sm:$0xf]
        %v844 = vld [vmem:[%s3 + $0x30] sm:$0xf]
        %v845 = vld [vmem:[%s3 + $0x34] sm:$0xf]
        %v846 = vld [vmem:[%s3 + $0x38] sm:$0xf]
        %v847 = vld [vmem:[%s3 + $0x3c] sm:$0xf]
        %v848 = vld [vmem:[%s3 + $0x40] sm:$0xf]
        %v849 = vld [vmem:[%s3 + $0x44] sm:$0xf]
        %v850 = vld [vmem:[%s3 + $0x48] sm:$0xf]
        %v851 = vld [vmem:[%s3 + $0x4c] sm:$0xf]
        %v852 = vld [vmem:[%s3 + $0x50] sm:$0xf]
        %v853 = vld [vmem:[%s3 + $0x54] sm:$0xf]
        %v854 = vld [vmem:[%s3 + $0x58] sm:$0xf]
        %v855 = vld [vmem:[%s3 + $0x5c] sm:$0xf]
        %v856 = vpack.c.bf16 %v830, %v830
        %v857 = vpack.c.bf16 %v831, %v831
        %v858 = vld [vmem:[#allocation7] sm:$0x1]
        %v860 = vlaneseq
        %v861 = vshrl.u32 %v860, 7
        %v862 = vsub.s32 0, %v861
        %v863 = vrot.slane %v858, %v862
        %v889 = vunpack.c.l.b16 %v832
        %v890 = vunpack.c.l.b16 %v833
        %v891 = vunpack.c.l.b16 %v834
        %v892 = vunpack.c.l.b16 %v835
        %v893 = vunpack.c.l.b16 %v836
        %v894 = vunpack.c.l.b16 %v837
        %v895 = vunpack.c.l.b16 %v838
        %v896 = vunpack.c.l.b16 %v839
        %v897 = vunpack.c.l.b16 %v840
        %v898 = vunpack.c.l.b16 %v841
        %v899 = vunpack.c.l.b16 %v842
        %v900 = vunpack.c.l.b16 %v843
        %v901 = vunpack.c.l.b16 %v844
        %v902 = vunpack.c.l.b16 %v845
        %v903 = vunpack.c.l.b16 %v846
        %v904 = vunpack.c.l.b16 %v847
        %v905 = vunpack.c.l.b16 %v848
        %v906 = vunpack.c.l.b16 %v849
        %v907 = vunpack.c.l.b16 %v850
        %v908 = vunpack.c.l.b16 %v851
        %v909 = vunpack.c.l.b16 %v852
        %v910 = vunpack.c.l.b16 %v853
        %v911 = vunpack.c.l.b16 %v854
        %v912 = vunpack.c.l.b16 %v855
        %v913 = vpack.c.b16 %v890, %v889
        %v914 = vpack.c.b16 %v892, %v891
        %v915 = vpack.c.b16 %v894, %v893
        %v916 = vpack.c.b16 %v896, %v895
        %v917 = vpack.c.b16 %v898, %v897
        %v918 = vpack.c.b16 %v900, %v899
        %v919 = vpack.c.b16 %v902, %v901
        %v920 = vpack.c.b16 %v904, %v903
        %v921 = vpack.c.b16 %v906, %v905
        %v922 = vpack.c.b16 %v908, %v907
        %v923 = vpack.c.b16 %v910, %v909
        %v924 = vpack.c.b16 %v912, %v911
        %v938 = vsel %vm786, %v857, 0
        %940 = vmatprep.subr.bf16.mxu0 0
        %941 = vmatpush1.bf16.msra.mxu0 %v913
        %942 = vmatprep.subr.bf16.mxu0 0
        %943 = vmatpush1.bf16.msra.mxu0 %v914
        %944 = vmatprep.subr.bf16.mxu0 0
        %945 = vmatpush1.bf16.msra.mxu0 %v915
        %946 = vmatprep.subr.bf16.mxu0 0
        %947 = vmatpush1.bf16.msra.mxu0 %v916
        %948 = vmatprep.subr.bf16.mxu0 0
        %949 = vmatpush1.bf16.msra.mxu0 %v917
        %950 = vmatprep.subr.bf16.mxu0 0
        %951 = vmatpush1.bf16.msra.mxu0 %v918
        %952 = vmatprep.subr.bf16.mxu0 0
        %953 = vmatpush1.bf16.msra.mxu0 %v919
        %954 = vmatprep.subr.bf16.mxu0 0
        %955 = vmatpush1.bf16.msra.mxu0 %v920
        %956 = vmatprep.subr.bf16.mxu0 0
        %957 = vmatpush1.bf16.msra.mxu0 %v921
        %958 = vmatprep.subr.bf16.mxu0 0
        %959 = vmatpush1.bf16.msra.mxu0 %v922
        %960 = vmatprep.subr.bf16.mxu0 0
        %961 = vmatpush1.bf16.msra.mxu0 %v923
        %962 = vmatprep.subr.bf16.mxu0 0
        %963 = vmatpush1.bf16.msra.mxu0 %v924
        %964 = vmatprep.subr.bf16.mxu0 0
        %965 = vmatpush1.bf16.msra.mxu0 0
        %966 = vmatprep.subr.bf16.mxu0 0
        %967 = vmatpush1.bf16.msra.mxu0 0
        %968 = vmatprep.subr.bf16.mxu0 0
        %969 = vmatpush1.bf16.msra.mxu0 0
        %970 = vmatprep.subr.bf16.mxu0 0
        %971 = vmatpush1.bf16.msra.mxu0 0
        %972 = vmatprep.mubr.bf16.mxu0 %v938
        %973 = vmatmul.mubr.bf16.gmra.mrb[0].mxu0 %v856
        %v974 = vpop.f32.mrb[0].mxu0
        %v975 = vadd.f32 %v863, %v974
        %v976 = vpop.f32.mrb[0].mxu0
        %v977 = vpop.f32.mrb[0].mxu0
        %v978 = vpop.f32.mrb[0].mxu0
        %979 = vdwg.mxu0
        %v980 = vld [vmem:[#allocation8] sm:$0x1]
        %v981 = vld [vmem:[#allocation10] sm:$0x1]
        %v982 = vsel %vm786, %v975, 0.0
        %983 = vadd.xlane.f32.xlu0 %v982
        %v984 = vpop.xlane.xlu0 %983
        %v985 = vrcp.pop 64.0
        %v986 = vmul.f32 %v984, %v985
        %v987 = vsub.f32 %v975, %v986
        %v988 = vmul.f32 %v987, %v987
        %v989 = vsel %vm786, %v988, 0.0
        %990 = vadd.xlane.f32.xlu0 %v989
        %v991 = vpop.xlane.xlu0 %990
        %v992 = vmul.f32 %v991, %v985
        %v993 = vadd.f32 %v992, 1e-05
        %v994 = vrsqrt.pop %v993
        %v995 = vmul.f32 %v987, %v994
        %v997 = vlaneseq
        %v998 = vshrl.u32 %v997, 7
        %v999 = vsub.s32 0, %v998
        %v1000 = vrot.slane %v980, %v999
        %v1002 = vmul.f32 %v995, %v1000
        %v1004 = vlaneseq
        %v1005 = vshrl.u32 %v1004, 7
        %v1006 = vsub.s32 0, %v1005
        %v1007 = vrot.slane %v981, %v1006
        %v1009 = vadd.f32 %v1002, %v1007
        %v1010 = vlaneseq
        %v1011 = vshrl.u32 %v1010, 7
        %vm1012 = vcmp.eq.s32.totalorder %v1011, 0
        %v1013 = vld [vmem:[%s7] sm:$0x1]
        %v1014 = vsel %vm1012, 1, 0
        %vm1015 = vcmp.eq.s32.totalorder %v1014, 1
        %v1017 = vlaneseq
        %v1018 = vshrl.u32 %v1017, 7
        %v1019 = vsub.s32 0, %v1018
        %v1020 = vrot.slane %v1013, %v1019
        %v1022 = vsel %vm1015, %v1020, %v1009
        %v1023 = vld [vmem:[%s8] sm:$0xff]
        %v1024 = vadd.f32 %v1022, %v1023
        %v1025 = vld [vmem:[%s9] sm:$0x1]
        %v1026 = vld [vmem:[%s10] sm:$0x1]
        %v1027 = vsel %vm786, %v1024, 0.0
        %1028 = vadd.xlane.f32.xlu0 %v1027
        %v1029 = vpop.xlane.xlu0 %1028
        %v1030 = vmul.f32 %v1029, %v985
        %v1031 = vsub.f32 %v1024, %v1030
        %v1032 = vmul.f32 %v1031, %v1031
        %v1033 = vsel %vm786, %v1032, 0.0
        %1034 = vadd.xlane.f32.xlu0 %v1033
        %v1035 = vpop.xlane.xlu0 %1034
        %v1036 = vmul.f32 %v1035, %v985
        %v1037 = vadd.f32 %v1036, 1e-05
        %v1038 = vrsqrt.pop %v1037
        %v1039 = vmul.f32 %v1031, %v1038
        %v1041 = vlaneseq
        %v1042 = vshrl.u32 %v1041, 7
        %v1043 = vsub.s32 0, %v1042
        %v1044 = vrot.slane %v1025, %v1043
        %v1046 = vmul.f32 %v1039, %v1044
        %v1048 = vlaneseq
        %v1049 = vshrl.u32 %v1048, 7
        %v1050 = vsub.s32 0, %v1049
        %v1051 = vrot.slane %v1026, %v1050
        %v1053 = vadd.f32 %v1046, %v1051
        %v1054 = vld [vmem:[%s11] sm:$0xff]
        %v1055 = vld [vmem:[%s11 + $0x8] sm:$0xff]
        %v1056 = vld [vmem:[%s11 + $0x10] sm:$0xff]
        %v1057 = vld [vmem:[%s11 + $0x18] sm:$0xff]
        %v1058 = vld [vmem:[%s11 + $0x20] sm:$0xff]
        %v1059 = vld [vmem:[%s11 + $0x28] sm:$0xff]
        %v1060 = vld [vmem:[%s11 + $0x30] sm:$0xff]
        %v1061 = vld [vmem:[%s11 + $0x38] sm:$0xff]
        %v1062 = vpack.c.bf16 %v1053, %v1053
        %v1063 = vld [vmem:[%s12] sm:$0x3]
        %v1065 = vlaneseq
        %v1066 = vshrl.u32 %v1065, 7
        %v1067 = vsub.s32 0, %v1066
        %v1068 = vrot.slane %v1063, %v1067
        %v1069 = vlaneseq
        %v1070 = vshrl.u32 %v1069, 7
        %v1071 = vsub.s32 1, %v1070
        %v1072 = vrot.slane %v1063, %v1071
        %v1083 = vunpack.c.l.b16 %v1054
        %v1084 = vunpack.c.h.b16 %v1054
        %v1085 = vunpack.c.l.b16 %v1055
        %v1086 = vunpack.c.h.b16 %v1055
        %v1087 = vunpack.c.l.b16 %v1056
        %v1088 = vunpack.c.h.b16 %v1056
        %v1089 = vunpack.c.l.b16 %v1057
        %v1090 = vunpack.c.h.b16 %v1057
        %v1091 = vunpack.c.l.b16 %v1058
        %v1092 = vunpack.c.h.b16 %v1058
        %v1093 = vunpack.c.l.b16 %v1059
        %v1094 = vunpack.c.h.b16 %v1059
        %v1095 = vunpack.c.l.b16 %v1060
        %v1096 = vunpack.c.h.b16 %v1060
        %v1097 = vunpack.c.l.b16 %v1061
        %v1098 = vunpack.c.h.b16 %v1061
        %v1099 = vpack.c.b16 %v1085, %v1083
        %v1100 = vpack.c.b16 %v1086, %v1084
        %v1101 = vpack.c.b16 %v1089, %v1087
        %v1102 = vpack.c.b16 %v1090, %v1088
        %v1103 = vpack.c.b16 %v1093, %v1091
        %v1104 = vpack.c.b16 %v1094, %v1092
        %v1105 = vpack.c.b16 %v1097, %v1095
        %v1106 = vpack.c.b16 %v1098, %v1096
        %v1116 = vsel %vm786, %v1062, 0
        %1118 = vmatprep.subr.bf16.mxu0 %v1100
        %1119 = vmatpush1.bf16.msra.mxu0 %v1099
        %1120 = vmatprep.subr.bf16.mxu0 %v1102
        %1121 = vmatpush1.bf16.msra.mxu0 %v1101
        %1122 = vmatprep.subr.bf16.mxu0 %v1104
        %1123 = vmatpush1.bf16.msra.mxu0 %v1103
        %1124 = vmatprep.subr.bf16.mxu0 %v1106
        %1125 = vmatpush1.bf16.msra.mxu0 %v1105
        %1126 = vmatprep.subr.bf16.mxu0 0
        %1127 = vmatpush1.bf16.msra.mxu0 0
        %1128 = vmatprep.subr.bf16.mxu0 0
        %1129 = vmatpush1.bf16.msra.mxu0 0
        %1130 = vmatprep.subr.bf16.mxu0 0
        %1131 = vmatpush1.bf16.msra.mxu0 0
        %1132 = vmatprep.subr.bf16.mxu0 0
        %1133 = vmatpush1.bf16.msra.mxu0 0
        %1134 = vmatprep.subr.bf16.mxu0 0
        %1135 = vmatpush1.bf16.msra.mxu0 0
        %1136 = vmatprep.subr.bf16.mxu0 0
        %1137 = vmatpush1.bf16.msra.mxu0 0
        %1138 = vmatprep.subr.bf16.mxu0 0
        %1139 = vmatpush1.bf16.msra.mxu0 0
        %1140 = vmatprep.subr.bf16.mxu0 0
        %1141 = vmatpush1.bf16.msra.mxu0 0
        %1142 = vmatprep.subr.bf16.mxu0 0
        %1143 = vmatpush1.bf16.msra.mxu0 0
        %1144 = vmatprep.subr.bf16.mxu0 0
        %1145 = vmatpush1.bf16.msra.mxu0 0
        %1146 = vmatprep.subr.bf16.mxu0 0
        %1147 = vmatpush1.bf16.msra.mxu0 0
        %1148 = vmatprep.subr.bf16.mxu0 0
        %1149 = vmatpush1.bf16.msra.mxu0 0
        %1150 = vmatprep.mubr.bf16.mxu0 0
        %1151 = vmatmul.mubr.bf16.gmra.mrb[0].mxu0 %v1116
        %v1152 = vpop.f32.mrb[0].mxu0
        %v1153 = vadd.f32 %v1068, %v1152
        %v1154 = vpop.f32.mrb[0].mxu0
        %v1155 = vadd.f32 %v1072, %v1154
        %v1156 = vpop.f32.mrb[0].mxu0
        %v1157 = vpop.f32.mrb[0].mxu0
        %1158 = vdwg.mxu0
        %v1159 = vpack.c.bf16 %v1153, %v1153
        %v1160 = vpack.c.bf16 %v1155, %v1155
        %1162 = vrot.lane.b32.xlu0 %v1159, 112
        %v1163 = vpop.permute.xlu0 %1162
        %1164 = vrot.lane.b32.xlu0 %v1159, 96
        %v1165 = vpop.permute.xlu0 %1164
        %1166 = vrot.lane.b32.xlu0 %v1159, 80
        %v1167 = vpop.permute.xlu0 %1166
        %v1169 = vunpack.c.l.s4 1983009808
        %v1170 = vunpack.c.0.s8 %v1169
        %v1171 = vlaneseq
        %v1172 = vshrl.u32 %v1171, 7
        %v1173 = vsub.s32 %v1170, %v1172
        %v1174 = vrot.slane %v1159, %v1173
        %v1177 = vunpack.c.l.s4 1983009808
        %v1178 = vunpack.c.0.s8 %v1177
        %v1179 = vlaneseq
        %v1180 = vshrl.u32 %v1179, 7
        %v1181 = vsub.s32 %v1178, %v1180
        %v1182 = vrot.slane %v1165, %v1181
        %v1183 = vcombine.low %v1174, %v1182
        %v1184 = vcombine.high %v1174, %v1182
        %v1186 = vunpack.c.l.s4 1934713408
        %v1187 = vunpack.c.0.s8 %v1186
        %v1188 = vlaneseq
        %v1189 = vshrl.u32 %v1188, 7
        %v1190 = vsub.s32 %v1187, %v1189
        %v1191 = vrot.slane %v1183, %v1190
        %v1193 = vunpack.c.l.s4 1934713408
        %v1194 = vunpack.c.0.s8 %v1193
        %v1195 = vlaneseq
        %v1196 = vshrl.u32 %v1195, 7
        %v1197 = vsub.s32 %v1194, %v1196
        %v1198 = vrot.slane %v1184, %v1197
        %v1199 = vcombine.high %v1191, 0
        %v1200 = vcombine.high %v1198, 0
        %v1203 = vunpack.c.l.s4 1983009808
        %v1204 = vunpack.c.0.s8 %v1203
        %v1205 = vlaneseq
        %v1206 = vshrl.u32 %v1205, 7
        %v1207 = vsub.s32 %v1204, %v1206
        %v1208 = vrot.slane %v1163, %v1207
        %v1211 = vunpack.c.l.s4 1983009808
        %v1212 = vunpack.c.0.s8 %v1211
        %v1213 = vlaneseq
        %v1214 = vshrl.u32 %v1213, 7
        %v1215 = vsub.s32 %v1212, %v1214
        %v1216 = vrot.slane %v1167, %v1215
        %v1217 = vcombine.low %v1208, %v1216
        %v1218 = vcombine.high %v1208, %v1216
        %v1220 = vunpack.c.l.s4 1934713408
        %v1221 = vunpack.c.0.s8 %v1220
        %v1222 = vlaneseq
        %v1223 = vshrl.u32 %v1222, 7
        %v1224 = vsub.s32 %v1221, %v1223
        %v1225 = vrot.slane %v1217, %v1224
        %v1227 = vunpack.c.l.s4 1934713408
        %v1228 = vunpack.c.0.s8 %v1227
        %v1229 = vlaneseq
        %v1230 = vshrl.u32 %v1229, 7
        %v1231 = vsub.s32 %v1228, %v1230
        %v1232 = vrot.slane %v1218, %v1231
        %v1233 = vcombine.high %v1225, 0
        %v1234 = vcombine.high %v1232, 0
        %v1237 = vpack.i.b16 %v1225, %v1191
        %v1239 = vshrl.u32 %v1191, 16
        %v1240 = vshrl.u32 %v1225, 16
        %v1241 = vpack.i.b16 %v1240, %v1239
        %v1245 = vpack.i.b16 %v1233, %v1199
        %v1247 = vshrl.u32 %v1199, 16
        %v1248 = vshrl.u32 %v1233, 16
        %v1249 = vpack.i.b16 %v1248, %v1247
        %v1253 = vpack.i.b16 %v1232, %v1198
        %v1255 = vshrl.u32 %v1198, 16
        %v1256 = vshrl.u32 %v1232, 16
        %v1257 = vpack.i.b16 %v1256, %v1255
        %v1261 = vpack.i.b16 %v1234, %v1200
        %v1263 = vshrl.u32 %v1200, 16
        %v1264 = vshrl.u32 %v1234, 16
        %v1265 = vpack.i.b16 %v1264, %v1263
        %v1267 = vcombine.low %v1237, %v1253
        %v1269 = vunpack.c.l.s4 1983009808
        %v1270 = vunpack.c.0.s8 %v1269
        %v1271 = vlaneseq
        %v1272 = vshrl.u32 %v1271, 7
        %v1273 = vsub.s32 %v1270, %v1272
        %v1274 = vrot.slane %v1267, %v1273
        %v1275 = vcombine.low %v1245, %v1261
        %v1277 = vunpack.c.l.s4 1983009808
        %v1278 = vunpack.c.0.s8 %v1277
        %v1279 = vlaneseq
        %v1280 = vshrl.u32 %v1279, 7
        %v1281 = vsub.s32 %v1278, %v1280
        %v1282 = vrot.slane %v1275, %v1281
        %v1283 = vcombine.low %v1274, %v1282
        %v1285 = vunpack.c.l.s4 1934713408
        %v1286 = vunpack.c.0.s8 %v1285
        %v1287 = vlaneseq
        %v1288 = vshrl.u32 %v1287, 7
        %v1289 = vsub.s32 %v1286, %v1288
        %v1290 = vrot.slane %v1283, %v1289
        %v1291 = vcombine.high %v1290, 0
        %v1292 = vcombine.low %v1241, %v1257
        %v1294 = vunpack.c.l.s4 1983009808
        %v1295 = vunpack.c.0.s8 %v1294
        %v1296 = vlaneseq
        %v1297 = vshrl.u32 %v1296, 7
        %v1298 = vsub.s32 %v1295, %v1297
        %v1299 = vrot.slane %v1292, %v1298
        %v1300 = vcombine.low %v1249, %v1265
        %v1302 = vunpack.c.l.s4 1983009808
        %v1303 = vunpack.c.0.s8 %v1302
        %v1304 = vlaneseq
        %v1305 = vshrl.u32 %v1304, 7
        %v1306 = vsub.s32 %v1303, %v1305
        %v1307 = vrot.slane %v1300, %v1306
        %v1308 = vcombine.low %v1299, %v1307
        %v1310 = vunpack.c.l.s4 1934713408
        %v1311 = vunpack.c.0.s8 %v1310
        %v1312 = vlaneseq
        %v1313 = vshrl.u32 %v1312, 7
        %v1314 = vsub.s32 %v1311, %v1313
        %v1315 = vrot.slane %v1308, %v1314
        %v1316 = vcombine.high %v1315, 0
        %v1319 = vpack.i.b16 %v1315, %v1290
        %v1320 = vshrl.u32 %v1290, 16
        %v1321 = vshrl.u32 %v1315, 16
        %v1322 = vpack.i.b16 %v1321, %v1320
        %v1325 = vpack.i.b16 %v1316, %v1291
        %v1326 = vshrl.u32 %v1291, 16
        %v1327 = vshrl.u32 %v1316, 16
        %v1328 = vpack.i.b16 %v1327, %v1326
        %1329 = vrot.lane.b32.xlu0 %v1159, 64
        %v1330 = vpop.permute.xlu0 %1329
        %1331 = vrot.lane.b32.xlu0 %v1163, 64
        %v1332 = vpop.permute.xlu0 %1331
        %1333 = vrot.lane.b32.xlu0 %v1165, 64
        %v1334 = vpop.permute.xlu0 %1333
        %1335 = vrot.lane.b32.xlu0 %v1167, 64
        %v1336 = vpop.permute.xlu0 %1335
        %v1339 = vunpack.c.l.s4 1983009808
        %v1340 = vunpack.c.0.s8 %v1339
        %v1341 = vlaneseq
        %v1342 = vshrl.u32 %v1341, 7
        %v1343 = vsub.s32 %v1340, %v1342
        %v1344 = vrot.slane %v1330, %v1343
        %v1347 = vunpack.c.l.s4 1983009808
        %v1348 = vunpack.c.0.s8 %v1347
        %v1349 = vlaneseq
        %v1350 = vshrl.u32 %v1349, 7
        %v1351 = vsub.s32 %v1348, %v1350
        %v1352 = vrot.slane %v1334, %v1351
        %v1353 = vcombine.low %v1344, %v1352
        %v1354 = vcombine.high %v1344, %v1352
        %v1356 = vunpack.c.l.s4 1934713408
        %v1357 = vunpack.c.0.s8 %v1356
        %v1358 = vlaneseq
        %v1359 = vshrl.u32 %v1358, 7
        %v1360 = vsub.s32 %v1357, %v1359
        %v1361 = vrot.slane %v1353, %v1360
        %v1363 = vunpack.c.l.s4 1934713408
        %v1364 = vunpack.c.0.s8 %v1363
        %v1365 = vlaneseq
        %v1366 = vshrl.u32 %v1365, 7
        %v1367 = vsub.s32 %v1364, %v1366
        %v1368 = vrot.slane %v1354, %v1367
        %v1369 = vcombine.high %v1361, 0
        %v1370 = vcombine.high %v1368, 0
        %v1373 = vunpack.c.l.s4 1983009808
        %v1374 = vunpack.c.0.s8 %v1373
        %v1375 = vlaneseq
        %v1376 = vshrl.u32 %v1375, 7
        %v1377 = vsub.s32 %v1374, %v1376
        %v1378 = vrot.slane %v1332, %v1377
        %v1381 = vunpack.c.l.s4 1983009808
        %v1382 = vunpack.c.0.s8 %v1381
        %v1383 = vlaneseq
        %v1384 = vshrl.u32 %v1383, 7
        %v1385 = vsub.s32 %v1382, %v1384
        %v1386 = vrot.slane %v1336, %v1385
        %v1387 = vcombine.low %v1378, %v1386
        %v1388 = vcombine.high %v1378, %v1386
        %v1390 = vunpack.c.l.s4 1934713408
        %v1391 = vunpack.c.0.s8 %v1390
        %v1392 = vlaneseq
        %v1393 = vshrl.u32 %v1392, 7
        %v1394 = vsub.s32 %v1391, %v1393
        %v1395 = vrot.slane %v1387, %v1394
        %v1397 = vunpack.c.l.s4 1934713408
        %v1398 = vunpack.c.0.s8 %v1397
        %v1399 = vlaneseq
        %v1400 = vshrl.u32 %v1399, 7
        %v1401 = vsub.s32 %v1398, %v1400
        %v1402 = vrot.slane %v1388, %v1401
        %v1403 = vcombine.high %v1395, 0
        %v1404 = vcombine.high %v1402, 0
        %v1407 = vpack.i.b16 %v1395, %v1361
        %v1409 = vshrl.u32 %v1361, 16
        %v1410 = vshrl.u32 %v1395, 16
        %v1411 = vpack.i.b16 %v1410, %v1409
        %v1415 = vpack.i.b16 %v1403, %v1369
        %v1417 = vshrl.u32 %v1369, 16
        %v1418 = vshrl.u32 %v1403, 16
        %v1419 = vpack.i.b16 %v1418, %v1417
        %v1423 = vpack.i.b16 %v1402, %v1368
        %v1425 = vshrl.u32 %v1368, 16
        %v1426 = vshrl.u32 %v1402, 16
        %v1427 = vpack.i.b16 %v1426, %v1425
        %v1431 = vpack.i.b16 %v1404, %v1370
        %v1433 = vshrl.u32 %v1370, 16
        %v1434 = vshrl.u32 %v1404, 16
        %v1435 = vpack.i.b16 %v1434, %v1433
        %v1437 = vcombine.low %v1407, %v1423
        %v1439 = vunpack.c.l.s4 1983009808
        %v1440 = vunpack.c.0.s8 %v1439
        %v1441 = vlaneseq
        %v1442 = vshrl.u32 %v1441, 7
        %v1443 = vsub.s32 %v1440, %v1442
        %v1444 = vrot.slane %v1437, %v1443
        %v1445 = vcombine.low %v1415, %v1431
        %v1447 = vunpack.c.l.s4 1983009808
        %v1448 = vunpack.c.0.s8 %v1447
        %v1449 = vlaneseq
        %v1450 = vshrl.u32 %v1449, 7
        %v1451 = vsub.s32 %v1448, %v1450
        %v1452 = vrot.slane %v1445, %v1451
        %v1453 = vcombine.low %v1444, %v1452
        %v1455 = vunpack.c.l.s4 1934713408
        %v1456 = vunpack.c.0.s8 %v1455
        %v1457 = vlaneseq
        %v1458 = vshrl.u32 %v1457, 7
        %v1459 = vsub.s32 %v1456, %v1458
        %v1460 = vrot.slane %v1453, %v1459
        %v1461 = vcombine.high %v1460, 0
        %v1462 = vcombine.low %v1411, %v1427
        %v1464 = vunpack.c.l.s4 1983009808
        %v1465 = vunpack.c.0.s8 %v1464
        %v1466 = vlaneseq
        %v1467 = vshrl.u32 %v1466, 7
        %v1468 = vsub.s32 %v1465, %v1467
        %v1469 = vrot.slane %v1462, %v1468
        %v1470 = vcombine.low %v1419, %v1435
        %v1472 = vunpack.c.l.s4 1983009808
        %v1473 = vunpack.c.0.s8 %v1472
        %v1474 = vlaneseq
        %v1475 = vshrl.u32 %v1474, 7
        %v1476 = vsub.s32 %v1473, %v1475
        %v1477 = vrot.slane %v1470, %v1476
        %v1478 = vcombine.low %v1469, %v1477
        %v1480 = vunpack.c.l.s4 1934713408
        %v1481 = vunpack.c.0.s8 %v1480
        %v1482 = vlaneseq
        %v1483 = vshrl.u32 %v1482, 7
        %v1484 = vsub.s32 %v1481, %v1483
        %v1485 = vrot.slane %v1478, %v1484
        %v1486 = vcombine.high %v1485, 0
        %v1489 = vpack.i.b16 %v1485, %v1460
        %v1490 = vshrl.u32 %v1460, 16
        %v1491 = vshrl.u32 %v1485, 16
        %v1492 = vpack.i.b16 %v1491, %v1490
        %v1495 = vpack.i.b16 %v1486, %v1461
        %v1496 = vshrl.u32 %v1461, 16
        %v1497 = vshrl.u32 %v1486, 16
        %v1498 = vpack.i.b16 %v1497, %v1496
        %1500 = vrot.lane.b32.xlu0 %v1160, 112
        %v1501 = vpop.permute.xlu0 %1500
        %1502 = vrot.lane.b32.xlu0 %v1160, 96
        %v1503 = vpop.permute.xlu0 %1502
        %1504 = vrot.lane.b32.xlu0 %v1160, 80
        %v1505 = vpop.permute.xlu0 %1504
        %v1507 = vunpack.c.l.s4 1983009808
        %v1508 = vunpack.c.0.s8 %v1507
        %v1509 = vlaneseq
        %v1510 = vshrl.u32 %v1509, 7
        %v1511 = vsub.s32 %v1508, %v1510
        %v1512 = vrot.slane %v1160, %v1511
        %v1515 = vunpack.c.l.s4 1983009808
        %v1516 = vunpack.c.0.s8 %v1515
        %v1517 = vlaneseq
        %v1518 = vshrl.u32 %v1517, 7
        %v1519 = vsub.s32 %v1516, %v1518
        %v1520 = vrot.slane %v1503, %v1519
        %v1521 = vcombine.low %v1512, %v1520
        %v1522 = vcombine.high %v1512, %v1520
        %v1524 = vunpack.c.l.s4 1934713408
        %v1525 = vunpack.c.0.s8 %v1524
        %v1526 = vlaneseq
        %v1527 = vshrl.u32 %v1526, 7
        %v1528 = vsub.s32 %v1525, %v1527
        %v1529 = vrot.slane %v1521, %v1528
        %v1531 = vunpack.c.l.s4 1934713408
        %v1532 = vunpack.c.0.s8 %v1531
        %v1533 = vlaneseq
        %v1534 = vshrl.u32 %v1533, 7
        %v1535 = vsub.s32 %v1532, %v1534
        %v1536 = vrot.slane %v1522, %v1535
        %v1537 = vcombine.high %v1529, 0
        %v1538 = vcombine.high %v1536, 0
        %v1541 = vunpack.c.l.s4 1983009808
        %v1542 = vunpack.c.0.s8 %v1541
        %v1543 = vlaneseq
        %v1544 = vshrl.u32 %v1543, 7
        %v1545 = vsub.s32 %v1542, %v1544
        %v1546 = vrot.slane %v1501, %v1545
        %v1549 = vunpack.c.l.s4 1983009808
        %v1550 = vunpack.c.0.s8 %v1549
        %v1551 = vlaneseq
        %v1552 = vshrl.u32 %v1551, 7
        %v1553 = vsub.s32 %v1550, %v1552
        %v1554 = vrot.slane %v1505, %v1553
        %v1555 = vcombine.low %v1546, %v1554
        %v1556 = vcombine.high %v1546, %v1554
        %v1558 = vunpack.c.l.s4 1934713408
        %v1559 = vunpack.c.0.s8 %v1558
        %v1560 = vlaneseq
        %v1561 = vshrl.u32 %v1560, 7
        %v1562 = vsub.s32 %v1559, %v1561
        %v1563 = vrot.slane %v1555, %v1562
        %v1565 = vunpack.c.l.s4 1934713408
        %v1566 = vunpack.c.0.s8 %v1565
        %v1567 = vlaneseq
        %v1568 = vshrl.u32 %v1567, 7
        %v1569 = vsub.s32 %v1566, %v1568
        %v1570 = vrot.slane %v1556, %v1569
        %v1571 = vcombine.high %v1563, 0
        %v1572 = vcombine.high %v1570, 0
        %v1575 = vpack.i.b16 %v1563, %v1529
        %v1577 = vshrl.u32 %v1529, 16
        %v1578 = vshrl.u32 %v1563, 16
        %v1579 = vpack.i.b16 %v1578, %v1577
        %v1583 = vpack.i.b16 %v1571, %v1537
        %v1585 = vshrl.u32 %v1537, 16
        %v1586 = vshrl.u32 %v1571, 16
        %v1587 = vpack.i.b16 %v1586, %v1585
        %v1591 = vpack.i.b16 %v1570, %v1536
        %v1593 = vshrl.u32 %v1536, 16
        %v1594 = vshrl.u32 %v1570, 16
        %v1595 = vpack.i.b16 %v1594, %v1593
        %v1599 = vpack.i.b16 %v1572, %v1538
        %v1601 = vshrl.u32 %v1538, 16
        %v1602 = vshrl.u32 %v1572, 16
        %v1603 = vpack.i.b16 %v1602, %v1601
        %v1605 = vcombine.low %v1575, %v1591
        %v1607 = vunpack.c.l.s4 1983009808
        %v1608 = vunpack.c.0.s8 %v1607
        %v1609 = vlaneseq
        %v1610 = vshrl.u32 %v1609, 7
        %v1611 = vsub.s32 %v1608, %v1610
        %v1612 = vrot.slane %v1605, %v1611
        %v1613 = vcombine.low %v1583, %v1599
        %v1615 = vunpack.c.l.s4 1983009808
        %v1616 = vunpack.c.0.s8 %v1615
        %v1617 = vlaneseq
        %v1618 = vshrl.u32 %v1617, 7
        %v1619 = vsub.s32 %v1616, %v1618
        %v1620 = vrot.slane %v1613, %v1619
        %v1621 = vcombine.low %v1612, %v1620
        %v1623 = vunpack.c.l.s4 1934713408
        %v1624 = vunpack.c.0.s8 %v1623
        %v1625 = vlaneseq
        %v1626 = vshrl.u32 %v1625, 7
        %v1627 = vsub.s32 %v1624, %v1626
        %v1628 = vrot.slane %v1621, %v1627
        %v1629 = vcombine.high %v1628, 0
        %v1630 = vcombine.low %v1579, %v1595
        %v1632 = vunpack.c.l.s4 1983009808
        %v1633 = vunpack.c.0.s8 %v1632
        %v1634 = vlaneseq
        %v1635 = vshrl.u32 %v1634, 7
        %v1636 = vsub.s32 %v1633, %v1635
        %v1637 = vrot.slane %v1630, %v1636
        %v1638 = vcombine.low %v1587, %v1603
        %v1640 = vunpack.c.l.s4 1983009808
        %v1641 = vunpack.c.0.s8 %v1640
        %v1642 = vlaneseq
        %v1643 = vshrl.u32 %v1642, 7
        %v1644 = vsub.s32 %v1641, %v1643
        %v1645 = vrot.slane %v1638, %v1644
        %v1646 = vcombine.low %v1637, %v1645
        %v1648 = vunpack.c.l.s4 1934713408
        %v1649 = vunpack.c.0.s8 %v1648
        %v1650 = vlaneseq
        %v1651 = vshrl.u32 %v1650, 7
        %v1652 = vsub.s32 %v1649, %v1651
        %v1653 = vrot.slane %v1646, %v1652
        %v1654 = vcombine.high %v1653, 0
        %v1657 = vpack.i.b16 %v1653, %v1628
        %v1658 = vshrl.u32 %v1628, 16
        %v1659 = vshrl.u32 %v1653, 16
        %v1660 = vpack.i.b16 %v1659, %v1658
        %v1663 = vpack.i.b16 %v1654, %v1629
        %v1664 = vshrl.u32 %v1629, 16
        %v1665 = vshrl.u32 %v1654, 16
        %v1666 = vpack.i.b16 %v1665, %v1664
        %vm1667 = vcmask 130048
        %v1669 = vsel %vm1667, %v1319, 0
        %v1672 = vsel %vm1667, %v1489, 0
        %1674 = vmatprep.subr.bf16.mxu0 0
        %1675 = vmatpush1.bf16.xpose.msra.mxu0 %v1672
        %1676 = vmatprep.subr.bf16.mxu0 0
        %1677 = vmatpush1.bf16.xpose.msra.mxu0 0
        %1678 = vmatprep.subr.bf16.mxu0 0
        %1679 = vmatpush1.bf16.xpose.msra.mxu0 0
        %1680 = vmatprep.subr.bf16.mxu0 0
        %1681 = vmatpush1.bf16.xpose.msra.mxu0 0
        %1682 = vmatprep.subr.bf16.mxu0 0
        %1683 = vmatpush1.bf16.xpose.msra.mxu0 0
        %1684 = vmatprep.subr.bf16.mxu0 0
        %1685 = vmatpush1.bf16.xpose.msra.mxu0 0
        %1686 = vmatprep.subr.bf16.mxu0 0
        %1687 = vmatpush1.bf16.xpose.msra.mxu0 0
        %1688 = vmatprep.subr.bf16.mxu0 0
        %1689 = vmatpush1.bf16.xpose.msra.mxu0 0
        %1690 = vmatprep.subr.bf16.mxu0 0
        %1691 = vmatpush1.bf16.xpose.msra.mxu0 0
        %1692 = vmatprep.subr.bf16.mxu0 0
        %1693 = vmatpush1.bf16.xpose.msra.mxu0 0
        %1694 = vmatprep.subr.bf16.mxu0 0
        %1695 = vmatpush1.bf16.xpose.msra.mxu0 0
        %1696 = vmatprep.subr.bf16.mxu0 0
        %1697 = vmatpush1.bf16.xpose.msra.mxu0 0
        %1698 = vmatprep.subr.bf16.mxu0 0
        %1699 = vmatpush1.bf16.xpose.msra.mxu0 0
        %1700 = vmatprep.subr.bf16.mxu0 0
        %1701 = vmatpush1.bf16.xpose.msra.mxu0 0
        %1702 = vmatprep.subr.bf16.mxu0 0
        %1703 = vmatpush1.bf16.xpose.msra.mxu0 0
        %1704 = vmatprep.subr.bf16.mxu0 0
        %1705 = vmatpush1.bf16.xpose.msra.mxu0 0
        %1706 = vmatprep.mubr.bf16.mxu0 0
        %1707 = vmatmul.mubr.bf16.gmra.mrb[0].mxu0 %v1669
        %v1708 = vpop.f32.mrb[0].mxu0
        %v1709 = vadd.f32 0.0, %v1708
        %v1710 = vpop.f32.mrb[0].mxu0
        %v1711 = vpop.f32.mrb[0].mxu0
        %v1712 = vpop.f32.mrb[0].mxu0
        %1713 = vdwg.mxu0
        %v1715 = vsel %vm1667, %v1322, 0
        %v1718 = vsel %vm1667, %v1492, 0
        %1720 = vmatprep.subr.bf16.mxu0 0
        %1721 = vmatpush1.bf16.xpose.msra.mxu0 %v1718
        %1722 = vmatprep.subr.bf16.mxu0 0
        %1723 = vmatpush1.bf16.xpose.msra.mxu0 0
        %1724 = vmatprep.subr.bf16.mxu0 0
        %1725 = vmatpush1.bf16.xpose.msra.mxu0 0
        %1726 = vmatprep.subr.bf16.mxu0 0
        %1727 = vmatpush1.bf16.xpose.msra.mxu0 0
        %1728 = vmatprep.subr.bf16.mxu0 0
        %1729 = vmatpush1.bf16.xpose.msra.mxu0 0
        %1730 = vmatprep.subr.bf16.mxu0 0
        %1731 = vmatpush1.bf16.xpose.msra.mxu0 0
        %1732 = vmatprep.subr.bf16.mxu0 0
        %1733 = vmatpush1.bf16.xpose.msra.mxu0 0
        %1734 = vmatprep.subr.bf16.mxu0 0
        %1735 = vmatpush1.bf16.xpose.msra.mxu0 0
        %1736 = vmatprep.subr.bf16.mxu0 0
        %1737 = vmatpush1.bf16.xpose.msra.mxu0 0
        %1738 = vmatprep.subr.bf16.mxu0 0
        %1739 = vmatpush1.bf16.xpose.msra.mxu0 0
        %1740 = vmatprep.subr.bf16.mxu0 0
        %1741 = vmatpush1.bf16.xpose.msra.mxu0 0
        %1742 = vmatprep.subr.bf16.mxu0 0
        %1743 = vmatpush1.bf16.xpose.msra.mxu0 0
        %1744 = vmatprep.subr.bf16.mxu0 0
        %1745 = vmatpush1.bf16.xpose.msra.mxu0 0
        %1746 = vmatprep.subr.bf16.mxu0 0
        %1747 = vmatpush1.bf16.xpose.msra.mxu0 0
        %1748 = vmatprep.subr.bf16.mxu0 0
        %1749 = vmatpush1.bf16.xpose.msra.mxu0 0
        %1750 = vmatprep.subr.bf16.mxu0 0
        %1751 = vmatpush1.bf16.xpose.msra.mxu0 0
        %1752 = vmatprep.mubr.bf16.mxu0 0
        %1753 = vmatmul.mubr.bf16.gmra.mrb[0].mxu0 %v1715
        %v1754 = vpop.f32.mrb[0].mxu0
        %v1755 = vadd.f32 0.0, %v1754
        %v1756 = vpop.f32.mrb[0].mxu0
        %v1757 = vpop.f32.mrb[0].mxu0
        %v1758 = vpop.f32.mrb[0].mxu0
        %1759 = vdwg.mxu0
        %v1761 = vsel %vm1667, %v1325, 0
        %v1764 = vsel %vm1667, %v1495, 0
        %1766 = vmatprep.subr.bf16.mxu0 0
        %1767 = vmatpush1.bf16.xpose.msra.mxu0 %v1764
        %1768 = vmatprep.subr.bf16.mxu0 0
        %1769 = vmatpush1.bf16.xpose.msra.mxu0 0
        %1770 = vmatprep.subr.bf16.mxu0 0
        %1771 = vmatpush1.bf16.xpose.msra.mxu0 0
        %1772 = vmatprep.subr.bf16.mxu0 0
        %1773 = vmatpush1.bf16.xpose.msra.mxu0 0
        %1774 = vmatprep.subr.bf16.mxu0 0
        %1775 = vmatpush1.bf16.xpose.msra.mxu0 0
        %1776 = vmatprep.subr.bf16.mxu0 0
        %1777 = vmatpush1.bf16.xpose.msra.mxu0 0
        %1778 = vmatprep.subr.bf16.mxu0 0
        %1779 = vmatpush1.bf16.xpose.msra.mxu0 0
        %1780 = vmatprep.subr.bf16.mxu0 0
        %1781 = vmatpush1.bf16.xpose.msra.mxu0 0
        %1782 = vmatprep.subr.bf16.mxu0 0
        %1783 = vmatpush1.bf16.xpose.msra.mxu0 0
        %1784 = vmatprep.subr.bf16.mxu0 0
        %1785 = vmatpush1.bf16.xpose.msra.mxu0 0
        %1786 = vmatprep.subr.bf16.mxu0 0
        %1787 = vmatpush1.bf16.xpose.msra.mxu0 0
        %1788 = vmatprep.subr.bf16.mxu0 0
        %1789 = vmatpush1.bf16.xpose.msra.mxu0 0
        %1790 = vmatprep.subr.bf16.mxu0 0
        %1791 = vmatpush1.bf16.xpose.msra.mxu0 0
        %1792 = vmatprep.subr.bf16.mxu0 0
        %1793 = vmatpush1.bf16.xpose.msra.mxu0 0
        %1794 = vmatprep.subr.bf16.mxu0 0
        %1795 = vmatpush1.bf16.xpose.msra.mxu0 0
        %1796 = vmatprep.subr.bf16.mxu0 0
        %1797 = vmatpush1.bf16.xpose.msra.mxu0 0
        %1798 = vmatprep.mubr.bf16.mxu0 0
        %1799 = vmatmul.mubr.bf16.gmra.mrb[0].mxu0 %v1761
        %v1800 = vpop.f32.mrb[0].mxu0
        %v1801 = vadd.f32 0.0, %v1800
        %v1802 = vpop.f32.mrb[0].mxu0
        %v1803 = vpop.f32.mrb[0].mxu0
        %v1804 = vpop.f32.mrb[0].mxu0
        %1805 = vdwg.mxu0
        %v1807 = vsel %vm1667, %v1328, 0
        %v1810 = vsel %vm1667, %v1498, 0
        %1812 = vmatprep.subr.bf16.mxu0 0
        %1813 = vmatpush1.bf16.xpose.msra.mxu0 %v1810
        %1814 = vmatprep.subr.bf16.mxu0 0
        %1815 = vmatpush1.bf16.xpose.msra.mxu0 0
        %1816 = vmatprep.subr.bf16.mxu0 0
        %1817 = vmatpush1.bf16.xpose.msra.mxu0 0
        %1818 = vmatprep.subr.bf16.mxu0 0
        %1819 = vmatpush1.bf16.xpose.msra.mxu0 0
        %1820 = vmatprep.subr.bf16.mxu0 0
        %1821 = vmatpush1.bf16.xpose.msra.mxu0 0
        %1822 = vmatprep.subr.bf16.mxu0 0
        %1823 = vmatpush1.bf16.xpose.msra.mxu0 0
        %1824 = vmatprep.subr.bf16.mxu0 0
        %1825 = vmatpush1.bf16.xpose.msra.mxu0 0
        %1826 = vmatprep.subr.bf16.mxu0 0
        %1827 = vmatpush1.bf16.xpose.msra.mxu0 0
        %1828 = vmatprep.subr.bf16.mxu0 0
        %1829 = vmatpush1.bf16.xpose.msra.mxu0 0
        %1830 = vmatprep.subr.bf16.mxu0 0
        %1831 = vmatpush1.bf16.xpose.msra.mxu0 0
        %1832 = vmatprep.subr.bf16.mxu0 0
        %1833 = vmatpush1.bf16.xpose.msra.mxu0 0
        %1834 = vmatprep.subr.bf16.mxu0 0
        %1835 = vmatpush1.bf16.xpose.msra.mxu0 0
        %1836 = vmatprep.subr.bf16.mxu0 0
        %1837 = vmatpush1.bf16.xpose.msra.mxu0 0
        %1838 = vmatprep.subr.bf16.mxu0 0
        %1839 = vmatpush1.bf16.xpose.msra.mxu0 0
        %1840 = vmatprep.subr.bf16.mxu0 0
        %1841 = vmatpush1.bf16.xpose.msra.mxu0 0
        %1842 = vmatprep.subr.bf16.mxu0 0
        %1843 = vmatpush1.bf16.xpose.msra.mxu0 0
        %1844 = vmatprep.mubr.bf16.mxu0 0
        %1845 = vmatmul.mubr.bf16.gmra.mrb[0].mxu0 %v1807
        %v1846 = vpop.f32.mrb[0].mxu0
        %v1847 = vadd.f32 0.0, %v1846
        %v1848 = vpop.f32.mrb[0].mxu0
        %v1849 = vpop.f32.mrb[0].mxu0
        %v1850 = vpop.f32.mrb[0].mxu0
        %1851 = vdwg.mxu0
        %v1852 = vmul.f32 %v1709, 0.25
        %v1853 = vmul.f32 %v1755, 0.25
        %v1854 = vmul.f32 %v1801, 0.25
        %v1855 = vmul.f32 %v1847, 0.25
        %v1856 = vadd.f32 %v1852, %v780
        %v1857 = vadd.f32 %v1853, %v780
        %v1858 = vadd.f32 %v1854, %v780
        %v1859 = vadd.f32 %v1855, %v780
        %vm1860 = vcmask 64512
        %v1861 = vsel %vm1860, %v1856, -inf
        %1862 = vmax.xlane.f32.xlu0 %v1861
        %v1863 = vpop.xlane.xlu0 %1862
        %v1864 = vsel %vm1860, %v1857, -inf
        %1865 = vmax.xlane.f32.xlu0 %v1864
        %v1866 = vpop.xlane.xlu0 %1865
        %v1867 = vsel %vm1860, %v1858, -inf
        %1868 = vmax.xlane.f32.xlu0 %v1867
        %v1869 = vpop.xlane.xlu0 %1868
        %v1870 = vsel %vm1860, %v1859, -inf
        %1871 = vmax.xlane.f32.xlu0 %v1870
        %v1872 = vpop.xlane.xlu0 %1871
        %v1873 = vsub.f32 %v1856, %v1863
        %v1874 = vsub.f32 %v1857, %v1866
        %v1875 = vsub.f32 %v1858, %v1869
        %v1876 = vsub.f32 %v1859, %v1872
        %v1877 = vmul.f32 %v1873, 1.442695
        %v1878 = vpow.pop %v1877
        %v1879 = vmul.f32 %v1874, 1.442695
        %v1880 = vpow.pop %v1879
        %v1881 = vmul.f32 %v1875, 1.442695
        %v1882 = vpow.pop %v1881
        %v1883 = vmul.f32 %v1876, 1.442695
        %v1884 = vpow.pop %v1883
        %v1885 = vsel %vm1860, %v1878, 0.0
        %1886 = vadd.xlane.f32.xlu0 %v1885
        %v1887 = vpop.xlane.xlu0 %1886
        %v1888 = vsel %vm1860, %v1880, 0.0
        %1889 = vadd.xlane.f32.xlu0 %v1888
        %v1890 = vpop.xlane.xlu0 %1889
        %v1891 = vsel %vm1860, %v1882, 0.0
        %1892 = vadd.xlane.f32.xlu0 %v1891
        %v1893 = vpop.xlane.xlu0 %1892
        %v1894 = vsel %vm1860, %v1884, 0.0
        %1895 = vadd.xlane.f32.xlu0 %v1894
        %v1896 = vpop.xlane.xlu0 %1895
        %v1897 = vrcp.pop %v1887
        %v1898 = vrcp.pop %v1890
        %v1899 = vrcp.pop %v1893
        %v1900 = vrcp.pop %v1896
        %v1901 = vmul.f32 %v1878, %v1897
        %v1902 = vmul.f32 %v1880, %v1898
        %v1903 = vmul.f32 %v1882, %v1899
        %v1904 = vmul.f32 %v1884, %v1900
        %v1905 = vpack.c.bf16 %v1901, %v1901
        %v1906 = vpack.c.bf16 %v1902, %v1902
        %v1907 = vpack.c.bf16 %v1903, %v1903
        %v1908 = vpack.c.bf16 %v1904, %v1904
        %v1910 = vsel %vm1860, %v1905, 0
        %vm1912 = vcmask 1043456
        %v1914 = vsel %vm1912, %v1657, 0
        %1916 = vmatprep.subr.bf16.mxu0 0
        %1917 = vmatpush1.bf16.msra.mxu0 %v1914
        %1918 = vmatprep.subr.bf16.mxu0 0
        %1919 = vmatpush1.bf16.msra.mxu0 0
        %1920 = vmatprep.subr.bf16.mxu0 0
        %1921 = vmatpush1.bf16.msra.mxu0 0
        %1922 = vmatprep.subr.bf16.mxu0 0
        %1923 = vmatpush1.bf16.msra.mxu0 0
        %1924 = vmatprep.subr.bf16.mxu0 0
        %1925 = vmatpush1.bf16.msra.mxu0 0
        %1926 = vmatprep.subr.bf16.mxu0 0
        %1927 = vmatpush1.bf16.msra.mxu0 0
        %1928 = vmatprep.subr.bf16.mxu0 0
        %1929 = vmatpush1.bf16.msra.mxu0 0
        %1930 = vmatprep.subr.bf16.mxu0 0
        %1931 = vmatpush1.bf16.msra.mxu0 0
        %1932 = vmatprep.subr.bf16.mxu0 0
        %1933 = vmatpush1.bf16.msra.mxu0 0
        %1934 = vmatprep.subr.bf16.mxu0 0
        %1935 = vmatpush1.bf16.msra.mxu0 0
        %1936 = vmatprep.subr.bf16.mxu0 0
        %1937 = vmatpush1.bf16.msra.mxu0 0
        %1938 = vmatprep.subr.bf16.mxu0 0
        %1939 = vmatpush1.bf16.msra.mxu0 0
        %1940 = vmatprep.subr.bf16.mxu0 0
        %1941 = vmatpush1.bf16.msra.mxu0 0
        %1942 = vmatprep.subr.bf16.mxu0 0
        %1943 = vmatpush1.bf16.msra.mxu0 0
        %1944 = vmatprep.subr.bf16.mxu0 0
        %1945 = vmatpush1.bf16.msra.mxu0 0
        %1946 = vmatprep.subr.bf16.mxu0 0
        %1947 = vmatpush1.bf16.msra.mxu0 0
        %1948 = vmatprep.mubr.bf16.mxu0 0
        %1949 = vmatmul.mubr.bf16.gmra.mrb[0].mxu0 %v1910
        %v1950 = vpop.f32.mrb[0].mxu0
        %v1951 = vadd.f32 0.0, %v1950
        %v1952 = vpop.f32.mrb[0].mxu0
        %v1953 = vpop.f32.mrb[0].mxu0
        %v1954 = vpop.f32.mrb[0].mxu0
        %1955 = vdwg.mxu0
        %v1957 = vsel %vm1860, %v1906, 0
        %v1960 = vsel %vm1912, %v1660, 0
        %1962 = vmatprep.subr.bf16.mxu0 0
        %1963 = vmatpush1.bf16.msra.mxu0 %v1960
        %1964 = vmatprep.subr.bf16.mxu0 0
        %1965 = vmatpush1.bf16.msra.mxu0 0
        %1966 = vmatprep.subr.bf16.mxu0 0
        %1967 = vmatpush1.bf16.msra.mxu0 0
        %1968 = vmatprep.subr.bf16.mxu0 0
        %1969 = vmatpush1.bf16.msra.mxu0 0
        %1970 = vmatprep.subr.bf16.mxu0 0
        %1971 = vmatpush1.bf16.msra.mxu0 0
        %1972 = vmatprep.subr.bf16.mxu0 0
        %1973 = vmatpush1.bf16.msra.mxu0 0
        %1974 = vmatprep.subr.bf16.mxu0 0
        %1975 = vmatpush1.bf16.msra.mxu0 0
        %1976 = vmatprep.subr.bf16.mxu0 0
        %1977 = vmatpush1.bf16.msra.mxu0 0
        %1978 = vmatprep.subr.bf16.mxu0 0
        %1979 = vmatpush1.bf16.msra.mxu0 0
        %1980 = vmatprep.subr.bf16.mxu0 0
        %1981 = vmatpush1.bf16.msra.mxu0 0
        %1982 = vmatprep.subr.bf16.mxu0 0
        %1983 = vmatpush1.bf16.msra.mxu0 0
        %1984 = vmatprep.subr.bf16.mxu0 0
        %1985 = vmatpush1.bf16.msra.mxu0 0
        %1986 = vmatprep.subr.bf16.mxu0 0
        %1987 = vmatpush1.bf16.msra.mxu0 0
        %1988 = vmatprep.subr.bf16.mxu0 0
        %1989 = vmatpush1.bf16.msra.mxu0 0
        %1990 = vmatprep.subr.bf16.mxu0 0
        %1991 = vmatpush1.bf16.msra.mxu0 0
        %1992 = vmatprep.subr.bf16.mxu0 0
        %1993 = vmatpush1.bf16.msra.mxu0 0
        %1994 = vmatprep.mubr.bf16.mxu0 0
        %1995 = vmatmul.mubr.bf16.gmra.mrb[0].mxu0 %v1957
        %v1996 = vpop.f32.mrb[0].mxu0
        %v1997 = vadd.f32 0.0, %v1996
        %v1998 = vpop.f32.mrb[0].mxu0
        %v1999 = vpop.f32.mrb[0].mxu0
        %v2000 = vpop.f32.mrb[0].mxu0
        %2001 = vdwg.mxu0
        %v2003 = vsel %vm1860, %v1907, 0
        %v2006 = vsel %vm1912, %v1663, 0
        %2008 = vmatprep.subr.bf16.mxu0 0
        %2009 = vmatpush1.bf16.msra.mxu0 %v2006
        %2010 = vmatprep.subr.bf16.mxu0 0
        %2011 = vmatpush1.bf16.msra.mxu0 0
        %2012 = vmatprep.subr.bf16.mxu0 0
        %2013 = vmatpush1.bf16.msra.mxu0 0
        %2014 = vmatprep.subr.bf16.mxu0 0
        %2015 = vmatpush1.bf16.msra.mxu0 0
        %2016 = vmatprep.subr.bf16.mxu0 0
        %2017 = vmatpush1.bf16.msra.mxu0 0
        %2018 = vmatprep.subr.bf16.mxu0 0
        %2019 = vmatpush1.bf16.msra.mxu0 0
        %2020 = vmatprep.subr.bf16.mxu0 0
        %2021 = vmatpush1.bf16.msra.mxu0 0
        %2022 = vmatprep.subr.bf16.mxu0 0
        %2023 = vmatpush1.bf16.msra.mxu0 0
        %2024 = vmatprep.subr.bf16.mxu0 0
        %2025 = vmatpush1.bf16.msra.mxu0 0
        %2026 = vmatprep.subr.bf16.mxu0 0
        %2027 = vmatpush1.bf16.msra.mxu0 0
        %2028 = vmatprep.subr.bf16.mxu0 0
        %2029 = vmatpush1.bf16.msra.mxu0 0
        %2030 = vmatprep.subr.bf16.mxu0 0
        %2031 = vmatpush1.bf16.msra.mxu0 0
        %2032 = vmatprep.subr.bf16.mxu0 0
        %2033 = vmatpush1.bf16.msra.mxu0 0
        %2034 = vmatprep.subr.bf16.mxu0 0
        %2035 = vmatpush1.bf16.msra.mxu0 0
        %2036 = vmatprep.subr.bf16.mxu0 0
        %2037 = vmatpush1.bf16.msra.mxu0 0
        %2038 = vmatprep.subr.bf16.mxu0 0
        %2039 = vmatpush1.bf16.msra.mxu0 0
        %2040 = vmatprep.mubr.bf16.mxu0 0
        %2041 = vmatmul.mubr.bf16.gmra.mrb[0].mxu0 %v2003
        %v2042 = vpop.f32.mrb[0].mxu0
        %v2043 = vadd.f32 0.0, %v2042
        %v2044 = vpop.f32.mrb[0].mxu0
        %v2045 = vpop.f32.mrb[0].mxu0
        %v2046 = vpop.f32.mrb[0].mxu0
        %2047 = vdwg.mxu0
        %v2049 = vsel %vm1860, %v1908, 0
        %v2052 = vsel %vm1912, %v1666, 0
        %2054 = vmatprep.subr.bf16.mxu0 0
        %2055 = vmatpush1.bf16.msra.mxu0 %v2052
        %2056 = vmatprep.subr.bf16.mxu0 0
        %2057 = vmatpush1.bf16.msra.mxu0 0
        %2058 = vmatprep.subr.bf16.mxu0 0
        %2059 = vmatpush1.bf16.msra.mxu0 0
        %2060 = vmatprep.subr.bf16.mxu0 0
        %2061 = vmatpush1.bf16.msra.mxu0 0
        %2062 = vmatprep.subr.bf16.mxu0 0
        %2063 = vmatpush1.bf16.msra.mxu0 0
        %2064 = vmatprep.subr.bf16.mxu0 0
        %2065 = vmatpush1.bf16.msra.mxu0 0
        %2066 = vmatprep.subr.bf16.mxu0 0
        %2067 = vmatpush1.bf16.msra.mxu0 0
        %2068 = vmatprep.subr.bf16.mxu0 0
        %2069 = vmatpush1.bf16.msra.mxu0 0
        %2070 = vmatprep.subr.bf16.mxu0 0
        %2071 = vmatpush1.bf16.msra.mxu0 0
        %2072 = vmatprep.subr.bf16.mxu0 0
        %2073 = vmatpush1.bf16.msra.mxu0 0
        %2074 = vmatprep.subr.bf16.mxu0 0
        %2075 = vmatpush1.bf16.msra.mxu0 0
        %2076 = vmatprep.subr.bf16.mxu0 0
        %2077 = vmatpush1.bf16.msra.mxu0 0
        %2078 = vmatprep.subr.bf16.mxu0 0
        %2079 = vmatpush1.bf16.msra.mxu0 0
        %2080 = vmatprep.subr.bf16.mxu0 0
        %2081 = vmatpush1.bf16.msra.mxu0 0
        %2082 = vmatprep.subr.bf16.mxu0 0
        %2083 = vmatpush1.bf16.msra.mxu0 0
        %2084 = vmatprep.subr.bf16.mxu0 0
        %2085 = vmatpush1.bf16.msra.mxu0 0
        %2086 = vmatprep.mubr.bf16.mxu0 0
        %2087 = vmatmul.mubr.bf16.gmra.mrb[0].mxu0 %v2049
        %v2088 = vpop.f32.mrb[0].mxu0
        %v2089 = vadd.f32 0.0, %v2088
        %v2090 = vpop.f32.mrb[0].mxu0
        %v2091 = vpop.f32.mrb[0].mxu0
        %v2092 = vpop.f32.mrb[0].mxu0
        %2093 = vdwg.mxu0
        %v2094 = vcombine.low %v1951, %v2043
        %v2095 = vcombine.high %v1951, %v2043
        %v2097 = vunpack.c.l.s4 1983009808
        %v2098 = vunpack.c.0.s8 %v2097
        %v2099 = vlaneseq
        %v2100 = vshrl.u32 %v2099, 7
        %v2101 = vsub.s32 %v2098, %v2100
        %v2102 = vrot.slane %v2094, %v2101
        %v2104 = vunpack.c.l.s4 1983009808
        %v2105 = vunpack.c.0.s8 %v2104
        %v2106 = vlaneseq
        %v2107 = vshrl.u32 %v2106, 7
        %v2108 = vsub.s32 %v2105, %v2107
        %v2109 = vrot.slane %v2095, %v2108
        %v2110 = vcombine.low %v1997, %v2089
        %v2111 = vcombine.high %v1997, %v2089
        %v2113 = vunpack.c.l.s4 1983009808
        %v2114 = vunpack.c.0.s8 %v2113
        %v2115 = vlaneseq
        %v2116 = vshrl.u32 %v2115, 7
        %v2117 = vsub.s32 %v2114, %v2116
        %v2118 = vrot.slane %v2110, %v2117
        %v2120 = vunpack.c.l.s4 1983009808
        %v2121 = vunpack.c.0.s8 %v2120
        %v2122 = vlaneseq
        %v2123 = vshrl.u32 %v2122, 7
        %v2124 = vsub.s32 %v2121, %v2123
        %v2125 = vrot.slane %v2111, %v2124
        %v2126 = vcombine.low %v2102, %v2118
        %v2127 = vcombine.high %v2102, %v2118
        %v2129 = vunpack.c.l.s4 1934713408
        %v2130 = vunpack.c.0.s8 %v2129
        %v2131 = vlaneseq
        %v2132 = vshrl.u32 %v2131, 7
        %v2133 = vsub.s32 %v2130, %v2132
        %v2134 = vrot.slane %v2126, %v2133
        %v2136 = vunpack.c.l.s4 1934713408
        %v2137 = vunpack.c.0.s8 %v2136
        %v2138 = vlaneseq
        %v2139 = vshrl.u32 %v2138, 7
        %v2140 = vsub.s32 %v2137, %v2139
        %v2141 = vrot.slane %v2127, %v2140
        %v2142 = vcombine.low %v2109, %v2125
        %v2143 = vcombine.high %v2109, %v2125
        %v2145 = vunpack.c.l.s4 1934713408
        %v2146 = vunpack.c.0.s8 %v2145
        %v2147 = vlaneseq
        %v2148 = vshrl.u32 %v2147, 7
        %v2149 = vsub.s32 %v2146, %v2148
        %v2150 = vrot.slane %v2142, %v2149
        %v2152 = vunpack.c.l.s4 1934713408
        %v2153 = vunpack.c.0.s8 %v2152
        %v2154 = vlaneseq
        %v2155 = vshrl.u32 %v2154, 7
        %v2156 = vsub.s32 %v2153, %v2155
        %v2157 = vrot.slane %v2143, %v2156
        %v2158 = vcombine.high %v2134, 0.0
        %v2159 = vcombine.high %v2141, 0.0
        %v2160 = vcombine.high %v2150, 0.0
        %v2161 = vcombine.high %v2157, 0.0
        %v2162 = vcombine.low %v2134, %v2141
        %v2164 = vunpack.c.l.s4 1983009808
        %v2165 = vunpack.c.0.s8 %v2164
        %v2166 = vlaneseq
        %v2167 = vshrl.u32 %v2166, 7
        %v2168 = vsub.s32 %v2165, %v2167
        %v2169 = vrot.slane %v2162, %v2168
        %v2170 = vcombine.low %v2158, %v2159
        %v2172 = vunpack.c.l.s4 1983009808
        %v2173 = vunpack.c.0.s8 %v2172
        %v2174 = vlaneseq
        %v2175 = vshrl.u32 %v2174, 7
        %v2176 = vsub.s32 %v2173, %v2175
        %v2177 = vrot.slane %v2170, %v2176
        %v2178 = vcombine.low %v2150, %v2157
        %v2180 = vunpack.c.l.s4 1983009808
        %v2181 = vunpack.c.0.s8 %v2180
        %v2182 = vlaneseq
        %v2183 = vshrl.u32 %v2182, 7
        %v2184 = vsub.s32 %v2181, %v2183
        %v2185 = vrot.slane %v2178, %v2184
        %v2186 = vcombine.low %v2160, %v2161
        %v2188 = vunpack.c.l.s4 1983009808
        %v2189 = vunpack.c.0.s8 %v2188
        %v2190 = vlaneseq
        %v2191 = vshrl.u32 %v2190, 7
        %v2192 = vsub.s32 %v2189, %v2191
        %v2193 = vrot.slane %v2186, %v2192
        %v2194 = vcombine.low %v2169, %v2177
        %v2195 = vcombine.high %v2169, %v2177
        %v2197 = vunpack.c.l.s4 1934713408
        %v2198 = vunpack.c.0.s8 %v2197
        %v2199 = vlaneseq
        %v2200 = vshrl.u32 %v2199, 7
        %v2201 = vsub.s32 %v2198, %v2200
        %v2202 = vrot.slane %v2194, %v2201
        %v2204 = vunpack.c.l.s4 1934713408
        %v2205 = vunpack.c.0.s8 %v2204
        %v2206 = vlaneseq
        %v2207 = vshrl.u32 %v2206, 7
        %v2208 = vsub.s32 %v2205, %v2207
        %v2209 = vrot.slane %v2195, %v2208
        %v2210 = vcombine.low %v2185, %v2193
        %v2211 = vcombine.high %v2185, %v2193
        %v2213 = vunpack.c.l.s4 1934713408
        %v2214 = vunpack.c.0.s8 %v2213
        %v2215 = vlaneseq
        %v2216 = vshrl.u32 %v2215, 7
        %v2217 = vsub.s32 %v2214, %v2216
        %v2218 = vrot.slane %v2210, %v2217
        %v2220 = vunpack.c.l.s4 1934713408
        %v2221 = vunpack.c.0.s8 %v2220
        %v2222 = vlaneseq
        %v2223 = vshrl.u32 %v2222, 7
        %v2224 = vsub.s32 %v2221, %v2223
        %v2225 = vrot.slane %v2211, %v2224
        %v2226 = vcombine.low %v2202, %v2218
        %v2227 = vcombine.high %v2202, %v2218
        %v2228 = vcombine.low %v2209, %v2225
        %v2229 = vcombine.high %v2209, %v2225
        %2231 = vrot.lane.b32.xlu0 %v2227, 16
        %v2232 = vpop.permute.xlu0 %2231
        %2235 = vrot.lane.b32.xlu0 %v2228, 32
        %v2236 = vpop.permute.xlu0 %2235
        %2239 = vrot.lane.b32.xlu0 %v2229, 48
        %v2240 = vpop.permute.xlu0 %2239
        %v2242 = vsel %vm1667, %v2226, %v2232
        %vm2243 = vcmask 261120
        %v2244 = vsel %vm2243, %v2242, %v2236
        %vm2245 = vcmask 392192
        %v2246 = vsel %vm2245, %v2244, %v2240
        %v2247 = vld [vmem:[%s13] sm:$0xf]
        %v2248 = vld [vmem:[%s13 + $0x4] sm:$0xf]
        %v2249 = vld [vmem:[%s13 + $0x8] sm:$0xf]
        %v2250 = vld [vmem:[%s13 + $0xc] sm:$0xf]
        %v2251 = vld [vmem:[%s13 + $0x10] sm:$0xf]
        %v2252 = vld [vmem:[%s13 + $0x14] sm:$0xf]
        %v2253 = vld [vmem:[%s13 + $0x18] sm:$0xf]
        %v2254 = vld [vmem:[%s13 + $0x1c] sm:$0xf]
        %v2255 = vpack.c.bf16 %v2246, %v2246
        %v2264 = vunpack.c.l.b16 %v2247
        %v2265 = vunpack.c.l.b16 %v2248
        %v2266 = vunpack.c.l.b16 %v2249
        %v2267 = vunpack.c.l.b16 %v2250
        %v2268 = vunpack.c.l.b16 %v2251
        %v2269 = vunpack.c.l.b16 %v2252
        %v2270 = vunpack.c.l.b16 %v2253
        %v2271 = vunpack.c.l.b16 %v2254
        %v2272 = vpack.c.b16 %v2265, %v2264
        %v2273 = vpack.c.b16 %v2267, %v2266
        %v2274 = vpack.c.b16 %v2269, %v2268
        %v2275 = vpack.c.b16 %v2271, %v2270
        %v2281 = vsel %vm786, %v2255, 0
        %2283 = vmatprep.subr.bf16.mxu0 0
        %2284 = vmatpush1.bf16.msra.mxu0 %v2272
        %2285 = vmatprep.subr.bf16.mxu0 0
        %2286 = vmatpush1.bf16.msra.mxu0 %v2273
        %2287 = vmatprep.subr.bf16.mxu0 0
        %2288 = vmatpush1.bf16.msra.mxu0 %v2274
        %2289 = vmatprep.subr.bf16.mxu0 0
        %2290 = vmatpush1.bf16.msra.mxu0 %v2275
        %2291 = vmatprep.subr.bf16.mxu0 0
        %2292 = vmatpush1.bf16.msra.mxu0 0
        %2293 = vmatprep.subr.bf16.mxu0 0
        %2294 = vmatpush1.bf16.msra.mxu0 0
        %2295 = vmatprep.subr.bf16.mxu0 0
        %2296 = vmatpush1.bf16.msra.mxu0 0
        %2297 = vmatprep.subr.bf16.mxu0 0
        %2298 = vmatpush1.bf16.msra.mxu0 0
        %2299 = vmatprep.subr.bf16.mxu0 0
        %2300 = vmatpush1.bf16.msra.mxu0 0
        %2301 = vmatprep.subr.bf16.mxu0 0
        %2302 = vmatpush1.bf16.msra.mxu0 0
        %2303 = vmatprep.subr.bf16.mxu0 0
        %2304 = vmatpush1.bf16.msra.mxu0 0
        %2305 = vmatprep.subr.bf16.mxu0 0
        %2306 = vmatpush1.bf16.msra.mxu0 0
        %2307 = vmatprep.subr.bf16.mxu0 0
        %2308 = vmatpush1.bf16.msra.mxu0 0
        %2309 = vmatprep.subr.bf16.mxu0 0
        %2310 = vmatpush1.bf16.msra.mxu0 0
        %2311 = vmatprep.subr.bf16.mxu0 0
        %2312 = vmatpush1.bf16.msra.mxu0 0
        %2313 = vmatprep.subr.bf16.mxu0 0
        %2314 = vmatpush1.bf16.msra.mxu0 0
        %2315 = vmatprep.mubr.bf16.mxu0 0
        %2316 = vmatmul.mubr.bf16.gmra.mrb[0].mxu0 %v2281
        %v2317 = vpop.f32.mrb[0].mxu0
        %v2318 = vadd.f32 0.0, %v2317
        %v2319 = vpop.f32.mrb[0].mxu0
        %v2320 = vpop.f32.mrb[0].mxu0
        %v2321 = vpop.f32.mrb[0].mxu0
        %2322 = vdwg.mxu0
        %v2323 = vadd.f32 %v1024, %v2318
        %v2324 = vld [vmem:[%s14] sm:$0x1]
        %v2326 = vlaneseq
        %v2327 = vshrl.u32 %v2326, 7
        %v2328 = vsub.s32 0, %v2327
        %v2329 = vrot.slane %v2324, %v2328
        %v2331 = vadd.f32 %v2323, %v2329
        %v2332 = vsel %vm786, %v2331, 0.0
        %2333 = vadd.xlane.f32.xlu0 %v2332
        %v2334 = vpop.xlane.xlu0 %2333
        %v2335 = vmul.f32 %v2334, %v985
        %v2336 = vsub.f32 %v2331, %v2335
        %v2337 = vmul.f32 %v2336, %v2336
        %v2338 = vsel %vm786, %v2337, 0.0
        %2339 = vadd.xlane.f32.xlu0 %v2338
        %v2340 = vpop.xlane.xlu0 %2339
        %v2341 = vmul.f32 %v2340, %v985
        %v2342 = vadd.f32 %v2341, 1e-05
        %v2343 = vrsqrt.pop %v2342
        %v2344 = vmul.f32 %v2336, %v2343
        %v2345 = vmul.f32 %v2344, %v1044
        %v2346 = vadd.f32 %v2345, %v1051
        %v2347 = vld [vmem:[%s15] sm:$0x1]
        %v2348 = vld [vmem:[%s16] sm:$0x1]
        %v2349 = vsel %vm786, %v2346, 0.0
        %2350 = vadd.xlane.f32.xlu0 %v2349
        %v2351 = vpop.xlane.xlu0 %2350
        %v2352 = vmul.f32 %v2351, %v985
        %v2353 = vsub.f32 %v2346, %v2352
        %v2354 = vmul.f32 %v2353, %v2353
        %v2355 = vsel %vm786, %v2354, 0.0
        %2356 = vadd.xlane.f32.xlu0 %v2355
        %v2357 = vpop.xlane.xlu0 %2356
        %v2358 = vmul.f32 %v2357, %v985
        %v2359 = vadd.f32 %v2358, 1e-05
        %v2360 = vrsqrt.pop %v2359
        %v2361 = vmul.f32 %v2353, %v2360
        %v2363 = vlaneseq
        %v2364 = vshrl.u32 %v2363, 7
        %v2365 = vsub.s32 0, %v2364
        %v2366 = vrot.slane %v2347, %v2365
        %v2368 = vmul.f32 %v2361, %v2366
        %v2370 = vlaneseq
        %v2371 = vshrl.u32 %v2370, 7
        %v2372 = vsub.s32 0, %v2371
        %v2373 = vrot.slane %v2348, %v2372
        %v2375 = vadd.f32 %v2368, %v2373
        %v2376 = vld [vmem:[%s17] sm:$0xf]
        %v2377 = vld [vmem:[%s17 + $0x4] sm:$0xf]
        %v2378 = vld [vmem:[%s17 + $0x8] sm:$0xf]
        %v2379 = vld [vmem:[%s17 + $0xc] sm:$0xf]
        %v2380 = vld [vmem:[%s17 + $0x10] sm:$0xf]
        %v2381 = vld [vmem:[%s17 + $0x14] sm:$0xf]
        %v2382 = vld [vmem:[%s17 + $0x18] sm:$0xf]
        %v2383 = vld [vmem:[%s17 + $0x1c] sm:$0xf]
        %v2384 = vpack.c.bf16 %v2375, %v2375
        %v2385 = vld [vmem:[%s18] sm:$0x1]
        %v2387 = vlaneseq
        %v2388 = vshrl.u32 %v2387, 7
        %v2389 = vsub.s32 0, %v2388
        %v2390 = vrot.slane %v2385, %v2389
        %v2400 = vunpack.c.l.b16 %v2376
        %v2401 = vunpack.c.l.b16 %v2377
        %v2402 = vunpack.c.l.b16 %v2378
        %v2403 = vunpack.c.l.b16 %v2379
        %v2404 = vunpack.c.l.b16 %v2380
        %v2405 = vunpack.c.l.b16 %v2381
        %v2406 = vunpack.c.l.b16 %v2382
        %v2407 = vunpack.c.l.b16 %v2383
        %v2408 = vpack.c.b16 %v2401, %v2400
        %v2409 = vpack.c.b16 %v2403, %v2402
        %v2410 = vpack.c.b16 %v2405, %v2404
        %v2411 = vpack.c.b16 %v2407, %v2406
        %v2417 = vsel %vm786, %v2384, 0
        %2419 = vmatprep.subr.bf16.mxu0 0
        %2420 = vmatpush1.bf16.msra.mxu0 %v2408
        %2421 = vmatprep.subr.bf16.mxu0 0
        %2422 = vmatpush1.bf16.msra.mxu0 %v2409
        %2423 = vmatprep.subr.bf16.mxu0 0
        %2424 = vmatpush1.bf16.msra.mxu0 %v2410
        %2425 = vmatprep.subr.bf16.mxu0 0
        %2426 = vmatpush1.bf16.msra.mxu0 %v2411
        %2427 = vmatprep.subr.bf16.mxu0 0
        %2428 = vmatpush1.bf16.msra.mxu0 0
        %2429 = vmatprep.subr.bf16.mxu0 0
        %2430 = vmatpush1.bf16.msra.mxu0 0
        %2431 = vmatprep.subr.bf16.mxu0 0
        %2432 = vmatpush1.bf16.msra.mxu0 0
        %2433 = vmatprep.subr.bf16.mxu0 0
        %2434 = vmatpush1.bf16.msra.mxu0 0
        %2435 = vmatprep.subr.bf16.mxu0 0
        %2436 = vmatpush1.bf16.msra.mxu0 0
        %2437 = vmatprep.subr.bf16.mxu0 0
        %2438 = vmatpush1.bf16.msra.mxu0 0
        %2439 = vmatprep.subr.bf16.mxu0 0
        %2440 = vmatpush1.bf16.msra.mxu0 0
        %2441 = vmatprep.subr.bf16.mxu0 0
        %2442 = vmatpush1.bf16.msra.mxu0 0
        %2443 = vmatprep.subr.bf16.mxu0 0
        %2444 = vmatpush1.bf16.msra.mxu0 0
        %2445 = vmatprep.subr.bf16.mxu0 0
        %2446 = vmatpush1.bf16.msra.mxu0 0
        %2447 = vmatprep.subr.bf16.mxu0 0
        %2448 = vmatpush1.bf16.msra.mxu0 0
        %2449 = vmatprep.subr.bf16.mxu0 0
        %2450 = vmatpush1.bf16.msra.mxu0 0
        %2451 = vmatprep.mubr.bf16.mxu0 0
        %2452 = vmatmul.mubr.bf16.gmra.mrb[0].mxu0 %v2417
        %v2453 = vpop.f32.mrb[0].mxu0
        %v2454 = vadd.f32 %v2390, %v2453
        %v2455 = vpop.f32.mrb[0].mxu0
        %v2456 = vpop.f32.mrb[0].mxu0
        %v2457 = vpop.f32.mrb[0].mxu0
        %2458 = vdwg.mxu0
        %v2459 = vmul.f32 %v2454, 0.5
        %v2460 = vmul.f32 %v2454, 0.70710677
        %vm2461 = vcmp.ge.f32.partialorder %v2460, 0.0
        %v2462 = vsel %vm2461, 1.0, -1.0
        %v2463 = vand.u32 2147483647, %v2460
        %v2464 = vmul.f32 %v2463, 0.3275911
        %v2465 = vadd.f32 %v2464, 1.0
        %v2466 = vrcp.pop %v2465
        %v2467 = vmul.f32 %v2466, 1.0614054
        %v2468 = vadd.f32 %v2467, -1.4531521
        %v2469 = vmul.f32 %v2468, %v2466
        %v2470 = vadd.f32 %v2469, 1.4214138
        %v2471 = vmul.f32 %v2470, %v2466
        %v2472 = vadd.f32 %v2471, -0.28449672
        %v2473 = vmul.f32 %v2472, %v2466
        %v2474 = vadd.f32 %v2473, 0.2548296
        %v2475 = vmul.f32 %v2474, %v2466
        %v2476 = vsub.f32 0.0, %v2463
        %v2477 = vmul.f32 %v2476, %v2463
        %v2478 = vmul.f32 %v2477, 1.442695
        %v2479 = vpow.pop %v2478
        %v2480 = vmul.f32 %v2475, %v2479
        %v2481 = vsub.f32 1.0, %v2480
        %v2482 = vmul.f32 %v2462, %v2481
        %v2483 = vadd.f32 %v2482, 1.0
        %v2484 = vmul.f32 %v2459, %v2483
        %v2485 = vld [vmem:[%s19] sm:$0xf]
        %v2486 = vld [vmem:[%s19 + $0x4] sm:$0xf]
        %v2487 = vld [vmem:[%s19 + $0x8] sm:$0xf]
        %v2488 = vld [vmem:[%s19 + $0xc] sm:$0xf]
        %v2489 = vld [vmem:[%s19 + $0x10] sm:$0xf]
        %v2490 = vld [vmem:[%s19 + $0x14] sm:$0xf]
        %v2491 = vld [vmem:[%s19 + $0x18] sm:$0xf]
        %v2492 = vld [vmem:[%s19 + $0x1c] sm:$0xf]
        %v2493 = vld [vmem:[%s19 + $0x20] sm:$0xf]
        %v2494 = vld [vmem:[%s19 + $0x24] sm:$0xf]
        %v2495 = vld [vmem:[%s19 + $0x28] sm:$0xf]
        %v2496 = vld [vmem:[%s19 + $0x2c] sm:$0xf]
        %v2497 = vld [vmem:[%s19 + $0x30] sm:$0xf]
        %v2498 = vld [vmem:[%s19 + $0x34] sm:$0xf]
        %v2499 = vld [vmem:[%s19 + $0x38] sm:$0xf]
        %v2500 = vld [vmem:[%s19 + $0x3c] sm:$0xf]
        %v2501 = vpack.c.bf16 %v2484, %v2484
        %v2502 = vld [vmem:[%s20] sm:$0x1]
        %v2504 = vlaneseq
        %v2505 = vshrl.u32 %v2504, 7
        %v2506 = vsub.s32 0, %v2505
        %v2507 = vrot.slane %v2502, %v2506
        %v2525 = vunpack.c.l.b16 %v2485
        %v2526 = vunpack.c.l.b16 %v2486
        %v2527 = vunpack.c.l.b16 %v2487
        %v2528 = vunpack.c.l.b16 %v2488
        %v2529 = vunpack.c.l.b16 %v2489
        %v2530 = vunpack.c.l.b16 %v2490
        %v2531 = vunpack.c.l.b16 %v2491
        %v2532 = vunpack.c.l.b16 %v2492
        %v2533 = vunpack.c.l.b16 %v2493
        %v2534 = vunpack.c.l.b16 %v2494
        %v2535 = vunpack.c.l.b16 %v2495
        %v2536 = vunpack.c.l.b16 %v2496
        %v2537 = vunpack.c.l.b16 %v2497
        %v2538 = vunpack.c.l.b16 %v2498
        %v2539 = vunpack.c.l.b16 %v2499
        %v2540 = vunpack.c.l.b16 %v2500
        %v2541 = vpack.c.b16 %v2526, %v2525
        %v2542 = vpack.c.b16 %v2528, %v2527
        %v2543 = vpack.c.b16 %v2530, %v2529
        %v2544 = vpack.c.b16 %v2532, %v2531
        %v2545 = vpack.c.b16 %v2534, %v2533
        %v2546 = vpack.c.b16 %v2536, %v2535
        %v2547 = vpack.c.b16 %v2538, %v2537
        %v2548 = vpack.c.b16 %v2540, %v2539
        %2557 = vmatprep.subr.bf16.mxu0 0
        %2558 = vmatpush1.bf16.msra.mxu0 %v2541
        %2559 = vmatprep.subr.bf16.mxu0 0
        %2560 = vmatpush1.bf16.msra.mxu0 %v2542
        %2561 = vmatprep.subr.bf16.mxu0 0
        %2562 = vmatpush1.bf16.msra.mxu0 %v2543
        %2563 = vmatprep.subr.bf16.mxu0 0
        %2564 = vmatpush1.bf16.msra.mxu0 %v2544
        %2565 = vmatprep.subr.bf16.mxu0 0
        %2566 = vmatpush1.bf16.msra.mxu0 %v2545
        %2567 = vmatprep.subr.bf16.mxu0 0
        %2568 = vmatpush1.bf16.msra.mxu0 %v2546
        %2569 = vmatprep.subr.bf16.mxu0 0
        %2570 = vmatpush1.bf16.msra.mxu0 %v2547
        %2571 = vmatprep.subr.bf16.mxu0 0
        %2572 = vmatpush1.bf16.msra.mxu0 %v2548
        %2573 = vmatprep.subr.bf16.mxu0 0
        %2574 = vmatpush1.bf16.msra.mxu0 0
        %2575 = vmatprep.subr.bf16.mxu0 0
        %2576 = vmatpush1.bf16.msra.mxu0 0
        %2577 = vmatprep.subr.bf16.mxu0 0
        %2578 = vmatpush1.bf16.msra.mxu0 0
        %2579 = vmatprep.subr.bf16.mxu0 0
        %2580 = vmatpush1.bf16.msra.mxu0 0
        %2581 = vmatprep.subr.bf16.mxu0 0
        %2582 = vmatpush1.bf16.msra.mxu0 0
        %2583 = vmatprep.subr.bf16.mxu0 0
        %2584 = vmatpush1.bf16.msra.mxu0 0
        %2585 = vmatprep.subr.bf16.mxu0 0
        %2586 = vmatpush1.bf16.msra.mxu0 0
        %2587 = vmatprep.subr.bf16.mxu0 0
        %2588 = vmatpush1.bf16.msra.mxu0 0
        %2589 = vmatprep.mubr.bf16.mxu0 0
        %2590 = vmatmul.mubr.bf16.gmra.mrb[0].mxu0 %v2501
        %v2591 = vpop.f32.mrb[0].mxu0
        %v2592 = vadd.f32 %v2507, %v2591
        %v2593 = vpop.f32.mrb[0].mxu0
        %v2594 = vpop.f32.mrb[0].mxu0
        %v2595 = vpop.f32.mrb[0].mxu0
        %2596 = vdwg.mxu0
        %v2597 = vadd.f32 %v2331, %v2592
        %v2598 = vsel %vm786, %v2597, 0.0
        %2599 = vadd.xlane.f32.xlu0 %v2598
        %v2600 = vpop.xlane.xlu0 %2599
        %v2601 = vmul.f32 %v2600, %v985
        %v2602 = vsub.f32 %v2597, %v2601
        %v2603 = vmul.f32 %v2602, %v2602
        %v2604 = vsel %vm786, %v2603, 0.0
        %2605 = vadd.xlane.f32.xlu0 %v2604
        %v2606 = vpop.xlane.xlu0 %2605
        %v2607 = vmul.f32 %v2606, %v985
        %v2608 = vadd.f32 %v2607, 1e-05
        %v2609 = vrsqrt.pop %v2608
        %v2610 = vmul.f32 %v2602, %v2609
        %v2611 = vmul.f32 %v2610, %v1044
        %v2612 = vadd.f32 %v2611, %v1051
        %s2613 = scalar_lea.vmem %s11, 64
        %v2614 = vld [vmem:[%s2613] sm:$0xff]
        %v2615 = vld [vmem:[%s2613 + $0x8] sm:$0xff]
        %v2616 = vld [vmem:[%s2613 + $0x10] sm:$0xff]
        %v2617 = vld [vmem:[%s2613 + $0x18] sm:$0xff]
        %v2618 = vld [vmem:[%s2613 + $0x20] sm:$0xff]
        %v2619 = vld [vmem:[%s2613 + $0x28] sm:$0xff]
        %v2620 = vld [vmem:[%s2613 + $0x30] sm:$0xff]
        %v2621 = vld [vmem:[%s2613 + $0x38] sm:$0xff]
        %v2622 = vpack.c.bf16 %v2612, %v2612
        %s2623 = scalar_lea.vmem %s12, 2
        %v2624 = vld [vmem:[%s2623] sm:$0x3]
        %v2626 = vlaneseq
        %v2627 = vshrl.u32 %v2626, 7
        %v2628 = vsub.s32 0, %v2627
        %v2629 = vrot.slane %v2624, %v2628
        %v2630 = vlaneseq
        %v2631 = vshrl.u32 %v2630, 7
        %v2632 = vsub.s32 1, %v2631
        %v2633 = vrot.slane %v2624, %v2632
        %v2644 = vunpack.c.l.b16 %v2614
        %v2645 = vunpack.c.h.b16 %v2614
        %v2646 = vunpack.c.l.b16 %v2615
        %v2647 = vunpack.c.h.b16 %v2615
        %v2648 = vunpack.c.l.b16 %v2616
        %v2649 = vunpack.c.h.b16 %v2616
        %v2650 = vunpack.c.l.b16 %v2617
        %v2651 = vunpack.c.h.b16 %v2617
        %v2652 = vunpack.c.l.b16 %v2618
        %v2653 = vunpack.c.h.b16 %v2618
        %v2654 = vunpack.c.l.b16 %v2619
        %v2655 = vunpack.c.h.b16 %v2619
        %v2656 = vunpack.c.l.b16 %v2620
        %v2657 = vunpack.c.h.b16 %v2620
        %v2658 = vunpack.c.l.b16 %v2621
        %v2659 = vunpack.c.h.b16 %v2621
        %v2660 = vpack.c.b16 %v2646, %v2644
        %v2661 = vpack.c.b16 %v2647, %v2645
        %v2662 = vpack.c.b16 %v2650, %v2648
        %v2663 = vpack.c.b16 %v2651, %v2649
        %v2664 = vpack.c.b16 %v2654, %v2652
        %v2665 = vpack.c.b16 %v2655, %v2653
        %v2666 = vpack.c.b16 %v2658, %v2656
        %v2667 = vpack.c.b16 %v2659, %v2657
        %v2677 = vsel %vm786, %v2622, 0
        %2679 = vmatprep.subr.bf16.mxu0 %v2661
        %2680 = vmatpush1.bf16.msra.mxu0 %v2660
        %2681 = vmatprep.subr.bf16.mxu0 %v2663
        %2682 = vmatpush1.bf16.msra.mxu0 %v2662
        %2683 = vmatprep.subr.bf16.mxu0 %v2665
        %2684 = vmatpush1.bf16.msra.mxu0 %v2664
        %2685 = vmatprep.subr.bf16.mxu0 %v2667
        %2686 = vmatpush1.bf16.msra.mxu0 %v2666
        %2687 = vmatprep.subr.bf16.mxu0 0
        %2688 = vmatpush1.bf16.msra.mxu0 0
        %2689 = vmatprep.subr.bf16.mxu0 0
        %2690 = vmatpush1.bf16.msra.mxu0 0
        %2691 = vmatprep.subr.bf16.mxu0 0
        %2692 = vmatpush1.bf16.msra.mxu0 0
        %2693 = vmatprep.subr.bf16.mxu0 0
        %2694 = vmatpush1.bf16.msra.mxu0 0
        %2695 = vmatprep.subr.bf16.mxu0 0
        %2696 = vmatpush1.bf16.msra.mxu0 0
        %2697 = vmatprep.subr.bf16.mxu0 0
        %2698 = vmatpush1.bf16.msra.mxu0 0
        %2699 = vmatprep.subr.bf16.mxu0 0
        %2700 = vmatpush1.bf16.msra.mxu0 0
        %2701 = vmatprep.subr.bf16.mxu0 0
        %2702 = vmatpush1.bf16.msra.mxu0 0
        %2703 = vmatprep.subr.bf16.mxu0 0
        %2704 = vmatpush1.bf16.msra.mxu0 0
        %2705 = vmatprep.subr.bf16.mxu0 0
        %2706 = vmatpush1.bf16.msra.mxu0 0
        %2707 = vmatprep.subr.bf16.mxu0 0
        %2708 = vmatpush1.bf16.msra.mxu0 0
        %2709 = vmatprep.subr.bf16.mxu0 0
        %2710 = vmatpush1.bf16.msra.mxu0 0
        %2711 = vmatprep.mubr.bf16.mxu0 0
        %2712 = vmatmul.mubr.bf16.gmra.mrb[0].mxu0 %v2677
        %v2713 = vpop.f32.mrb[0].mxu0
        %v2714 = vadd.f32 %v2629, %v2713
        %v2715 = vpop.f32.mrb[0].mxu0
        %v2716 = vadd.f32 %v2633, %v2715
        %v2717 = vpop.f32.mrb[0].mxu0
        %v2718 = vpop.f32.mrb[0].mxu0
        %2719 = vdwg.mxu0
        %v2720 = vpack.c.bf16 %v2714, %v2714
        %v2721 = vpack.c.bf16 %v2716, %v2716
        %2723 = vrot.lane.b32.xlu0 %v2720, 112
        %v2724 = vpop.permute.xlu0 %2723
        %2725 = vrot.lane.b32.xlu0 %v2720, 96
        %v2726 = vpop.permute.xlu0 %2725
        %2727 = vrot.lane.b32.xlu0 %v2720, 80
        %v2728 = vpop.permute.xlu0 %2727
        %v2730 = vunpack.c.l.s4 1983009808
        %v2731 = vunpack.c.0.s8 %v2730
        %v2732 = vlaneseq
        %v2733 = vshrl.u32 %v2732, 7
        %v2734 = vsub.s32 %v2731, %v2733
        %v2735 = vrot.slane %v2720, %v2734
        %v2738 = vunpack.c.l.s4 1983009808
        %v2739 = vunpack.c.0.s8 %v2738
        %v2740 = vlaneseq
        %v2741 = vshrl.u32 %v2740, 7
        %v2742 = vsub.s32 %v2739, %v2741
        %v2743 = vrot.slane %v2726, %v2742
        %v2744 = vcombine.low %v2735, %v2743
        %v2745 = vcombine.high %v2735, %v2743
        %v2747 = vunpack.c.l.s4 1934713408
        %v2748 = vunpack.c.0.s8 %v2747
        %v2749 = vlaneseq
        %v2750 = vshrl.u32 %v2749, 7
        %v2751 = vsub.s32 %v2748, %v2750
        %v2752 = vrot.slane %v2744, %v2751
        %v2754 = vunpack.c.l.s4 1934713408
        %v2755 = vunpack.c.0.s8 %v2754
        %v2756 = vlaneseq
        %v2757 = vshrl.u32 %v2756, 7
        %v2758 = vsub.s32 %v2755, %v2757
        %v2759 = vrot.slane %v2745, %v2758
        %v2760 = vcombine.high %v2752, 0
        %v2761 = vcombine.high %v2759, 0
        %v2764 = vunpack.c.l.s4 1983009808
        %v2765 = vunpack.c.0.s8 %v2764
        %v2766 = vlaneseq
        %v2767 = vshrl.u32 %v2766, 7
        %v2768 = vsub.s32 %v2765, %v2767
        %v2769 = vrot.slane %v2724, %v2768
        %v2772 = vunpack.c.l.s4 1983009808
        %v2773 = vunpack.c.0.s8 %v2772
        %v2774 = vlaneseq
        %v2775 = vshrl.u32 %v2774, 7
        %v2776 = vsub.s32 %v2773, %v2775
        %v2777 = vrot.slane %v2728, %v2776
        %v2778 = vcombine.low %v2769, %v2777
        %v2779 = vcombine.high %v2769, %v2777
        %v2781 = vunpack.c.l.s4 1934713408
        %v2782 = vunpack.c.0.s8 %v2781
        %v2783 = vlaneseq
        %v2784 = vshrl.u32 %v2783, 7
        %v2785 = vsub.s32 %v2782, %v2784
        %v2786 = vrot.slane %v2778, %v2785
        %v2788 = vunpack.c.l.s4 1934713408
        %v2789 = vunpack.c.0.s8 %v2788
        %v2790 = vlaneseq
        %v2791 = vshrl.u32 %v2790, 7
        %v2792 = vsub.s32 %v2789, %v2791
        %v2793 = vrot.slane %v2779, %v2792
        %v2794 = vcombine.high %v2786, 0
        %v2795 = vcombine.high %v2793, 0
        %v2798 = vpack.i.b16 %v2786, %v2752
        %v2800 = vshrl.u32 %v2752, 16
        %v2801 = vshrl.u32 %v2786, 16
        %v2802 = vpack.i.b16 %v2801, %v2800
        %v2806 = vpack.i.b16 %v2794, %v2760
        %v2808 = vshrl.u32 %v2760, 16
        %v2809 = vshrl.u32 %v2794, 16
        %v2810 = vpack.i.b16 %v2809, %v2808
        %v2814 = vpack.i.b16 %v2793, %v2759
        %v2816 = vshrl.u32 %v2759, 16
        %v2817 = vshrl.u32 %v2793, 16
        %v2818 = vpack.i.b16 %v2817, %v2816
        %v2822 = vpack.i.b16 %v2795, %v2761
        %v2824 = vshrl.u32 %v2761, 16
        %v2825 = vshrl.u32 %v2795, 16
        %v2826 = vpack.i.b16 %v2825, %v2824
        %v2828 = vcombine.low %v2798, %v2814
        %v2830 = vunpack.c.l.s4 1983009808
        %v2831 = vunpack.c.0.s8 %v2830
        %v2832 = vlaneseq
        %v2833 = vshrl.u32 %v2832, 7
        %v2834 = vsub.s32 %v2831, %v2833
        %v2835 = vrot.slane %v2828, %v2834
        %v2836 = vcombine.low %v2806, %v2822
        %v2838 = vunpack.c.l.s4 1983009808
        %v2839 = vunpack.c.0.s8 %v2838
        %v2840 = vlaneseq
        %v2841 = vshrl.u32 %v2840, 7
        %v2842 = vsub.s32 %v2839, %v2841
        %v2843 = vrot.slane %v2836, %v2842
        %v2844 = vcombine.low %v2835, %v2843
        %v2846 = vunpack.c.l.s4 1934713408
        %v2847 = vunpack.c.0.s8 %v2846
        %v2848 = vlaneseq
        %v2849 = vshrl.u32 %v2848, 7
        %v2850 = vsub.s32 %v2847, %v2849
        %v2851 = vrot.slane %v2844, %v2850
        %v2852 = vcombine.high %v2851, 0
        %v2853 = vcombine.low %v2802, %v2818
        %v2855 = vunpack.c.l.s4 1983009808
        %v2856 = vunpack.c.0.s8 %v2855
        %v2857 = vlaneseq
        %v2858 = vshrl.u32 %v2857, 7
        %v2859 = vsub.s32 %v2856, %v2858
        %v2860 = vrot.slane %v2853, %v2859
        %v2861 = vcombine.low %v2810, %v2826
        %v2863 = vunpack.c.l.s4 1983009808
        %v2864 = vunpack.c.0.s8 %v2863
        %v2865 = vlaneseq
        %v2866 = vshrl.u32 %v2865, 7
        %v2867 = vsub.s32 %v2864, %v2866
        %v2868 = vrot.slane %v2861, %v2867
        %v2869 = vcombine.low %v2860, %v2868
        %v2871 = vunpack.c.l.s4 1934713408
        %v2872 = vunpack.c.0.s8 %v2871
        %v2873 = vlaneseq
        %v2874 = vshrl.u32 %v2873, 7
        %v2875 = vsub.s32 %v2872, %v2874
        %v2876 = vrot.slane %v2869, %v2875
        %v2877 = vcombine.high %v2876, 0
        %v2880 = vpack.i.b16 %v2876, %v2851
        %v2881 = vshrl.u32 %v2851, 16
        %v2882 = vshrl.u32 %v2876, 16
        %v2883 = vpack.i.b16 %v2882, %v2881
        %v2886 = vpack.i.b16 %v2877, %v2852
        %v2887 = vshrl.u32 %v2852, 16
        %v2888 = vshrl.u32 %v2877, 16
        %v2889 = vpack.i.b16 %v2888, %v2887
        %2890 = vrot.lane.b32.xlu0 %v2720, 64
        %v2891 = vpop.permute.xlu0 %2890
        %2892 = vrot.lane.b32.xlu0 %v2724, 64
        %v2893 = vpop.permute.xlu0 %2892
        %2894 = vrot.lane.b32.xlu0 %v2726, 64
        %v2895 = vpop.permute.xlu0 %2894
        %2896 = vrot.lane.b32.xlu0 %v2728, 64
        %v2897 = vpop.permute.xlu0 %2896
        %v2900 = vunpack.c.l.s4 1983009808
        %v2901 = vunpack.c.0.s8 %v2900
        %v2902 = vlaneseq
        %v2903 = vshrl.u32 %v2902, 7
        %v2904 = vsub.s32 %v2901, %v2903
        %v2905 = vrot.slane %v2891, %v2904
        %v2908 = vunpack.c.l.s4 1983009808
        %v2909 = vunpack.c.0.s8 %v2908
        %v2910 = vlaneseq
        %v2911 = vshrl.u32 %v2910, 7
        %v2912 = vsub.s32 %v2909, %v2911
        %v2913 = vrot.slane %v2895, %v2912
        %v2914 = vcombine.low %v2905, %v2913
        %v2915 = vcombine.high %v2905, %v2913
        %v2917 = vunpack.c.l.s4 1934713408
        %v2918 = vunpack.c.0.s8 %v2917
        %v2919 = vlaneseq
        %v2920 = vshrl.u32 %v2919, 7
        %v2921 = vsub.s32 %v2918, %v2920
        %v2922 = vrot.slane %v2914, %v2921
        %v2924 = vunpack.c.l.s4 1934713408
        %v2925 = vunpack.c.0.s8 %v2924
        %v2926 = vlaneseq
        %v2927 = vshrl.u32 %v2926, 7
        %v2928 = vsub.s32 %v2925, %v2927
        %v2929 = vrot.slane %v2915, %v2928
        %v2930 = vcombine.high %v2922, 0
        %v2931 = vcombine.high %v2929, 0
        %v2934 = vunpack.c.l.s4 1983009808
        %v2935 = vunpack.c.0.s8 %v2934
        %v2936 = vlaneseq
        %v2937 = vshrl.u32 %v2936, 7
        %v2938 = vsub.s32 %v2935, %v2937
        %v2939 = vrot.slane %v2893, %v2938
        %v2942 = vunpack.c.l.s4 1983009808
        %v2943 = vunpack.c.0.s8 %v2942
        %v2944 = vlaneseq
        %v2945 = vshrl.u32 %v2944, 7
        %v2946 = vsub.s32 %v2943, %v2945
        %v2947 = vrot.slane %v2897, %v2946
        %v2948 = vcombine.low %v2939, %v2947
        %v2949 = vcombine.high %v2939, %v2947
        %v2951 = vunpack.c.l.s4 1934713408
        %v2952 = vunpack.c.0.s8 %v2951
        %v2953 = vlaneseq
        %v2954 = vshrl.u32 %v2953, 7
        %v2955 = vsub.s32 %v2952, %v2954
        %v2956 = vrot.slane %v2948, %v2955
        %v2958 = vunpack.c.l.s4 1934713408
        %v2959 = vunpack.c.0.s8 %v2958
        %v2960 = vlaneseq
        %v2961 = vshrl.u32 %v2960, 7
        %v2962 = vsub.s32 %v2959, %v2961
        %v2963 = vrot.slane %v2949, %v2962
        %v2964 = vcombine.high %v2956, 0
        %v2965 = vcombine.high %v2963, 0
        %v2968 = vpack.i.b16 %v2956, %v2922
        %v2970 = vshrl.u32 %v2922, 16
        %v2971 = vshrl.u32 %v2956, 16
        %v2972 = vpack.i.b16 %v2971, %v2970
        %v2976 = vpack.i.b16 %v2964, %v2930
        %v2978 = vshrl.u32 %v2930, 16
        %v2979 = vshrl.u32 %v2964, 16
        %v2980 = vpack.i.b16 %v2979, %v2978
        %v2984 = vpack.i.b16 %v2963, %v2929
        %v2986 = vshrl.u32 %v2929, 16
        %v2987 = vshrl.u32 %v2963, 16
        %v2988 = vpack.i.b16 %v2987, %v2986
        %v2992 = vpack.i.b16 %v2965, %v2931
        %v2994 = vshrl.u32 %v2931, 16
        %v2995 = vshrl.u32 %v2965, 16
        %v2996 = vpack.i.b16 %v2995, %v2994
        %v2998 = vcombine.low %v2968, %v2984
        %v3000 = vunpack.c.l.s4 1983009808
        %v3001 = vunpack.c.0.s8 %v3000
        %v3002 = vlaneseq
        %v3003 = vshrl.u32 %v3002, 7
        %v3004 = vsub.s32 %v3001, %v3003
        %v3005 = vrot.slane %v2998, %v3004
        %v3006 = vcombine.low %v2976, %v2992
        %v3008 = vunpack.c.l.s4 1983009808
        %v3009 = vunpack.c.0.s8 %v3008
        %v3010 = vlaneseq
        %v3011 = vshrl.u32 %v3010, 7
        %v3012 = vsub.s32 %v3009, %v3011
        %v3013 = vrot.slane %v3006, %v3012
        %v3014 = vcombine.low %v3005, %v3013
        %v3016 = vunpack.c.l.s4 1934713408
        %v3017 = vunpack.c.0.s8 %v3016
        %v3018 = vlaneseq
        %v3019 = vshrl.u32 %v3018, 7
        %v3020 = vsub.s32 %v3017, %v3019
        %v3021 = vrot.slane %v3014, %v3020
        %v3022 = vcombine.high %v3021, 0
        %v3023 = vcombine.low %v2972, %v2988
        %v3025 = vunpack.c.l.s4 1983009808
        %v3026 = vunpack.c.0.s8 %v3025
        %v3027 = vlaneseq
        %v3028 = vshrl.u32 %v3027, 7
        %v3029 = vsub.s32 %v3026, %v3028
        %v3030 = vrot.slane %v3023, %v3029
        %v3031 = vcombine.low %v2980, %v2996
        %v3033 = vunpack.c.l.s4 1983009808
        %v3034 = vunpack.c.0.s8 %v3033
        %v3035 = vlaneseq
        %v3036 = vshrl.u32 %v3035, 7
        %v3037 = vsub.s32 %v3034, %v3036
        %v3038 = vrot.slane %v3031, %v3037
        %v3039 = vcombine.low %v3030, %v3038
        %v3041 = vunpack.c.l.s4 1934713408
        %v3042 = vunpack.c.0.s8 %v3041
        %v3043 = vlaneseq
        %v3044 = vshrl.u32 %v3043, 7
        %v3045 = vsub.s32 %v3042, %v3044
        %v3046 = vrot.slane %v3039, %v3045
        %v3047 = vcombine.high %v3046, 0
        %v3050 = vpack.i.b16 %v3046, %v3021
        %v3051 = vshrl.u32 %v3021, 16
        %v3052 = vshrl.u32 %v3046, 16
        %v3053 = vpack.i.b16 %v3052, %v3051
        %v3056 = vpack.i.b16 %v3047, %v3022
        %v3057 = vshrl.u32 %v3022, 16
        %v3058 = vshrl.u32 %v3047, 16
        %v3059 = vpack.i.b16 %v3058, %v3057
        %3061 = vrot.lane.b32.xlu0 %v2721, 112
        %v3062 = vpop.permute.xlu0 %3061
        %3063 = vrot.lane.b32.xlu0 %v2721, 96
        %v3064 = vpop.permute.xlu0 %3063
        %3065 = vrot.lane.b32.xlu0 %v2721, 80
        %v3066 = vpop.permute.xlu0 %3065
        %v3068 = vunpack.c.l.s4 1983009808
        %v3069 = vunpack.c.0.s8 %v3068
        %v3070 = vlaneseq
        %v3071 = vshrl.u32 %v3070, 7
        %v3072 = vsub.s32 %v3069, %v3071
        %v3073 = vrot.slane %v2721, %v3072
        %v3076 = vunpack.c.l.s4 1983009808
        %v3077 = vunpack.c.0.s8 %v3076
        %v3078 = vlaneseq
        %v3079 = vshrl.u32 %v3078, 7
        %v3080 = vsub.s32 %v3077, %v3079
        %v3081 = vrot.slane %v3064, %v3080
        %v3082 = vcombine.low %v3073, %v3081
        %v3083 = vcombine.high %v3073, %v3081
        %v3085 = vunpack.c.l.s4 1934713408
        %v3086 = vunpack.c.0.s8 %v3085
        %v3087 = vlaneseq
        %v3088 = vshrl.u32 %v3087, 7
        %v3089 = vsub.s32 %v3086, %v3088
        %v3090 = vrot.slane %v3082, %v3089
        %v3092 = vunpack.c.l.s4 1934713408
        %v3093 = vunpack.c.0.s8 %v3092
        %v3094 = vlaneseq
        %v3095 = vshrl.u32 %v3094, 7
        %v3096 = vsub.s32 %v3093, %v3095
        %v3097 = vrot.slane %v3083, %v3096
        %v3098 = vcombine.high %v3090, 0
        %v3099 = vcombine.high %v3097, 0
        %v3102 = vunpack.c.l.s4 1983009808
        %v3103 = vunpack.c.0.s8 %v3102
        %v3104 = vlaneseq
        %v3105 = vshrl.u32 %v3104, 7
        %v3106 = vsub.s32 %v3103, %v3105
        %v3107 = vrot.slane %v3062, %v3106
        %v3110 = vunpack.c.l.s4 1983009808
        %v3111 = vunpack.c.0.s8 %v3110
        %v3112 = vlaneseq
        %v3113 = vshrl.u32 %v3112, 7
        %v3114 = vsub.s32 %v3111, %v3113
        %v3115 = vrot.slane %v3066, %v3114
        %v3116 = vcombine.low %v3107, %v3115
        %v3117 = vcombine.high %v3107, %v3115
        %v3119 = vunpack.c.l.s4 1934713408
        %v3120 = vunpack.c.0.s8 %v3119
        %v3121 = vlaneseq
        %v3122 = vshrl.u32 %v3121, 7
        %v3123 = vsub.s32 %v3120, %v3122
        %v3124 = vrot.slane %v3116, %v3123
        %v3126 = vunpack.c.l.s4 1934713408
        %v3127 = vunpack.c.0.s8 %v3126
        %v3128 = vlaneseq
        %v3129 = vshrl.u32 %v3128, 7
        %v3130 = vsub.s32 %v3127, %v3129
        %v3131 = vrot.slane %v3117, %v3130
        %v3132 = vcombine.high %v3124, 0
        %v3133 = vcombine.high %v3131, 0
        %v3136 = vpack.i.b16 %v3124, %v3090
        %v3138 = vshrl.u32 %v3090, 16
        %v3139 = vshrl.u32 %v3124, 16
        %v3140 = vpack.i.b16 %v3139, %v3138
        %v3144 = vpack.i.b16 %v3132, %v3098
        %v3146 = vshrl.u32 %v3098, 16
        %v3147 = vshrl.u32 %v3132, 16
        %v3148 = vpack.i.b16 %v3147, %v3146
        %v3152 = vpack.i.b16 %v3131, %v3097
        %v3154 = vshrl.u32 %v3097, 16
        %v3155 = vshrl.u32 %v3131, 16
        %v3156 = vpack.i.b16 %v3155, %v3154
        %v3160 = vpack.i.b16 %v3133, %v3099
        %v3162 = vshrl.u32 %v3099, 16
        %v3163 = vshrl.u32 %v3133, 16
        %v3164 = vpack.i.b16 %v3163, %v3162
        %v3166 = vcombine.low %v3136, %v3152
        %v3168 = vunpack.c.l.s4 1983009808
        %v3169 = vunpack.c.0.s8 %v3168
        %v3170 = vlaneseq
        %v3171 = vshrl.u32 %v3170, 7
        %v3172 = vsub.s32 %v3169, %v3171
        %v3173 = vrot.slane %v3166, %v3172
        %v3174 = vcombine.low %v3144, %v3160
        %v3176 = vunpack.c.l.s4 1983009808
        %v3177 = vunpack.c.0.s8 %v3176
        %v3178 = vlaneseq
        %v3179 = vshrl.u32 %v3178, 7
        %v3180 = vsub.s32 %v3177, %v3179
        %v3181 = vrot.slane %v3174, %v3180
        %v3182 = vcombine.low %v3173, %v3181
        %v3184 = vunpack.c.l.s4 1934713408
        %v3185 = vunpack.c.0.s8 %v3184
        %v3186 = vlaneseq
        %v3187 = vshrl.u32 %v3186, 7
        %v3188 = vsub.s32 %v3185, %v3187
        %v3189 = vrot.slane %v3182, %v3188
        %v3190 = vcombine.high %v3189, 0
        %v3191 = vcombine.low %v3140, %v3156
        %v3193 = vunpack.c.l.s4 1983009808
        %v3194 = vunpack.c.0.s8 %v3193
        %v3195 = vlaneseq
        %v3196 = vshrl.u32 %v3195, 7
        %v3197 = vsub.s32 %v3194, %v3196
        %v3198 = vrot.slane %v3191, %v3197
        %v3199 = vcombine.low %v3148, %v3164
        %v3201 = vunpack.c.l.s4 1983009808
        %v3202 = vunpack.c.0.s8 %v3201
        %v3203 = vlaneseq
        %v3204 = vshrl.u32 %v3203, 7
        %v3205 = vsub.s32 %v3202, %v3204
        %v3206 = vrot.slane %v3199, %v3205
        %v3207 = vcombine.low %v3198, %v3206
        %v3209 = vunpack.c.l.s4 1934713408
        %v3210 = vunpack.c.0.s8 %v3209
        %v3211 = vlaneseq
        %v3212 = vshrl.u32 %v3211, 7
        %v3213 = vsub.s32 %v3210, %v3212
        %v3214 = vrot.slane %v3207, %v3213
        %v3215 = vcombine.high %v3214, 0
        %v3218 = vpack.i.b16 %v3214, %v3189
        %v3219 = vshrl.u32 %v3189, 16
        %v3220 = vshrl.u32 %v3214, 16
        %v3221 = vpack.i.b16 %v3220, %v3219
        %v3224 = vpack.i.b16 %v3215, %v3190
        %v3225 = vshrl.u32 %v3190, 16
        %v3226 = vshrl.u32 %v3215, 16
        %v3227 = vpack.i.b16 %v3226, %v3225
        %v3229 = vsel %vm1667, %v2880, 0
        %v3232 = vsel %vm1667, %v3050, 0
        %3234 = vmatprep.subr.bf16.mxu0 0
        %3235 = vmatpush1.bf16.xpose.msra.mxu0 %v3232
        %3236 = vmatprep.subr.bf16.mxu0 0
        %3237 = vmatpush1.bf16.xpose.msra.mxu0 0
        %3238 = vmatprep.subr.bf16.mxu0 0
        %3239 = vmatpush1.bf16.xpose.msra.mxu0 0
        %3240 = vmatprep.subr.bf16.mxu0 0
        %3241 = vmatpush1.bf16.xpose.msra.mxu0 0
        %3242 = vmatprep.subr.bf16.mxu0 0
        %3243 = vmatpush1.bf16.xpose.msra.mxu0 0
        %3244 = vmatprep.subr.bf16.mxu0 0
        %3245 = vmatpush1.bf16.xpose.msra.mxu0 0
        %3246 = vmatprep.subr.bf16.mxu0 0
        %3247 = vmatpush1.bf16.xpose.msra.mxu0 0
        %3248 = vmatprep.subr.bf16.mxu0 0
        %3249 = vmatpush1.bf16.xpose.msra.mxu0 0
        %3250 = vmatprep.subr.bf16.mxu0 0
        %3251 = vmatpush1.bf16.xpose.msra.mxu0 0
        %3252 = vmatprep.subr.bf16.mxu0 0
        %3253 = vmatpush1.bf16.xpose.msra.mxu0 0
        %3254 = vmatprep.subr.bf16.mxu0 0
        %3255 = vmatpush1.bf16.xpose.msra.mxu0 0
        %3256 = vmatprep.subr.bf16.mxu0 0
        %3257 = vmatpush1.bf16.xpose.msra.mxu0 0
        %3258 = vmatprep.subr.bf16.mxu0 0
        %3259 = vmatpush1.bf16.xpose.msra.mxu0 0
        %3260 = vmatprep.subr.bf16.mxu0 0
        %3261 = vmatpush1.bf16.xpose.msra.mxu0 0
        %3262 = vmatprep.subr.bf16.mxu0 0
        %3263 = vmatpush1.bf16.xpose.msra.mxu0 0
        %3264 = vmatprep.subr.bf16.mxu0 0
        %3265 = vmatpush1.bf16.xpose.msra.mxu0 0
        %3266 = vmatprep.mubr.bf16.mxu0 0
        %3267 = vmatmul.mubr.bf16.gmra.mrb[0].mxu0 %v3229
        %v3268 = vpop.f32.mrb[0].mxu0
        %v3269 = vadd.f32 0.0, %v3268
        %v3270 = vpop.f32.mrb[0].mxu0
        %v3271 = vpop.f32.mrb[0].mxu0
        %v3272 = vpop.f32.mrb[0].mxu0
        %3273 = vdwg.mxu0
        %v3275 = vsel %vm1667, %v2883, 0
        %v3278 = vsel %vm1667, %v3053, 0
        %3280 = vmatprep.subr.bf16.mxu0 0
        %3281 = vmatpush1.bf16.xpose.msra.mxu0 %v3278
        %3282 = vmatprep.subr.bf16.mxu0 0
        %3283 = vmatpush1.bf16.xpose.msra.mxu0 0
        %3284 = vmatprep.subr.bf16.mxu0 0
        %3285 = vmatpush1.bf16.xpose.msra.mxu0 0
        %3286 = vmatprep.subr.bf16.mxu0 0
        %3287 = vmatpush1.bf16.xpose.msra.mxu0 0
        %3288 = vmatprep.subr.bf16.mxu0 0
        %3289 = vmatpush1.bf16.xpose.msra.mxu0 0
        %3290 = vmatprep.subr.bf16.mxu0 0
        %3291 = vmatpush1.bf16.xpose.msra.mxu0 0
        %3292 = vmatprep.subr.bf16.mxu0 0
        %3293 = vmatpush1.bf16.xpose.msra.mxu0 0
        %3294 = vmatprep.subr.bf16.mxu0 0
        %3295 = vmatpush1.bf16.xpose.msra.mxu0 0
        %3296 = vmatprep.subr.bf16.mxu0 0
        %3297 = vmatpush1.bf16.xpose.msra.mxu0 0
        %3298 = vmatprep.subr.bf16.mxu0 0
        %3299 = vmatpush1.bf16.xpose.msra.mxu0 0
        %3300 = vmatprep.subr.bf16.mxu0 0
        %3301 = vmatpush1.bf16.xpose.msra.mxu0 0
        %3302 = vmatprep.subr.bf16.mxu0 0
        %3303 = vmatpush1.bf16.xpose.msra.mxu0 0
        %3304 = vmatprep.subr.bf16.mxu0 0
        %3305 = vmatpush1.bf16.xpose.msra.mxu0 0
        %3306 = vmatprep.subr.bf16.mxu0 0
        %3307 = vmatpush1.bf16.xpose.msra.mxu0 0
        %3308 = vmatprep.subr.bf16.mxu0 0
        %3309 = vmatpush1.bf16.xpose.msra.mxu0 0
        %3310 = vmatprep.subr.bf16.mxu0 0
        %3311 = vmatpush1.bf16.xpose.msra.mxu0 0
        %3312 = vmatprep.mubr.bf16.mxu0 0
        %3313 = vmatmul.mubr.bf16.gmra.mrb[0].mxu0 %v3275
        %v3314 = vpop.f32.mrb[0].mxu0
        %v3315 = vadd.f32 0.0, %v3314
        %v3316 = vpop.f32.mrb[0].mxu0
        %v3317 = vpop.f32.mrb[0].mxu0
        %v3318 = vpop.f32.mrb[0].mxu0
        %3319 = vdwg.mxu0
        %v3321 = vsel %vm1667, %v2886, 0
        %v3324 = vsel %vm1667, %v3056, 0
        %3326 = vmatprep.subr.bf16.mxu0 0
        %3327 = vmatpush1.bf16.xpose.msra.mxu0 %v3324
        %3328 = vmatprep.subr.bf16.mxu0 0
        %3329 = vmatpush1.bf16.xpose.msra.mxu0 0
        %3330 = vmatprep.subr.bf16.mxu0 0
        %3331 = vmatpush1.bf16.xpose.msra.mxu0 0
        %3332 = vmatprep.subr.bf16.mxu0 0
        %3333 = vmatpush1.bf16.xpose.msra.mxu0 0
        %3334 = vmatprep.subr.bf16.mxu0 0
        %3335 = vmatpush1.bf16.xpose.msra.mxu0 0
        %3336 = vmatprep.subr.bf16.mxu0 0
        %3337 = vmatpush1.bf16.xpose.msra.mxu0 0
        %3338 = vmatprep.subr.bf16.mxu0 0
        %3339 = vmatpush1.bf16.xpose.msra.mxu0 0
        %3340 = vmatprep.subr.bf16.mxu0 0
        %3341 = vmatpush1.bf16.xpose.msra.mxu0 0
        %3342 = vmatprep.subr.bf16.mxu0 0
        %3343 = vmatpush1.bf16.xpose.msra.mxu0 0
        %3344 = vmatprep.subr.bf16.mxu0 0
        %3345 = vmatpush1.bf16.xpose.msra.mxu0 0
        %3346 = vmatprep.subr.bf16.mxu0 0
        %3347 = vmatpush1.bf16.xpose.msra.mxu0 0
        %3348 = vmatprep.subr.bf16.mxu0 0
        %3349 = vmatpush1.bf16.xpose.msra.mxu0 0
        %3350 = vmatprep.subr.bf16.mxu0 0
        %3351 = vmatpush1.bf16.xpose.msra.mxu0 0
        %3352 = vmatprep.subr.bf16.mxu0 0
        %3353 = vmatpush1.bf16.xpose.msra.mxu0 0
        %3354 = vmatprep.subr.bf16.mxu0 0
        %3355 = vmatpush1.bf16.xpose.msra.mxu0 0
        %3356 = vmatprep.subr.bf16.mxu0 0
        %3357 = vmatpush1.bf16.xpose.msra.mxu0 0
        %3358 = vmatprep.mubr.bf16.mxu0 0
        %3359 = vmatmul.mubr.bf16.gmra.mrb[0].mxu0 %v3321
        %v3360 = vpop.f32.mrb[0].mxu0
        %v3361 = vadd.f32 0.0, %v3360
        %v3362 = vpop.f32.mrb[0].mxu0
        %v3363 = vpop.f32.mrb[0].mxu0
        %v3364 = vpop.f32.mrb[0].mxu0
        %3365 = vdwg.mxu0
        %v3367 = vsel %vm1667, %v2889, 0
        %v3370 = vsel %vm1667, %v3059, 0
        %3372 = vmatprep.subr.bf16.mxu0 0
        %3373 = vmatpush1.bf16.xpose.msra.mxu0 %v3370
        %3374 = vmatprep.subr.bf16.mxu0 0
        %3375 = vmatpush1.bf16.xpose.msra.mxu0 0
        %3376 = vmatprep.subr.bf16.mxu0 0
        %3377 = vmatpush1.bf16.xpose.msra.mxu0 0
        %3378 = vmatprep.subr.bf16.mxu0 0
        %3379 = vmatpush1.bf16.xpose.msra.mxu0 0
        %3380 = vmatprep.subr.bf16.mxu0 0
        %3381 = vmatpush1.bf16.xpose.msra.mxu0 0
        %3382 = vmatprep.subr.bf16.mxu0 0
        %3383 = vmatpush1.bf16.xpose.msra.mxu0 0
        %3384 = vmatprep.subr.bf16.mxu0 0
        %3385 = vmatpush1.bf16.xpose.msra.mxu0 0
        %3386 = vmatprep.subr.bf16.mxu0 0
        %3387 = vmatpush1.bf16.xpose.msra.mxu0 0
        %3388 = vmatprep.subr.bf16.mxu0 0
        %3389 = vmatpush1.bf16.xpose.msra.mxu0 0
        %3390 = vmatprep.subr.bf16.mxu0 0
        %3391 = vmatpush1.bf16.xpose.msra.mxu0 0
        %3392 = vmatprep.subr.bf16.mxu0 0
        %3393 = vmatpush1.bf16.xpose.msra.mxu0 0
        %3394 = vmatprep.subr.bf16.mxu0 0
        %3395 = vmatpush1.bf16.xpose.msra.mxu0 0
        %3396 = vmatprep.subr.bf16.mxu0 0
        %3397 = vmatpush1.bf16.xpose.msra.mxu0 0
        %3398 = vmatprep.subr.bf16.mxu0 0
        %3399 = vmatpush1.bf16.xpose.msra.mxu0 0
        %3400 = vmatprep.subr.bf16.mxu0 0
        %3401 = vmatpush1.bf16.xpose.msra.mxu0 0
        %3402 = vmatprep.subr.bf16.mxu0 0
        %3403 = vmatpush1.bf16.xpose.msra.mxu0 0
        %3404 = vmatprep.mubr.bf16.mxu0 0
        %3405 = vmatmul.mubr.bf16.gmra.mrb[0].mxu0 %v3367
        %v3406 = vpop.f32.mrb[0].mxu0
        %v3407 = vadd.f32 0.0, %v3406
        %v3408 = vpop.f32.mrb[0].mxu0
        %v3409 = vpop.f32.mrb[0].mxu0
        %v3410 = vpop.f32.mrb[0].mxu0
        %3411 = vdwg.mxu0
        %v3412 = vmul.f32 %v3269, 0.25
        %v3413 = vmul.f32 %v3315, 0.25
        %v3414 = vmul.f32 %v3361, 0.25
        %v3415 = vmul.f32 %v3407, 0.25
        %v3416 = vadd.f32 %v3412, %v780
        %v3417 = vadd.f32 %v3413, %v780
        %v3418 = vadd.f32 %v3414, %v780
        %v3419 = vadd.f32 %v3415, %v780
        %v3420 = vsel %vm1860, %v3416, -inf
        %3421 = vmax.xlane.f32.xlu0 %v3420
        %v3422 = vpop.xlane.xlu0 %3421
        %v3423 = vsel %vm1860, %v3417, -inf
        %3424 = vmax.xlane.f32.xlu0 %v3423
        %v3425 = vpop.xlane.xlu0 %3424
        %v3426 = vsel %vm1860, %v3418, -inf
        %3427 = vmax.xlane.f32.xlu0 %v3426
        %v3428 = vpop.xlane.xlu0 %3427
        %v3429 = vsel %vm1860, %v3419, -inf
        %3430 = vmax.xlane.f32.xlu0 %v3429
        %v3431 = vpop.xlane.xlu0 %3430
        %v3432 = vsub.f32 %v3416, %v3422
        %v3433 = vsub.f32 %v3417, %v3425
        %v3434 = vsub.f32 %v3418, %v3428
        %v3435 = vsub.f32 %v3419, %v3431
        %v3436 = vmul.f32 %v3432, 1.442695
        %v3437 = vpow.pop %v3436
        %v3438 = vmul.f32 %v3433, 1.442695
        %v3439 = vpow.pop %v3438
        %v3440 = vmul.f32 %v3434, 1.442695
        %v3441 = vpow.pop %v3440
        %v3442 = vmul.f32 %v3435, 1.442695
        %v3443 = vpow.pop %v3442
        %v3444 = vsel %vm1860, %v3437, 0.0
        %3445 = vadd.xlane.f32.xlu0 %v3444
        %v3446 = vpop.xlane.xlu0 %3445
        %v3447 = vsel %vm1860, %v3439, 0.0
        %3448 = vadd.xlane.f32.xlu0 %v3447
        %v3449 = vpop.xlane.xlu0 %3448
        %v3450 = vsel %vm1860, %v3441, 0.0
        %3451 = vadd.xlane.f32.xlu0 %v3450
        %v3452 = vpop.xlane.xlu0 %3451
        %v3453 = vsel %vm1860, %v3443, 0.0
        %3454 = vadd.xlane.f32.xlu0 %v3453
        %v3455 = vpop.xlane.xlu0 %3454
        %v3456 = vrcp.pop %v3446
        %v3457 = vrcp.pop %v3449
        %v3458 = vrcp.pop %v3452
        %v3459 = vrcp.pop %v3455
        %v3460 = vmul.f32 %v3437, %v3456
        %v3461 = vmul.f32 %v3439, %v3457
        %v3462 = vmul.f32 %v3441, %v3458
        %v3463 = vmul.f32 %v3443, %v3459
        %v3464 = vpack.c.bf16 %v3460, %v3460
        %v3465 = vpack.c.bf16 %v3461, %v3461
        %v3466 = vpack.c.bf16 %v3462, %v3462
        %v3467 = vpack.c.bf16 %v3463, %v3463
        %v3469 = vsel %vm1860, %v3464, 0
        %v3472 = vsel %vm1912, %v3218, 0
        %3474 = vmatprep.subr.bf16.mxu0 0
        %3475 = vmatpush1.bf16.msra.mxu0 %v3472
        %3476 = vmatprep.subr.bf16.mxu0 0
        %3477 = vmatpush1.bf16.msra.mxu0 0
        %3478 = vmatprep.subr.bf16.mxu0 0
        %3479 = vmatpush1.bf16.msra.mxu0 0
        %3480 = vmatprep.subr.bf16.mxu0 0
        %3481 = vmatpush1.bf16.msra.mxu0 0
        %3482 = vmatprep.subr.bf16.mxu0 0
        %3483 = vmatpush1.bf16.msra.mxu0 0
        %3484 = vmatprep.subr.bf16.mxu0 0
        %3485 = vmatpush1.bf16.msra.mxu0 0
        %3486 = vmatprep.subr.bf16.mxu0 0
        %3487 = vmatpush1.bf16.msra.mxu0 0
        %3488 = vmatprep.subr.bf16.mxu0 0
        %3489 = vmatpush1.bf16.msra.mxu0 0
        %3490 = vmatprep.subr.bf16.mxu0 0
        %3491 = vmatpush1.bf16.msra.mxu0 0
        %3492 = vmatprep.subr.bf16.mxu0 0
        %3493 = vmatpush1.bf16.msra.mxu0 0
        %3494 = vmatprep.subr.bf16.mxu0 0
        %3495 = vmatpush1.bf16.msra.mxu0 0
        %3496 = vmatprep.subr.bf16.mxu0 0
        %3497 = vmatpush1.bf16.msra.mxu0 0
        %3498 = vmatprep.subr.bf16.mxu0 0
        %3499 = vmatpush1.bf16.msra.mxu0 0
        %3500 = vmatprep.subr.bf16.mxu0 0
        %3501 = vmatpush1.bf16.msra.mxu0 0
        %3502 = vmatprep.subr.bf16.mxu0 0
        %3503 = vmatpush1.bf16.msra.mxu0 0
        %3504 = vmatprep.subr.bf16.mxu0 0
        %3505 = vmatpush1.bf16.msra.mxu0 0
        %3506 = vmatprep.mubr.bf16.mxu0 0
        %3507 = vmatmul.mubr.bf16.gmra.mrb[0].mxu0 %v3469
        %v3508 = vpop.f32.mrb[0].mxu0
        %v3509 = vadd.f32 0.0, %v3508
        %v3510 = vpop.f32.mrb[0].mxu0
        %v3511 = vpop.f32.mrb[0].mxu0
        %v3512 = vpop.f32.mrb[0].mxu0
        %3513 = vdwg.mxu0
        %v3515 = vsel %vm1860, %v3465, 0
        %v3518 = vsel %vm1912, %v3221, 0
        %3520 = vmatprep.subr.bf16.mxu0 0
        %3521 = vmatpush1.bf16.msra.mxu0 %v3518
        %3522 = vmatprep.subr.bf16.mxu0 0
        %3523 = vmatpush1.bf16.msra.mxu0 0
        %3524 = vmatprep.subr.bf16.mxu0 0
        %3525 = vmatpush1.bf16.msra.mxu0 0
        %3526 = vmatprep.subr.bf16.mxu0 0
        %3527 = vmatpush1.bf16.msra.mxu0 0
        %3528 = vmatprep.subr.bf16.mxu0 0
        %3529 = vmatpush1.bf16.msra.mxu0 0
        %3530 = vmatprep.subr.bf16.mxu0 0
        %3531 = vmatpush1.bf16.msra.mxu0 0
        %3532 = vmatprep.subr.bf16.mxu0 0
        %3533 = vmatpush1.bf16.msra.mxu0 0
        %3534 = vmatprep.subr.bf16.mxu0 0
        %3535 = vmatpush1.bf16.msra.mxu0 0
        %3536 = vmatprep.subr.bf16.mxu0 0
        %3537 = vmatpush1.bf16.msra.mxu0 0
        %3538 = vmatprep.subr.bf16.mxu0 0
        %3539 = vmatpush1.bf16.msra.mxu0 0
        %3540 = vmatprep.subr.bf16.mxu0 0
        %3541 = vmatpush1.bf16.msra.mxu0 0
        %3542 = vmatprep.subr.bf16.mxu0 0
        %3543 = vmatpush1.bf16.msra.mxu0 0
        %3544 = vmatprep.subr.bf16.mxu0 0
        %3545 = vmatpush1.bf16.msra.mxu0 0
        %3546 = vmatprep.subr.bf16.mxu0 0
        %3547 = vmatpush1.bf16.msra.mxu0 0
        %3548 = vmatprep.subr.bf16.mxu0 0
        %3549 = vmatpush1.bf16.msra.mxu0 0
        %3550 = vmatprep.subr.bf16.mxu0 0
        %3551 = vmatpush1.bf16.msra.mxu0 0
        %3552 = vmatprep.mubr.bf16.mxu0 0
        %3553 = vmatmul.mubr.bf16.gmra.mrb[0].mxu0 %v3515
        %v3554 = vpop.f32.mrb[0].mxu0
        %v3555 = vadd.f32 0.0, %v3554
        %v3556 = vpop.f32.mrb[0].mxu0
        %v3557 = vpop.f32.mrb[0].mxu0
        %v3558 = vpop.f32.mrb[0].mxu0
        %3559 = vdwg.mxu0
        %v3561 = vsel %vm1860, %v3466, 0
        %v3564 = vsel %vm1912, %v3224, 0
        %3566 = vmatprep.subr.bf16.mxu0 0
        %3567 = vmatpush1.bf16.msra.mxu0 %v3564
        %3568 = vmatprep.subr.bf16.mxu0 0
        %3569 = vmatpush1.bf16.msra.mxu0 0
        %3570 = vmatprep.subr.bf16.mxu0 0
        %3571 = vmatpush1.bf16.msra.mxu0 0
        %3572 = vmatprep.subr.bf16.mxu0 0
        %3573 = vmatpush1.bf16.msra.mxu0 0
        %3574 = vmatprep.subr.bf16.mxu0 0
        %3575 = vmatpush1.bf16.msra.mxu0 0
        %3576 = vmatprep.subr.bf16.mxu0 0
        %3577 = vmatpush1.bf16.msra.mxu0 0
        %3578 = vmatprep.subr.bf16.mxu0 0
        %3579 = vmatpush1.bf16.msra.mxu0 0
        %3580 = vmatprep.subr.bf16.mxu0 0
        %3581 = vmatpush1.bf16.msra.mxu0 0
        %3582 = vmatprep.subr.bf16.mxu0 0
        %3583 = vmatpush1.bf16.msra.mxu0 0
        %3584 = vmatprep.subr.bf16.mxu0 0
        %3585 = vmatpush1.bf16.msra.mxu0 0
        %3586 = vmatprep.subr.bf16.mxu0 0
        %3587 = vmatpush1.bf16.msra.mxu0 0
        %3588 = vmatprep.subr.bf16.mxu0 0
        %3589 = vmatpush1.bf16.msra.mxu0 0
        %3590 = vmatprep.subr.bf16.mxu0 0
        %3591 = vmatpush1.bf16.msra.mxu0 0
        %3592 = vmatprep.subr.bf16.mxu0 0
        %3593 = vmatpush1.bf16.msra.mxu0 0
        %3594 = vmatprep.subr.bf16.mxu0 0
        %3595 = vmatpush1.bf16.msra.mxu0 0
        %3596 = vmatprep.subr.bf16.mxu0 0
        %3597 = vmatpush1.bf16.msra.mxu0 0
        %3598 = vmatprep.mubr.bf16.mxu0 0
        %3599 = vmatmul.mubr.bf16.gmra.mrb[0].mxu0 %v3561
        %v3600 = vpop.f32.mrb[0].mxu0
        %v3601 = vadd.f32 0.0, %v3600
        %v3602 = vpop.f32.mrb[0].mxu0
        %v3603 = vpop.f32.mrb[0].mxu0
        %v3604 = vpop.f32.mrb[0].mxu0
        %3605 = vdwg.mxu0
        %v3607 = vsel %vm1860, %v3467, 0
        %v3610 = vsel %vm1912, %v3227, 0
        %3612 = vmatprep.subr.bf16.mxu0 0
        %3613 = vmatpush1.bf16.msra.mxu0 %v3610
        %3614 = vmatprep.subr.bf16.mxu0 0
        %3615 = vmatpush1.bf16.msra.mxu0 0
        %3616 = vmatprep.subr.bf16.mxu0 0
        %3617 = vmatpush1.bf16.msra.mxu0 0
        %3618 = vmatprep.subr.bf16.mxu0 0
        %3619 = vmatpush1.bf16.msra.mxu0 0
        %3620 = vmatprep.subr.bf16.mxu0 0
        %3621 = vmatpush1.bf16.msra.mxu0 0
        %3622 = vmatprep.subr.bf16.mxu0 0
        %3623 = vmatpush1.bf16.msra.mxu0 0
        %3624 = vmatprep.subr.bf16.mxu0 0
        %3625 = vmatpush1.bf16.msra.mxu0 0
        %3626 = vmatprep.subr.bf16.mxu0 0
        %3627 = vmatpush1.bf16.msra.mxu0 0
        %3628 = vmatprep.subr.bf16.mxu0 0
        %3629 = vmatpush1.bf16.msra.mxu0 0
        %3630 = vmatprep.subr.bf16.mxu0 0
        %3631 = vmatpush1.bf16.msra.mxu0 0
        %3632 = vmatprep.subr.bf16.mxu0 0
        %3633 = vmatpush1.bf16.msra.mxu0 0
        %3634 = vmatprep.subr.bf16.mxu0 0
        %3635 = vmatpush1.bf16.msra.mxu0 0
        %3636 = vmatprep.subr.bf16.mxu0 0
        %3637 = vmatpush1.bf16.msra.mxu0 0
        %3638 = vmatprep.subr.bf16.mxu0 0
        %3639 = vmatpush1.bf16.msra.mxu0 0
        %3640 = vmatprep.subr.bf16.mxu0 0
        %3641 = vmatpush1.bf16.msra.mxu0 0
        %3642 = vmatprep.subr.bf16.mxu0 0
        %3643 = vmatpush1.bf16.msra.mxu0 0
        %3644 = vmatprep.mubr.bf16.mxu0 0
        %3645 = vmatmul.mubr.bf16.gmra.mrb[0].mxu0 %v3607
        %v3646 = vpop.f32.mrb[0].mxu0
        %v3647 = vadd.f32 0.0, %v3646
        %v3648 = vpop.f32.mrb[0].mxu0
        %v3649 = vpop.f32.mrb[0].mxu0
        %v3650 = vpop.f32.mrb[0].mxu0
        %3651 = vdwg.mxu0
        %v3652 = vcombine.low %v3509, %v3601
        %v3653 = vcombine.high %v3509, %v3601
        %v3655 = vunpack.c.l.s4 1983009808
        %v3656 = vunpack.c.0.s8 %v3655
        %v3657 = vlaneseq
        %v3658 = vshrl.u32 %v3657, 7
        %v3659 = vsub.s32 %v3656, %v3658
        %v3660 = vrot.slane %v3652, %v3659
        %v3662 = vunpack.c.l.s4 1983009808
        %v3663 = vunpack.c.0.s8 %v3662
        %v3664 = vlaneseq
        %v3665 = vshrl.u32 %v3664, 7
        %v3666 = vsub.s32 %v3663, %v3665
        %v3667 = vrot.slane %v3653, %v3666
        %v3668 = vcombine.low %v3555, %v3647
        %v3669 = vcombine.high %v3555, %v3647
        %v3671 = vunpack.c.l.s4 1983009808
        %v3672 = vunpack.c.0.s8 %v3671
        %v3673 = vlaneseq
        %v3674 = vshrl.u32 %v3673, 7
        %v3675 = vsub.s32 %v3672, %v3674
        %v3676 = vrot.slane %v3668, %v3675
        %v3678 = vunpack.c.l.s4 1983009808
        %v3679 = vunpack.c.0.s8 %v3678
        %v3680 = vlaneseq
        %v3681 = vshrl.u32 %v3680, 7
        %v3682 = vsub.s32 %v3679, %v3681
        %v3683 = vrot.slane %v3669, %v3682
        %v3684 = vcombine.low %v3660, %v3676
        %v3685 = vcombine.high %v3660, %v3676
        %v3687 = vunpack.c.l.s4 1934713408
        %v3688 = vunpack.c.0.s8 %v3687
        %v3689 = vlaneseq
        %v3690 = vshrl.u32 %v3689, 7
        %v3691 = vsub.s32 %v3688, %v3690
        %v3692 = vrot.slane %v3684, %v3691
        %v3694 = vunpack.c.l.s4 1934713408
        %v3695 = vunpack.c.0.s8 %v3694
        %v3696 = vlaneseq
        %v3697 = vshrl.u32 %v3696, 7
        %v3698 = vsub.s32 %v3695, %v3697
        %v3699 = vrot.slane %v3685, %v3698
        %v3700 = vcombine.low %v3667, %v3683
        %v3701 = vcombine.high %v3667, %v3683
        %v3703 = vunpack.c.l.s4 1934713408
        %v3704 = vunpack.c.0.s8 %v3703
        %v3705 = vlaneseq
        %v3706 = vshrl.u32 %v3705, 7
        %v3707 = vsub.s32 %v3704, %v3706
        %v3708 = vrot.slane %v3700, %v3707
        %v3710 = vunpack.c.l.s4 1934713408
        %v3711 = vunpack.c.0.s8 %v3710
        %v3712 = vlaneseq
        %v3713 = vshrl.u32 %v3712, 7
        %v3714 = vsub.s32 %v3711, %v3713
        %v3715 = vrot.slane %v3701, %v3714
        %v3716 = vcombine.high %v3692, 0.0
        %v3717 = vcombine.high %v3699, 0.0
        %v3718 = vcombine.high %v3708, 0.0
        %v3719 = vcombine.high %v3715, 0.0
        %v3720 = vcombine.low %v3692, %v3699
        %v3722 = vunpack.c.l.s4 1983009808
        %v3723 = vunpack.c.0.s8 %v3722
        %v3724 = vlaneseq
        %v3725 = vshrl.u32 %v3724, 7
        %v3726 = vsub.s32 %v3723, %v3725
        %v3727 = vrot.slane %v3720, %v3726
        %v3728 = vcombine.low %v3716, %v3717
        %v3730 = vunpack.c.l.s4 1983009808
        %v3731 = vunpack.c.0.s8 %v3730
        %v3732 = vlaneseq
        %v3733 = vshrl.u32 %v3732, 7
        %v3734 = vsub.s32 %v3731, %v3733
        %v3735 = vrot.slane %v3728, %v3734
        %v3736 = vcombine.low %v3708, %v3715
        %v3738 = vunpack.c.l.s4 1983009808
        %v3739 = vunpack.c.0.s8 %v3738
        %v3740 = vlaneseq
        %v3741 = vshrl.u32 %v3740, 7
        %v3742 = vsub.s32 %v3739, %v3741
        %v3743 = vrot.slane %v3736, %v3742
        %v3744 = vcombine.low %v3718, %v3719
        %v3746 = vunpack.c.l.s4 1983009808
        %v3747 = vunpack.c.0.s8 %v3746
        %v3748 = vlaneseq
        %v3749 = vshrl.u32 %v3748, 7
        %v3750 = vsub.s32 %v3747, %v3749
        %v3751 = vrot.slane %v3744, %v3750
        %v3752 = vcombine.low %v3727, %v3735
        %v3753 = vcombine.high %v3727, %v3735
        %v3755 = vunpack.c.l.s4 1934713408
        %v3756 = vunpack.c.0.s8 %v3755
        %v3757 = vlaneseq
        %v3758 = vshrl.u32 %v3757, 7
        %v3759 = vsub.s32 %v3756, %v3758
        %v3760 = vrot.slane %v3752, %v3759
        %v3762 = vunpack.c.l.s4 1934713408
        %v3763 = vunpack.c.0.s8 %v3762
        %v3764 = vlaneseq
        %v3765 = vshrl.u32 %v3764, 7
        %v3766 = vsub.s32 %v3763, %v3765
        %v3767 = vrot.slane %v3753, %v3766
        %v3768 = vcombine.low %v3743, %v3751
        %v3769 = vcombine.high %v3743, %v3751
        %v3771 = vunpack.c.l.s4 1934713408
        %v3772 = vunpack.c.0.s8 %v3771
        %v3773 = vlaneseq
        %v3774 = vshrl.u32 %v3773, 7
        %v3775 = vsub.s32 %v3772, %v3774
        %v3776 = vrot.slane %v3768, %v3775
        %v3778 = vunpack.c.l.s4 1934713408
        %v3779 = vunpack.c.0.s8 %v3778
        %v3780 = vlaneseq
        %v3781 = vshrl.u32 %v3780, 7
        %v3782 = vsub.s32 %v3779, %v3781
        %v3783 = vrot.slane %v3769, %v3782
        %v3784 = vcombine.low %v3760, %v3776
        %v3785 = vcombine.high %v3760, %v3776
        %v3786 = vcombine.low %v3767, %v3783
        %v3787 = vcombine.high %v3767, %v3783
        %3789 = vrot.lane.b32.xlu0 %v3785, 16
        %v3790 = vpop.permute.xlu0 %3789
        %3793 = vrot.lane.b32.xlu0 %v3786, 32
        %v3794 = vpop.permute.xlu0 %3793
        %3797 = vrot.lane.b32.xlu0 %v3787, 48
        %v3798 = vpop.permute.xlu0 %3797
        %v3800 = vsel %vm1667, %v3784, %v3790
        %v3801 = vsel %vm2243, %v3800, %v3794
        %v3802 = vsel %vm2245, %v3801, %v3798
        %s3803 = scalar_lea.vmem %s13, 32
        %v3804 = vld [vmem:[%s3803] sm:$0xf]
        %v3805 = vld [vmem:[%s3803 + $0x4] sm:$0xf]
        %v3806 = vld [vmem:[%s3803 + $0x8] sm:$0xf]
        %v3807 = vld [vmem:[%s3803 + $0xc] sm:$0xf]
        %v3808 = vld [vmem:[%s3803 + $0x10] sm:$0xf]
        %v3809 = vld [vmem:[%s3803 + $0x14] sm:$0xf]
        %v3810 = vld [vmem:[%s3803 + $0x18] sm:$0xf]
        %v3811 = vld [vmem:[%s3803 + $0x1c] sm:$0xf]
        %v3812 = vpack.c.bf16 %v3802, %v3802
        %v3821 = vunpack.c.l.b16 %v3804
        %v3822 = vunpack.c.l.b16 %v3805
        %v3823 = vunpack.c.l.b16 %v3806
        %v3824 = vunpack.c.l.b16 %v3807
        %v3825 = vunpack.c.l.b16 %v3808
        %v3826 = vunpack.c.l.b16 %v3809
        %v3827 = vunpack.c.l.b16 %v3810
        %v3828 = vunpack.c.l.b16 %v3811
        %v3829 = vpack.c.b16 %v3822, %v3821
        %v3830 = vpack.c.b16 %v3824, %v3823
        %v3831 = vpack.c.b16 %v3826, %v3825
        %v3832 = vpack.c.b16 %v3828, %v3827
        %v3838 = vsel %vm786, %v3812, 0
        %3840 = vmatprep.subr.bf16.mxu0 0
        %3841 = vmatpush1.bf16.msra.mxu0 %v3829
        %3842 = vmatprep.subr.bf16.mxu0 0
        %3843 = vmatpush1.bf16.msra.mxu0 %v3830
        %3844 = vmatprep.subr.bf16.mxu0 0
        %3845 = vmatpush1.bf16.msra.mxu0 %v3831
        %3846 = vmatprep.subr.bf16.mxu0 0
        %3847 = vmatpush1.bf16.msra.mxu0 %v3832
        %3848 = vmatprep.subr.bf16.mxu0 0
        %3849 = vmatpush1.bf16.msra.mxu0 0
        %3850 = vmatprep.subr.bf16.mxu0 0
        %3851 = vmatpush1.bf16.msra.mxu0 0
        %3852 = vmatprep.subr.bf16.mxu0 0
        %3853 = vmatpush1.bf16.msra.mxu0 0
        %3854 = vmatprep.subr.bf16.mxu0 0
        %3855 = vmatpush1.bf16.msra.mxu0 0
        %3856 = vmatprep.subr.bf16.mxu0 0
        %3857 = vmatpush1.bf16.msra.mxu0 0
        %3858 = vmatprep.subr.bf16.mxu0 0
        %3859 = vmatpush1.bf16.msra.mxu0 0
        %3860 = vmatprep.subr.bf16.mxu0 0
        %3861 = vmatpush1.bf16.msra.mxu0 0
        %3862 = vmatprep.subr.bf16.mxu0 0
        %3863 = vmatpush1.bf16.msra.mxu0 0
        %3864 = vmatprep.subr.bf16.mxu0 0
        %3865 = vmatpush1.bf16.msra.mxu0 0
        %3866 = vmatprep.subr.bf16.mxu0 0
        %3867 = vmatpush1.bf16.msra.mxu0 0
        %3868 = vmatprep.subr.bf16.mxu0 0
        %3869 = vmatpush1.bf16.msra.mxu0 0
        %3870 = vmatprep.subr.bf16.mxu0 0
        %3871 = vmatpush1.bf16.msra.mxu0 0
        %3872 = vmatprep.mubr.bf16.mxu0 0
        %3873 = vmatmul.mubr.bf16.gmra.mrb[0].mxu0 %v3838
        %v3874 = vpop.f32.mrb[0].mxu0
        %v3875 = vadd.f32 0.0, %v3874
        %v3876 = vpop.f32.mrb[0].mxu0
        %v3877 = vpop.f32.mrb[0].mxu0
        %v3878 = vpop.f32.mrb[0].mxu0
        %3879 = vdwg.mxu0
        %v3880 = vadd.f32 %v2597, %v3875
        %s3881 = scalar_lea.vmem %s14, 1
        %v3882 = vld [vmem:[%s3881] sm:$0x1]
        %v3884 = vlaneseq
        %v3885 = vshrl.u32 %v3884, 7
        %v3886 = vsub.s32 0, %v3885
        %v3887 = vrot.slane %v3882, %v3886
        %v3889 = vadd.f32 %v3880, %v3887
        %v3890 = vsel %vm786, %v3889, 0.0
        %3891 = vadd.xlane.f32.xlu0 %v3890
        %v3892 = vpop.xlane.xlu0 %3891
        %v3893 = vmul.f32 %v3892, %v985
        %v3894 = vsub.f32 %v3889, %v3893
        %v3895 = vmul.f32 %v3894, %v3894
        %v3896 = vsel %vm786, %v3895, 0.0
        %3897 = vadd.xlane.f32.xlu0 %v3896
        %v3898 = vpop.xlane.xlu0 %3897
        %v3899 = vmul.f32 %v3898, %v985
        %v3900 = vadd.f32 %v3899, 1e-05
        %v3901 = vrsqrt.pop %v3900
        %v3902 = vmul.f32 %v3894, %v3901
        %v3903 = vmul.f32 %v3902, %v1044
        %v3904 = vadd.f32 %v3903, %v1051
        %s3905 = scalar_lea.vmem %s15, 1
        %v3906 = vld [vmem:[%s3905] sm:$0x1]
        %s3907 = scalar_lea.vmem %s16, 1
        %v3908 = vld [vmem:[%s3907] sm:$0x1]
        %v3909 = vsel %vm786, %v3904, 0.0
        %3910 = vadd.xlane.f32.xlu0 %v3909
        %v3911 = vpop.xlane.xlu0 %3910
        %v3912 = vmul.f32 %v3911, %v985
        %v3913 = vsub.f32 %v3904, %v3912
        %v3914 = vmul.f32 %v3913, %v3913
        %v3915 = vsel %vm786, %v3914, 0.0
        %3916 = vadd.xlane.f32.xlu0 %v3915
        %v3917 = vpop.xlane.xlu0 %3916
        %v3918 = vmul.f32 %v3917, %v985
        %v3919 = vadd.f32 %v3918, 1e-05
        %v3920 = vrsqrt.pop %v3919
        %v3921 = vmul.f32 %v3913, %v3920
        %v3923 = vlaneseq
        %v3924 = vshrl.u32 %v3923, 7
        %v3925 = vsub.s32 0, %v3924
        %v3926 = vrot.slane %v3906, %v3925
        %v3928 = vmul.f32 %v3921, %v3926
        %v3930 = vlaneseq
        %v3931 = vshrl.u32 %v3930, 7
        %v3932 = vsub.s32 0, %v3931
        %v3933 = vrot.slane %v3908, %v3932
        %v3935 = vadd.f32 %v3928, %v3933
        %s3936 = scalar_lea.vmem %s17, 32
        %v3937 = vld [vmem:[%s3936] sm:$0xf]
        %v3938 = vld [vmem:[%s3936 + $0x4] sm:$0xf]
        %v3939 = vld [vmem:[%s3936 + $0x8] sm:$0xf]
        %v3940 = vld [vmem:[%s3936 + $0xc] sm:$0xf]
        %v3941 = vld [vmem:[%s3936 + $0x10] sm:$0xf]
        %v3942 = vld [vmem:[%s3936 + $0x14] sm:$0xf]
        %v3943 = vld [vmem:[%s3936 + $0x18] sm:$0xf]
        %v3944 = vld [vmem:[%s3936 + $0x1c] sm:$0xf]
        %v3945 = vpack.c.bf16 %v3935, %v3935
        %s3946 = scalar_lea.vmem %s18, 1
        %v3947 = vld [vmem:[%s3946] sm:$0x1]
        %v3949 = vlaneseq
        %v3950 = vshrl.u32 %v3949, 7
        %v3951 = vsub.s32 0, %v3950
        %v3952 = vrot.slane %v3947, %v3951
        %v3962 = vunpack.c.l.b16 %v3937
        %v3963 = vunpack.c.l.b16 %v3938
        %v3964 = vunpack.c.l.b16 %v3939
        %v3965 = vunpack.c.l.b16 %v3940
        %v3966 = vunpack.c.l.b16 %v3941
        %v3967 = vunpack.c.l.b16 %v3942
        %v3968 = vunpack.c.l.b16 %v3943
        %v3969 = vunpack.c.l.b16 %v3944
        %v3970 = vpack.c.b16 %v3963, %v3962
        %v3971 = vpack.c.b16 %v3965, %v3964
        %v3972 = vpack.c.b16 %v3967, %v3966
        %v3973 = vpack.c.b16 %v3969, %v3968
        %v3979 = vsel %vm786, %v3945, 0
        %3981 = vmatprep.subr.bf16.mxu0 0
        %3982 = vmatpush1.bf16.msra.mxu0 %v3970
        %3983 = vmatprep.subr.bf16.mxu0 0
        %3984 = vmatpush1.bf16.msra.mxu0 %v3971
        %3985 = vmatprep.subr.bf16.mxu0 0
        %3986 = vmatpush1.bf16.msra.mxu0 %v3972
        %3987 = vmatprep.subr.bf16.mxu0 0
        %3988 = vmatpush1.bf16.msra.mxu0 %v3973
        %3989 = vmatprep.subr.bf16.mxu0 0
        %3990 = vmatpush1.bf16.msra.mxu0 0
        %3991 = vmatprep.subr.bf16.mxu0 0
        %3992 = vmatpush1.bf16.msra.mxu0 0
        %3993 = vmatprep.subr.bf16.mxu0 0
        %3994 = vmatpush1.bf16.msra.mxu0 0
        %3995 = vmatprep.subr.bf16.mxu0 0
        %3996 = vmatpush1.bf16.msra.mxu0 0
        %3997 = vmatprep.subr.bf16.mxu0 0
        %3998 = vmatpush1.bf16.msra.mxu0 0
        %3999 = vmatprep.subr.bf16.mxu0 0
        %4000 = vmatpush1.bf16.msra.mxu0 0
        %4001 = vmatprep.subr.bf16.mxu0 0
        %4002 = vmatpush1.bf16.msra.mxu0 0
        %4003 = vmatprep.subr.bf16.mxu0 0
        %4004 = vmatpush1.bf16.msra.mxu0 0
        %4005 = vmatprep.subr.bf16.mxu0 0
        %4006 = vmatpush1.bf16.msra.mxu0 0
        %4007 = vmatprep.subr.bf16.mxu0 0
        %4008 = vmatpush1.bf16.msra.mxu0 0
        %4009 = vmatprep.subr.bf16.mxu0 0
        %4010 = vmatpush1.bf16.msra.mxu0 0
        %4011 = vmatprep.subr.bf16.mxu0 0
        %4012 = vmatpush1.bf16.msra.mxu0 0
        %4013 = vmatprep.mubr.bf16.mxu0 0
        %4014 = vmatmul.mubr.bf16.gmra.mrb[0].mxu0 %v3979
        %v4015 = vpop.f32.mrb[0].mxu0
        %v4016 = vadd.f32 %v3952, %v4015
        %v4017 = vpop.f32.mrb[0].mxu0
        %v4018 = vpop.f32.mrb[0].mxu0
        %v4019 = vpop.f32.mrb[0].mxu0
        %4020 = vdwg.mxu0
        %v4021 = vmul.f32 %v4016, 0.5
        %v4022 = vmul.f32 %v4016, 0.70710677
        %vm4023 = vcmp.ge.f32.partialorder %v4022, 0.0
        %v4024 = vsel %vm4023, 1.0, -1.0
        %v4025 = vand.u32 2147483647, %v4022
        %v4026 = vmul.f32 %v4025, 0.3275911
        %v4027 = vadd.f32 %v4026, 1.0
        %v4028 = vrcp.pop %v4027
        %v4029 = vmul.f32 %v4028, 1.0614054
        %v4030 = vadd.f32 %v4029, -1.4531521
        %v4031 = vmul.f32 %v4030, %v4028
        %v4032 = vadd.f32 %v4031, 1.4214138
        %v4033 = vmul.f32 %v4032, %v4028
        %v4034 = vadd.f32 %v4033, -0.28449672
        %v4035 = vmul.f32 %v4034, %v4028
        %v4036 = vadd.f32 %v4035, 0.2548296
        %v4037 = vmul.f32 %v4036, %v4028
        %v4038 = vsub.f32 0.0, %v4025
        %v4039 = vmul.f32 %v4038, %v4025
        %v4040 = vmul.f32 %v4039, 1.442695
        %v4041 = vpow.pop %v4040
        %v4042 = vmul.f32 %v4037, %v4041
        %v4043 = vsub.f32 1.0, %v4042
        %v4044 = vmul.f32 %v4024, %v4043
        %v4045 = vadd.f32 %v4044, 1.0
        %v4046 = vmul.f32 %v4021, %v4045
        %s4047 = scalar_lea.vmem %s19, 64
        %v4048 = vld [vmem:[%s4047] sm:$0xf]
        %v4049 = vld [vmem:[%s4047 + $0x4] sm:$0xf]
        %v4050 = vld [vmem:[%s4047 + $0x8] sm:$0xf]
        %v4051 = vld [vmem:[%s4047 + $0xc] sm:$0xf]
        %v4052 = vld [vmem:[%s4047 + $0x10] sm:$0xf]
        %v4053 = vld [vmem:[%s4047 + $0x14] sm:$0xf]
        %v4054 = vld [vmem:[%s4047 + $0x18] sm:$0xf]
        %v4055 = vld [vmem:[%s4047 + $0x1c] sm:$0xf]
        %v4056 = vld [vmem:[%s4047 + $0x20] sm:$0xf]
        %v4057 = vld [vmem:[%s4047 + $0x24] sm:$0xf]
        %v4058 = vld [vmem:[%s4047 + $0x28] sm:$0xf]
        %v4059 = vld [vmem:[%s4047 + $0x2c] sm:$0xf]
        %v4060 = vld [vmem:[%s4047 + $0x30] sm:$0xf]
        %v4061 = vld [vmem:[%s4047 + $0x34] sm:$0xf]
        %v4062 = vld [vmem:[%s4047 + $0x38] sm:$0xf]
        %v4063 = vld [vmem:[%s4047 + $0x3c] sm:$0xf]
        %v4064 = vpack.c.bf16 %v4046, %v4046
        %s4065 = scalar_lea.vmem %s20, 1
        %v4066 = vld [vmem:[%s4065] sm:$0x1]
        %v4068 = vlaneseq
        %v4069 = vshrl.u32 %v4068, 7
        %v4070 = vsub.s32 0, %v4069
        %v4071 = vrot.slane %v4066, %v4070
        %v4089 = vunpack.c.l.b16 %v4048
        %v4090 = vunpack.c.l.b16 %v4049
        %v4091 = vunpack.c.l.b16 %v4050
        %v4092 = vunpack.c.l.b16 %v4051
        %v4093 = vunpack.c.l.b16 %v4052
        %v4094 = vunpack.c.l.b16 %v4053
        %v4095 = vunpack.c.l.b16 %v4054
        %v4096 = vunpack.c.l.b16 %v4055
        %v4097 = vunpack.c.l.b16 %v4056
        %v4098 = vunpack.c.l.b16 %v4057
        %v4099 = vunpack.c.l.b16 %v4058
        %v4100 = vunpack.c.l.b16 %v4059
        %v4101 = vunpack.c.l.b16 %v4060
        %v4102 = vunpack.c.l.b16 %v4061
        %v4103 = vunpack.c.l.b16 %v4062
        %v4104 = vunpack.c.l.b16 %v4063
        %v4105 = vpack.c.b16 %v4090, %v4089
        %v4106 = vpack.c.b16 %v4092, %v4091
        %v4107 = vpack.c.b16 %v4094, %v4093
        %v4108 = vpack.c.b16 %v4096, %v4095
        %v4109 = vpack.c.b16 %v4098, %v4097
        %v4110 = vpack.c.b16 %v4100, %v4099
        %v4111 = vpack.c.b16 %v4102, %v4101
        %v4112 = vpack.c.b16 %v4104, %v4103
        %4121 = vmatprep.subr.bf16.mxu0 0
        %4122 = vmatpush1.bf16.msra.mxu0 %v4105
        %4123 = vmatprep.subr.bf16.mxu0 0
        %4124 = vmatpush1.bf16.msra.mxu0 %v4106
        %4125 = vmatprep.subr.bf16.mxu0 0
        %4126 = vmatpush1.bf16.msra.mxu0 %v4107
        %4127 = vmatprep.subr.bf16.mxu0 0
        %4128 = vmatpush1.bf16.msra.mxu0 %v4108
        %4129 = vmatprep.subr.bf16.mxu0 0
        %4130 = vmatpush1.bf16.msra.mxu0 %v4109
        %4131 = vmatprep.subr.bf16.mxu0 0
        %4132 = vmatpush1.bf16.msra.mxu0 %v4110
        %4133 = vmatprep.subr.bf16.mxu0 0
        %4134 = vmatpush1.bf16.msra.mxu0 %v4111
        %4135 = vmatprep.subr.bf16.mxu0 0
        %4136 = vmatpush1.bf16.msra.mxu0 %v4112
        %4137 = vmatprep.subr.bf16.mxu0 0
        %4138 = vmatpush1.bf16.msra.mxu0 0
        %4139 = vmatprep.subr.bf16.mxu0 0
        %4140 = vmatpush1.bf16.msra.mxu0 0
        %4141 = vmatprep.subr.bf16.mxu0 0
        %4142 = vmatpush1.bf16.msra.mxu0 0
        %4143 = vmatprep.subr.bf16.mxu0 0
        %4144 = vmatpush1.bf16.msra.mxu0 0
        %4145 = vmatprep.subr.bf16.mxu0 0
        %4146 = vmatpush1.bf16.msra.mxu0 0
        %4147 = vmatprep.subr.bf16.mxu0 0
        %4148 = vmatpush1.bf16.msra.mxu0 0
        %4149 = vmatprep.subr.bf16.mxu0 0
        %4150 = vmatpush1.bf16.msra.mxu0 0
        %4151 = vmatprep.subr.bf16.mxu0 0
        %4152 = vmatpush1.bf16.msra.mxu0 0
        %4153 = vmatprep.mubr.bf16.mxu0 0
        %4154 = vmatmul.mubr.bf16.gmra.mrb[0].mxu0 %v4064
        %v4155 = vpop.f32.mrb[0].mxu0
        %v4156 = vadd.f32 %v4071, %v4155
        %v4157 = vpop.f32.mrb[0].mxu0
        %v4158 = vpop.f32.mrb[0].mxu0
        %v4159 = vpop.f32.mrb[0].mxu0
        %4160 = vdwg.mxu0
        %v4161 = vadd.f32 %v3889, %v4156
        %v4162 = vsel %vm786, %v4161, 0.0
        %4163 = vadd.xlane.f32.xlu0 %v4162
        %v4164 = vpop.xlane.xlu0 %4163
        %v4165 = vmul.f32 %v4164, %v985
        %v4166 = vsub.f32 %v4161, %v4165
        %v4167 = vmul.f32 %v4166, %v4166
        %v4168 = vsel %vm786, %v4167, 0.0
        %4169 = vadd.xlane.f32.xlu0 %v4168
        %v4170 = vpop.xlane.xlu0 %4169
        %v4171 = vmul.f32 %v4170, %v985
        %v4172 = vadd.f32 %v4171, 1e-05
        %v4173 = vrsqrt.pop %v4172
        %v4174 = vmul.f32 %v4166, %v4173
        %v4175 = vmul.f32 %v4174, %v1044
        %v4176 = vadd.f32 %v4175, %v1051
        %v4177 = vld [vmem:[%s21] sm:$0xf]
        %v4178 = vld [vmem:[%s21 + $0x4] sm:$0xf]
        %v4179 = vld [vmem:[%s21 + $0x8] sm:$0xf]
        %v4180 = vld [vmem:[%s21 + $0xc] sm:$0xf]
        %v4181 = vld [vmem:[%s21 + $0x10] sm:$0xf]
        %v4182 = vld [vmem:[%s21 + $0x14] sm:$0xf]
        %v4183 = vld [vmem:[%s21 + $0x18] sm:$0xf]
        %v4184 = vld [vmem:[%s21 + $0x1c] sm:$0xf]
        %v4185 = vpack.c.bf16 %v4176, %v4176
        %v4186 = vld [vmem:[%s22] sm:$0x1]
        %v4195 = vunpack.c.l.b16 %v4177
        %v4196 = vunpack.c.l.b16 %v4178
        %v4197 = vunpack.c.l.b16 %v4179
        %v4198 = vunpack.c.l.b16 %v4180
        %v4199 = vunpack.c.l.b16 %v4181
        %v4200 = vunpack.c.l.b16 %v4182
        %v4201 = vunpack.c.l.b16 %v4183
        %v4202 = vunpack.c.l.b16 %v4184
        %v4203 = vpack.c.b16 %v4196, %v4195
        %v4204 = vpack.c.b16 %v4198, %v4197
        %v4205 = vpack.c.b16 %v4200, %v4199
        %v4206 = vpack.c.b16 %v4202, %v4201
        %v4212 = vsel %vm786, %v4185, 0
        %4214 = vmatprep.subr.bf16.mxu0 0
        %4215 = vmatpush1.bf16.msra.mxu0 %v4203
        %4216 = vmatprep.subr.bf16.mxu0 0
        %4217 = vmatpush1.bf16.msra.mxu0 %v4204
        %4218 = vmatprep.subr.bf16.mxu0 0
        %4219 = vmatpush1.bf16.msra.mxu0 %v4205
        %4220 = vmatprep.subr.bf16.mxu0 0
        %4221 = vmatpush1.bf16.msra.mxu0 %v4206
        %4222 = vmatprep.subr.bf16.mxu0 0
        %4223 = vmatpush1.bf16.msra.mxu0 0
        %4224 = vmatprep.subr.bf16.mxu0 0
        %4225 = vmatpush1.bf16.msra.mxu0 0
        %4226 = vmatprep.subr.bf16.mxu0 0
        %4227 = vmatpush1.bf16.msra.mxu0 0
        %4228 = vmatprep.subr.bf16.mxu0 0
        %4229 = vmatpush1.bf16.msra.mxu0 0
        %4230 = vmatprep.subr.bf16.mxu0 0
        %4231 = vmatpush1.bf16.msra.mxu0 0
        %4232 = vmatprep.subr.bf16.mxu0 0
        %4233 = vmatpush1.bf16.msra.mxu0 0
        %4234 = vmatprep.subr.bf16.mxu0 0
        %4235 = vmatpush1.bf16.msra.mxu0 0
        %4236 = vmatprep.subr.bf16.mxu0 0
        %4237 = vmatpush1.bf16.msra.mxu0 0
        %4238 = vmatprep.subr.bf16.mxu0 0
        %4239 = vmatpush1.bf16.msra.mxu0 0
        %4240 = vmatprep.subr.bf16.mxu0 0
        %4241 = vmatpush1.bf16.msra.mxu0 0
        %4242 = vmatprep.subr.bf16.mxu0 0
        %4243 = vmatpush1.bf16.msra.mxu0 0
        %4244 = vmatprep.subr.bf16.mxu0 0
        %4245 = vmatpush1.bf16.msra.mxu0 0
        %4246 = vmatprep.mubr.bf16.mxu0 0
        %4247 = vmatmul.mubr.bf16.gmra.mrb[0].mxu0 %v4212
        %v4248 = vpop.f32.mrb[0].mxu0
        %v4249 = vadd.f32 %v4186, %v4248
        %v4250 = vpop.f32.mrb[0].mxu0
        %v4251 = vpop.f32.mrb[0].mxu0
        %v4252 = vpop.f32.mrb[0].mxu0
        %4253 = vdwg.mxu0
        %4254 = vst [vmem:[%s775] sm:$0x1] %v4249
        %s4255 = sand.u32 %s538, 1
        %s4256 = scalar_lea.sflag [#allocation4], %s4255
        %s4257 = sand.u32 %s538, 1
        %s4258 = scalar_lea.vmem [#allocation11], %s4257
        // Predicated region
        $region133: #{tpu_custom_call.1} parent=111 // pred_check
          %p4259 = pneg %p548
        $region134: #{tpu_custom_call.1} parent=111 // pred_check_branch
          %4261 = sbr.rel (%p4259) target = $region136
        $region135: #{tpu_custom_call.1} parent=111 // pred_region
          %s4263 = ssub.s32 16, 16
          %4264 = vsyncadd %s4256, %s4263
          %s4265 = smul.addr %s42, 16
          %s4266 = scalar_lea.hbm %s23, %s4265
          %s4268 = sshll.u32 %s4258, 4
          %s4269 = int_to_ptr.vmem [resolvable:$true] %s4268
          %4271 = dma.vmem_to_hbm [thread:$0]  %s4269, 16, %s4266, %s4256
        $region136: #{tpu_custom_call.1} parent=111 // pred_fallthru
          _
      $region112: #{tpu_custom_call.1} parent=5 // pred_fallthru
        _
      %p4272 = scmp.le.s32.totalorder 2, %s37
      // Predicated region
      $region137: #{tpu_custom_call.1} parent=5 // pred_check
        %p4273 = pneg %p4272
      $region138: #{tpu_custom_call.1} parent=5 // pred_check_branch
        %4275 = sbr.rel (%p4273) target = $region140
      $region139: #{tpu_custom_call.1} parent=5 // pred_region
        %s4276 = ssub.s32 %s37, 2
        // Predicated region
        $region141: #{tpu_custom_call.1} parent=139 // pred_check
          %p4277 = pneg %p554
        $region142: #{tpu_custom_call.1} parent=139 // pred_check_branch
          %4279 = sbr.rel (%p4277) target = $region144
        $region143: #{tpu_custom_call.1} parent=139 // pred_region
          %s4280 = sand.u32 %s539, 1
          %s4281 = scalar_lea.sflag [#allocation4], %s4280
          %s4282 = sand.u32 %s539, 1
          %s4283 = scalar_lea.vmem [#allocation11], %s4282
          %4284 = dma.done %s4281, 16
        $region144: #{tpu_custom_call.1} parent=139 // pred_fallthru
          _
      $region140: #{tpu_custom_call.1} parent=5 // pred_fallthru
        _
    $region6: #{tpu_custom_call.1} parent=1 // loop_footer
      %s41 = sadd.s32 1, %s37
    $region7: #{tpu_custom_call.1} parent=1 // loop_footer_branch
      %36 = sbr.rel target = $region3
    $region8: #{tpu_custom_call.1} parent=1 // loop_exit
      _
    %4285 = vsyncpa [#allocation3], 1
    %s4286 = scalar_lea.sflag [#allocation3], 1
    %4287 = vsyncpa %s4286, 1
    %4288 = vsyncpa [#allocation6], 1
    %4289 = vsyncpa [#allocation9], 1
    %4290 = vsyncpa [#allocation4], 1
    %s4291 = scalar_lea.sflag [#allocation4], 1
    %4292 = vsyncpa %s4291, 1

</llo_original>
